<compile_context>
chip_gen: v7x
topology: tpu7x:2x2x1
jax: 0.10.0
libtpu: 0.0.40
codegen_flags: <defaults>
</compile_context>

<pallas_src>
import jax
import jax.numpy as jnp
from jax import lax
from jax.experimental import pallas as pl
from jax.experimental.pallas import tpu as pltpu


def _round_up(x, m):
    return ((x + m - 1) // m) * m


# ----------------------------------------------------------------------------
# Kernel 1: fused char-CNN (+ max-pool over word dim) + biLSTM input projection
#   For each token row r (time-major, r = t*Bp + b):
#     char_repr[r] = maxpool_w( conv3(char_emb window) + conv_b )          # (Crp,)
#     gx[r]        = [char_repr[r] | tok_emb[r]] @ Wg + bg                 # (8Hp,)
#   Wg columns: [:4Hp] = forward LSTM gates [i f g o], [4Hp:] = backward.
# ----------------------------------------------------------------------------
def front_kernel(xc_ref, xt_ref, cw_ref, cb_ref, wg_ref, bg_ref, o_ref):
    # xc_ref: (tn, W+2, Ec) bf16 (word dim zero-padded by 1 each side, conv padding=1)
    # xt_ref: (tn, Et) bf16
    # cw_ref: (3*Ec, Crp) bf16, cb_ref: (1, Crp) f32
    # wg_ref: (Crp+Et, 8Hp) bf16, bg_ref: (1, 8Hp) f32
    # o_ref:  (tn, 8Hp) bf16
    Wp = xc_ref.shape[1]
    Ec = xc_ref.shape[2]
    W = Wp - 2
    dn = (((2,), (0,)), ((), ()))            # contract last dim of lhs with first of rhs

    xc = xc_ref[...]
    cw = cw_ref[...]
    # 3-tap conv over the word dim == 3 shifted-slice matmuls accumulated in f32.
    # TODO(synk): could replace the two unaligned shifted slices by full-window dots +
    # pltpu.roll alignment if relayout copies show up in the MLIR.
    y = lax.dot_general(xc[:, 0:W, :], cw[0:Ec, :], dn,
                        preferred_element_type=jnp.float32)
    y = y + lax.dot_general(xc[:, 1:W + 1, :], cw[Ec:2 * Ec, :], dn,
                            preferred_element_type=jnp.float32)
    y = y + lax.dot_general(xc[:, 2:W + 2, :], cw[2 * Ec:3 * Ec, :], dn,
                            preferred_element_type=jnp.float32)
    y = y + cb_ref[...]                      # (tn, W, Crp) + (1, Crp)
    char_repr = jnp.max(y, axis=1)           # max-pool over word dim -> (tn, Crp)

    # single fused input-projection matmul over [char_repr | tok_emb]
    feats = jnp.concatenate([char_repr.astype(jnp.bfloat16), xt_ref[...]], axis=-1)
    gates = jnp.dot(feats, wg_ref[...], preferred_element_type=jnp.float32) + bg_ref[...]
    o_ref[...] = gates.astype(o_ref.dtype)


def char_cnn_input_proj(xc_pad, xt_rows, p, *, tn):
    n_pad, Wp, Ec = xc_pad.shape
    Et = xt_rows.shape[1]
    Crp = p["conv_w"].shape[1]
    G8 = p["bg"].shape[1]
    return pl.pallas_call(
        front_kernel,
        out_shape=jax.ShapeDtypeStruct((n_pad, G8), jnp.bfloat16),
        grid=(n_pad // tn,),
        in_specs=[
            pl.BlockSpec((tn, Wp, Ec), lambda i: (i, 0, 0)),
            pl.BlockSpec((tn, Et), lambda i: (i, 0)),
            pl.BlockSpec((3 * Ec, Crp), lambda i: (0, 0)),
            pl.BlockSpec((1, Crp), lambda i: (0, 0)),
            pl.BlockSpec((Crp + Et, G8), lambda i: (0, 0)),
            pl.BlockSpec((1, G8), lambda i: (0, 0)),
        ],
        out_specs=pl.BlockSpec((tn, G8), lambda i: (i, 0)),
        compiler_params=pltpu.CompilerParams(
            dimension_semantics=("parallel",)),
    )(xc_pad, xt_rows, p["conv_w"], p["conv_b"], p["wg"], p["bg"])


# ----------------------------------------------------------------------------
# Kernel 2: biLSTM recurrence (whole time loop per batch tile) + fused
#           hidden2emissions linear epilogue. Packed-sequence semantics via mask.
#           Grid over batch tiles, marked "parallel".
# ----------------------------------------------------------------------------
def bilstm_emit_kernel(gx_ref, mask_ref, whh_ref, lwf_ref, lwb_ref, lb_ref,
                       out_ref, h_st, c_st, hf_seq, hb_seq):
    # gx_ref:   (S, tb, 8Hp) bf16  precomputed x @ [Wih_f | Wih_b] + biases
    # mask_ref: (S, tb, 1)   f32   valid-timestep mask (right padding)
    # whh_ref:  (2Hp, 8Hp)   bf16  block-diag [[Whh_f, 0], [0, Whh_b]]
    # lwf/lwb:  (Hp, Tp)     bf16  emission head per direction; lb: (1, Tp) f32
    # out_ref:  (S, tb, Tp)  f32
    # h_st/c_st:(tb, 2Hp)    f32 state ([:, :Hp]=fwd, [:, Hp:]=bwd)
    # hf_seq/hb_seq: (S, tb, Hp) bf16
    S = gx_ref.shape[0]
    Hp = h_st.shape[-1] // 2
    G = 4 * Hp

    h_st[...] = jnp.zeros_like(h_st)
    c_st[...] = jnp.zeros_like(c_st)

    def lstm_gates(gates, c_prev):
        # PyTorch gate order [i, f, g, o]; input projection + biases already in gates
        i = jax.nn.sigmoid(gates[:, 0:Hp])
        f = jax.nn.sigmoid(gates[:, Hp:2 * Hp])
        g = jnp.tanh(gates[:, 2 * Hp:3 * Hp])
        o = jax.nn.sigmoid(gates[:, 3 * Hp:4 * Hp])
        c_new = f * c_prev + i * g
        h_new = o * jnp.tanh(c_new)
        return h_new, c_new

    def step(t, carry):
        tr = S - 1 - t
        h_prev = h_st[...]
        # one bf16 MXU matmul for both directions (block-diagonal recurrent weight)
        rec = jnp.dot(h_prev.astype(jnp.bfloat16), whh_ref[...],
                      preferred_element_type=jnp.float32)          # (tb, 8Hp)
        gates_f = gx_ref[t, :, 0:G].astype(jnp.float32) + rec[:, 0:G]
        gates_b = gx_ref[tr, :, G:2 * G].astype(jnp.float32) + rec[:, G:2 * G]

        c_f = c_st[:, 0:Hp]
        c_b = c_st[:, Hp:2 * Hp]
        hf_new, cf_new = lstm_gates(gates_f, c_f)
        hb_new, cb_new = lstm_gates(gates_b, c_b)

        mf = mask_ref[t] != 0.0                                    # (tb, 1) bool
        mb = mask_ref[tr] != 0.0
        zero = jnp.zeros_like(hf_new)

        # only advance state on valid (unpadded) timesteps; padded outputs are 0
        c_st[:, 0:Hp] = jnp.where(mf, cf_new, c_f)
        c_st[:, Hp:2 * Hp] = jnp.where(mb, cb_new, c_b)
        h_st[:, 0:Hp] = jnp.where(mf, hf_new, h_prev[:, 0:Hp])
        h_st[:, Hp:2 * Hp] = jnp.where(mb, hb_new, h_prev[:, Hp:2 * Hp])

        hf_seq[t] = jnp.where(mf, hf_new, zero).astype(jnp.bfloat16)
        hb_seq[tr] = jnp.where(mb, hb_new, zero).astype(jnp.bfloat16)
        return carry

    unroll = S if S <= 16 else 4
    lax.fori_loop(0, S, step, 0, unroll=unroll)

    # fused emission head: [h_f | h_b] @ lin_w + lin_b (bf16 operands, f32 accumulate)
    dn = (((2,), (0,)), ((), ()))
    em = (lax.dot_general(hf_seq[...], lwf_ref[...], dn,
                          preferred_element_type=jnp.float32)
          + lax.dot_general(hb_seq[...], lwb_ref[...], dn,
                            preferred_element_type=jnp.float32)
          + lb_ref[...])
    out_ref[...] = em


def _kernel2_footprint(S, tb, Hp, Tp):
    io = S * tb * (8 * Hp * 2 + 4 + Tp * 4)                 # gx bf16 + mask f32 + out f32
    scratch = 2 * (tb * 2 * Hp * 4) + 2 * (S * tb * Hp * 2)  # state f32 + h-seq bf16
    weights = 2 * Hp * 8 * Hp * 2 + 2 * Hp * Tp * 2 + Tp * 4
    return 2 * io + scratch + 2 * weights                   # double-buffered IO / weights


def _choose_tb(S, B, Hp, Tp, budget=48 << 20):
    tb = min(_round_up(B, 8), 256)
    while tb > 8 and _kernel2_footprint(S, tb, Hp, Tp) > budget:
        tb -= 8
    return max(tb, 8)


def bilstm_emit(gx_tm, mask_tm, p, *, tb):
    S, Bp, _ = gx_tm.shape
    Hp = p["Hp"]
    Tp = p["Tp"]
    limit = int(min(64 << 20,
                    max(_kernel2_footprint(S, tb, Hp, Tp) + (4 << 20), 16 << 20)))
    return pl.pallas_call(
        bilstm_emit_kernel,
        out_shape=jax.ShapeDtypeStruct((S, Bp, Tp), jnp.float32),
        grid=(Bp // tb,),
        in_specs=[
            pl.BlockSpec((S, tb, 8 * Hp), lambda i: (0, i, 0)),
            pl.BlockSpec((S, tb, 1), lambda i: (0, i, 0)),
            pl.BlockSpec((2 * Hp, 8 * Hp), lambda i: (0, 0)),
            pl.BlockSpec((Hp, Tp), lambda i: (0, 0)),
            pl.BlockSpec((Hp, Tp), lambda i: (0, 0)),
            pl.BlockSpec((1, Tp), lambda i: (0, 0)),
        ],
        out_specs=pl.BlockSpec((S, tb, Tp), lambda i: (0, i, 0)),
        scratch_shapes=[pltpu.VMEM((tb, 2 * Hp), jnp.float32),
                        pltpu.VMEM((tb, 2 * Hp), jnp.float32),
                        pltpu.VMEM((S, tb, Hp), jnp.bfloat16),
                        pltpu.VMEM((S, tb, Hp), jnp.bfloat16)],
        compiler_params=pltpu.CompilerParams(
            dimension_semantics=("parallel",),
            vmem_limit_bytes=limit),
    )(gx_tm, mask_tm, p["whh_blk"], p["lin_wf"], p["lin_wb"], p["lin_b"])


# ----------------------------------------------------------------------------
# Parameter init (deterministic; torch-equivalent structure; stores fused/padded forms)
# ----------------------------------------------------------------------------
def init_params(key, *, num_chars, voc_size, Ec, Cr, Et, H, T):
    Hp = max(128, _round_up(H, 128))       # lane-dense hidden size
    Crp = max(128, _round_up(Cr, 128))     # lane-dense char-repr size
    Tp = max(128, _round_up(T, 128))       # lane-dense tag size
    ks = jax.random.split(key, 12)

    char_emb = (jax.random.normal(ks[0], (num_chars, Ec), jnp.float32) * 0.1
                ).astype(jnp.bfloat16)
    tok_emb = (jax.random.normal(ks[1], (voc_size, Et), jnp.float32) * 0.1
               ).astype(jnp.bfloat16)

    # Conv3d weight (Cr, 1, 1, 3, Ec) -> matmul form (3*Ec, Crp); bias zeros.
    scale = (6.0 / (3 * Ec + Cr)) ** 0.5
    conv_w_pt = jax.random.uniform(ks[2], (Cr, 3, Ec), jnp.float32, -scale, scale)
    conv_w = jnp.zeros((3 * Ec, Crp), jnp.float32
                       ).at[:, :Cr].set(conv_w_pt.reshape(Cr, 3 * Ec).T)
    conv_b = jnp.zeros((1, Crp), jnp.float32)

    def pad_gate_cols(w):
        # w: (K, 4H), columns grouped [i f g o] -> (K, 4Hp) with each gate padded to Hp
        K = w.shape[0]
        out = jnp.zeros((K, 4 * Hp), jnp.float32)
        for g in range(4):
            out = out.at[:, g * Hp:g * Hp + H].set(w[:, g * H:(g + 1) * H])
        return out

    D = Et + Cr   # torch LSTM input is [tok_emb | char_repr]

    def lstm_dir(k1, k2, k3):
        wih = jax.random.normal(k1, (4 * H, D), jnp.float32) * 0.1
        whh = jax.random.normal(k2, (4 * H, H), jnp.float32) * 0.1
        b = jax.random.normal(k3, (4 * H,), jnp.float32) * 0.1      # sparse-init stand-in
        b = b.at[H:2 * H].set(2.0)                                   # forget bias 1.0 (ih+hh)
        return pad_gate_cols(wih.T), pad_gate_cols(whh.T), pad_gate_cols(b[None, :])

    wih_f, whh_f, b_f = lstm_dir(ks[3], ks[4], ks[5])    # (D,4Hp),(H,4Hp),(1,4Hp)
    wih_b, whh_b, b_b = lstm_dir(ks[6], ks[7], ks[8])

    # fused input-projection weight; kernel feature row order is [char_repr (Crp) | tok (Et)]
    wg = jnp.zeros((Crp + Et, 8 * Hp), jnp.float32)
    wg = wg.at[0:Cr, 0:4 * Hp].set(wih_f[Et:Et + Cr])
    wg = wg.at[0:Cr, 4 * Hp:8 * Hp].set(wih_b[Et:Et + Cr])
    wg = wg.at[Crp:Crp + Et, 0:4 * Hp].set(wih_f[0:Et])
    wg = wg.at[Crp:Crp + Et, 4 * Hp:8 * Hp].set(wih_b[0:Et])
    bg = jnp.concatenate([b_f, b_b], axis=1)                         # (1, 8Hp)

    # block-diagonal recurrent weight: rows [h_f (Hp) | h_b (Hp)], cols [fwd 4Hp | bwd 4Hp]
    whh_blk = jnp.zeros((2 * Hp, 8 * Hp), jnp.float32)
    whh_blk = whh_blk.at[0:H, 0:4 * Hp].set(whh_f)
    whh_blk = whh_blk.at[Hp:Hp + H, 4 * Hp:8 * Hp].set(whh_b)

    # hidden2emissions (T, 2H) xavier; padded to (Hp, Tp) per direction, bf16
    lscale = (6.0 / (2 * H + T)) ** 0.5
    lin_w = jax.random.uniform(ks[9], (T, 2 * H), jnp.float32, -lscale, lscale).T  # (2H, T)
    lin_wf = jnp.zeros((Hp, Tp), jnp.float32).at[0:H, 0:T].set(lin_w[0:H])
    lin_wb = jnp.zeros((Hp, Tp), jnp.float32).at[0:H, 0:T].set(lin_w[H:2 * H])
    lin_b = jnp.zeros((1, Tp), jnp.float32)

    return dict(Hp=Hp, Crp=Crp, Tp=Tp,
                char_emb=char_emb, tok_emb=tok_emb,
                conv_w=conv_w.astype(jnp.bfloat16), conv_b=conv_b,
                wg=wg.astype(jnp.bfloat16), bg=bg,
                whh_blk=whh_blk.astype(jnp.bfloat16),
                lin_wf=lin_wf.astype(jnp.bfloat16),
                lin_wb=lin_wb.astype(jnp.bfloat16),
                lin_b=lin_b)


# ----------------------------------------------------------------------------
# Forward pass (glue: embedding gathers, padding, small transposes)
# ----------------------------------------------------------------------------
def cnn_blstm_crf_forward(chars, toks, seq_lengths, p, num_tags):
    B, S, W = chars.shape
    Hp, Tp = p["Hp"], p["Tp"]
    G8 = 8 * Hp

    # pad batch up-front so both kernels see sublane-aligned row / batch tiles
    tb = _choose_tb(S, B, Hp, Tp)
    Bp = _round_up(max(B, tb), tb)
    if Bp != B:
        chars = jnp.pad(chars, ((0, Bp - B), (0, 0), (0, 0)))
        toks = jnp.pad(toks, ((0, Bp - B), (0, 0)))
        seq_lengths = jnp.pad(seq_lengths, (0, Bp - B))
    N = S * Bp

    # time-major row order (row = t*Bp + b) so gx reshapes straight to (S, Bp, 8Hp)
    chars_tm = jnp.transpose(chars, (1, 0, 2)).reshape(N, W)
    toks_tm = jnp.transpose(toks, (1, 0)).reshape(N)

    # bf16 embedding lookups (char/inp/outp dropout are identity at inference)
    xc = p["char_emb"][chars_tm]                                   # (N, W, Ec) bf16
    xc = jnp.pad(xc, ((0, 0), (1, 1), (0, 0)))                     # conv padding=1 on W
    xt = p["tok_emb"][toks_tm]                                     # (N, Et) bf16

    # row tiling (remainder handled by zero-padding the row count)
    tn = min(512, _round_up(N, 8))
    n_pad = _round_up(N, tn)
    if n_pad != N:
        xc = jnp.pad(xc, ((0, n_pad - N), (0, 0), (0, 0)))
        xt = jnp.pad(xt, ((0, n_pad - N), (0, 0)))

    gx = char_cnn_input_proj(xc, xt, p, tn=tn)                     # (n_pad, 8Hp) bf16
    gx_tm = gx[:N].reshape(S, Bp, G8)                              # time-major

    # pack_padded / pad_packed semantics via per-(t,b) valid mask (right padding)
    mask_tm = (jnp.arange(S, dtype=jnp.int32)[:, None]
               < seq_lengths[None, :]).astype(jnp.float32)[:, :, None]   # (S, Bp, 1)

    em_tm = bilstm_emit(gx_tm, mask_tm, p, tb=tb)                  # (S, Bp, Tp) f32
    emissions = jnp.transpose(em_tm, (1, 0, 2))[:B, :, :num_tags]  # (B, S, T)
    return emissions
    # TODO(synk): CRF decode/entropy (EntropyCRF) is not part of forward(); not implemented.


if __name__ == "__main__":
    B, S, W = 2, 8, 8
    num_chars, voc_size = 40, 50
    Ec, Cr, Et, H, T = 16, 16, 32, 32, 8

    key = jax.random.PRNGKey(0)
    k_params, k_chars, k_toks = jax.random.split(key, 3)
    params = init_params(k_params, num_chars=num_chars, voc_size=voc_size,
                         Ec=Ec, Cr=Cr, Et=Et, H=H, T=T)

    chars = jax.random.randint(k_chars, (B, S, W), 0, num_chars, dtype=jnp.int32)
    toks = jax.random.randint(k_toks, (B, S), 0, voc_size, dtype=jnp.int32)
    seq_lengths = jnp.array([8, 5], dtype=jnp.int32)

    emissions = cnn_blstm_crf_forward(chars, toks, seq_lengths, params, T)
    jax.block_until_ready(emissions)
    assert emissions.shape == (B, S, T)
    print("KERNEL_OK")
</pallas_src>

<mosaic_0001>
module attributes {stable_mosaic.version = 11 : i64} {
  func.func @front_kernel(%arg0: i32, %arg1: memref<64x10x16xbf16, #tpu.memory_space<vmem>>, %arg2: memref<64x32xbf16, #tpu.memory_space<vmem>>, %arg3: memref<48x128xbf16, #tpu.memory_space<vmem>>, %arg4: memref<1x128xf32, #tpu.memory_space<vmem>>, %arg5: memref<160x1024xbf16, #tpu.memory_space<vmem>>, %arg6: memref<1x1024xf32, #tpu.memory_space<vmem>>, %arg7: memref<64x1024xbf16, #tpu.memory_space<vmem>>) attributes {dimension_semantics = [#tpu.dimension_semantics<parallel>], iteration_bounds = array<i64: 1>, scalar_prefetch = 0 : i64, scratch_operands = 0 : i64, tpu.core_type = #tpu.core_type<tc>, window_params = [{transform_indices = @transform_0, window_bounds = array<i64: 64, 10, 16>}, {transform_indices = @transform_1, window_bounds = array<i64: 64, 32>}, {pipeline_mode = #tpu.pipeline_mode<synchronous>, transform_indices = @transform_2, window_bounds = array<i64: 48, 128>}, {pipeline_mode = #tpu.pipeline_mode<synchronous>, transform_indices = @transform_3, window_bounds = array<i64: 1, 128>}, {pipeline_mode = #tpu.pipeline_mode<synchronous>, transform_indices = @transform_4, window_bounds = array<i64: 160, 1024>}, {pipeline_mode = #tpu.pipeline_mode<synchronous>, transform_indices = @transform_5, window_bounds = array<i64: 1, 1024>}, {transform_indices = @transform_6, window_bounds = array<i64: 64, 1024>}]} {
    %c0 = arith.constant 0 : index
    %c0_0 = arith.constant 0 : index
    %c0_1 = arith.constant 0 : index
    %0 = vector.load %arg1[%c0, %c0_0, %c0_1] : memref<64x10x16xbf16, #tpu.memory_space<vmem>>, vector<64x10x16xbf16>
    %c0_2 = arith.constant 0 : index
    %c0_3 = arith.constant 0 : index
    %1 = vector.load %arg3[%c0_2, %c0_3] : memref<48x128xbf16, #tpu.memory_space<vmem>>, vector<48x128xbf16>
    %2 = vector.extract_strided_slice %0 {offsets = [0, 0, 0], sizes = [64, 8, 16], strides = [1, 1, 1]} : vector<64x10x16xbf16> to vector<64x8x16xbf16>
    %3 = vector.extract_strided_slice %1 {offsets = [0, 0], sizes = [16, 128], strides = [1, 1]} : vector<48x128xbf16> to vector<16x128xbf16>
    %cst = arith.constant dense<0.000000e+00> : vector<64x8x128xf32>
    %4 = tpu.matmul %2, %3, %cst {dimension_numbers = #tpu.dot_dimension_numbers<[2], [0], [0, 1], [1], [0, 0, 0, 1, 1, 1], [], []>} : vector<64x8x16xbf16>, vector<16x128xbf16>, vector<64x8x128xf32> -> vector<64x8x128xf32>
    %5 = vector.extract_strided_slice %0 {offsets = [0, 1, 0], sizes = [64, 8, 16], strides = [1, 1, 1]} : vector<64x10x16xbf16> to vector<64x8x16xbf16>
    %6 = vector.extract_strided_slice %1 {offsets = [16, 0], sizes = [16, 128], strides = [1, 1]} : vector<48x128xbf16> to vector<16x128xbf16>
    %cst_4 = arith.constant dense<0.000000e+00> : vector<64x8x128xf32>
    %7 = tpu.matmul %5, %6, %cst_4 {dimension_numbers = #tpu.dot_dimension_numbers<[2], [0], [0, 1], [1], [0, 0, 0, 1, 1, 1], [], []>} : vector<64x8x16xbf16>, vector<16x128xbf16>, vector<64x8x128xf32> -> vector<64x8x128xf32>
    %8 = arith.addf %4, %7 : vector<64x8x128xf32>
    %9 = vector.extract_strided_slice %0 {offsets = [0, 2, 0], sizes = [64, 8, 16], strides = [1, 1, 1]} : vector<64x10x16xbf16> to vector<64x8x16xbf16>
    %10 = vector.extract_strided_slice %1 {offsets = [32, 0], sizes = [16, 128], strides = [1, 1]} : vector<48x128xbf16> to vector<16x128xbf16>
    %cst_5 = arith.constant dense<0.000000e+00> : vector<64x8x128xf32>
    %11 = tpu.matmul %9, %10, %cst_5 {dimension_numbers = #tpu.dot_dimension_numbers<[2], [0], [0, 1], [1], [0, 0, 0, 1, 1, 1], [], []>} : vector<64x8x16xbf16>, vector<16x128xbf16>, vector<64x8x128xf32> -> vector<64x8x128xf32>
    %12 = arith.addf %8, %11 : vector<64x8x128xf32>
    %c0_6 = arith.constant 0 : index
    %c0_7 = arith.constant 0 : index
    %13 = vector.load %arg4[%c0_6, %c0_7] : memref<1x128xf32, #tpu.memory_space<vmem>>, vector<1x128xf32>
    %14 = vector.shape_cast %13 : vector<1x128xf32> to vector<1x1x128xf32>
    %15 = vector.broadcast %14 : vector<1x1x128xf32> to vector<64x8x128xf32>
    %16 = arith.addf %12, %15 : vector<64x8x128xf32>
    %cst_8 = arith.constant dense<0xFF800000> : vector<64x128xf32>
    %17 = vector.multi_reduction <maximumf>, %16, %cst_8 [1] : vector<64x8x128xf32> to vector<64x128xf32>
    %18 = arith.truncf %17 : vector<64x128xf32> to vector<64x128xbf16>
    %c0_9 = arith.constant 0 : index
    %c0_10 = arith.constant 0 : index
    %19 = vector.load %arg2[%c0_9, %c0_10] : memref<64x32xbf16, #tpu.memory_space<vmem>>, vector<64x32xbf16>
    %20 = tpu.concatenate %18, %19 in 1 : vector<64x128xbf16>, vector<64x32xbf16> -> vector<64x160xbf16>
    %c0_11 = arith.constant 0 : index
    %c0_12 = arith.constant 0 : index
    %21 = vector.load %arg5[%c0_11, %c0_12] : memref<160x1024xbf16, #tpu.memory_space<vmem>>, vector<160x1024xbf16>
    %cst_13 = arith.constant dense<0.000000e+00> : vector<64x1024xf32>
    %22 = tpu.matmul %20, %21, %cst_13 {dimension_numbers = #tpu.dot_dimension_numbers<[1], [0], [0], [1], [0, 0, 1, 1], [], []>} : vector<64x160xbf16>, vector<160x1024xbf16>, vector<64x1024xf32> -> vector<64x1024xf32>
    %c0_14 = arith.constant 0 : index
    %c0_15 = arith.constant 0 : index
    %23 = vector.load %arg6[%c0_14, %c0_15] : memref<1x1024xf32, #tpu.memory_space<vmem>>, vector<1x1024xf32>
    %24 = vector.broadcast %23 : vector<1x1024xf32> to vector<64x1024xf32>
    %25 = arith.addf %22, %24 : vector<64x1024xf32>
    %26 = arith.truncf %25 : vector<64x1024xf32> to vector<64x1024xbf16>
    %c0_16 = arith.constant 0 : index
    %c0_17 = arith.constant 0 : index
    %27 = vector.load %arg7[%c0_16, %c0_17] : memref<64x1024xbf16, #tpu.memory_space<vmem>>, vector<64x1024xbf16>
    tpu.vector_store %arg7[%c0_16, %c0_17], %26 {strides = array<i32>} : memref<64x1024xbf16, #tpu.memory_space<vmem>>, vector<64x1024xbf16>,
    return
  }
  func.func @transform_0(%arg0: i32) -> (i32, i32, i32) {
    %c0_i32 = arith.constant 0 : i32
    %c0_i32_0 = arith.constant 0 : i32
    %c0_i32_1 = arith.constant 0 : i32
    return %arg0, %c0_i32, %c0_i32_0 : i32, i32, i32
  }
  func.func @transform_1(%arg0: i32) -> (i32, i32) {
    %c0_i32 = arith.constant 0 : i32
    %c0_i32_0 = arith.constant 0 : i32
    return %arg0, %c0_i32 : i32, i32
  }
  func.func @transform_2(%arg0: i32) -> (i32, i32) {
    %c0_i32 = arith.constant 0 : i32
    %c0_i32_0 = arith.constant 0 : i32
    %c0_i32_1 = arith.constant 0 : i32
    return %c0_i32, %c0_i32_0 : i32, i32
  }
  func.func @transform_3(%arg0: i32) -> (i32, i32) {
    %c0_i32 = arith.constant 0 : i32
    %c0_i32_0 = arith.constant 0 : i32
    %c0_i32_1 = arith.constant 0 : i32
    return %c0_i32, %c0_i32_0 : i32, i32
  }
  func.func @transform_4(%arg0: i32) -> (i32, i32) {
    %c0_i32 = arith.constant 0 : i32
    %c0_i32_0 = arith.constant 0 : i32
    %c0_i32_1 = arith.constant 0 : i32
    return %c0_i32, %c0_i32_0 : i32, i32
  }
  func.func @transform_5(%arg0: i32) -> (i32, i32) {
    %c0_i32 = arith.constant 0 : i32
    %c0_i32_0 = arith.constant 0 : i32
    %c0_i32_1 = arith.constant 0 : i32
    return %c0_i32, %c0_i32_0 : i32, i32
  }
  func.func @transform_6(%arg0: i32) -> (i32, i32) {
    %c0_i32 = arith.constant 0 : i32
    %c0_i32_0 = arith.constant 0 : i32
    return %arg0, %c0_i32 : i32, i32
  }
}

</mosaic_0001>

<llo_original>
// kernel: tpu_custom_call.1
$region0: #{tpu_custom_call.1}
  #allocation0 [shape = 'u32[]', space=smem, size = 0x4, offset = 0x4, fixed_abs, tag = 'smem constant byte address 0x4 - core index']
  #allocation1 [shape = 'u32[144,128]{1,0:T(1,128)}', space=vmem, size = 0x12000, scoped, tag = 'internal scratch']
  %s0 = inlined_call_operand.vmem [shape: bf16[64,10,16], index: 0, kind: input, shape index: {}]
  %s1 = inlined_call_operand.vmem [shape: bf16[64,32], index: 1, kind: input, shape index: {}]
  %s2 = inlined_call_operand.hbm [shape: bf16[48,128], index: 2, kind: input, shape index: {}]
  %s3 = inlined_call_operand.vmem [shape: f32[1,128], index: 3, kind: input, shape index: {}]
  %s4 = inlined_call_operand.vmem [shape: bf16[160,1024], index: 4, kind: input, shape index: {}]
  %s5 = inlined_call_operand.vmem [shape: f32[1,1024], index: 5, kind: input, shape index: {}]
  %s6 = inlined_call_operand.hbm [shape: bf16[64,1024], index: 6, kind: output, shape index: {}]
  %s7 = sld [smem:[#allocation0]]
  $region38: #{tpu_custom_call.1} parent=0
    _
  %s9 = ssub.s32 1, %s7
  %s10 = scalar_select 0, %s9, %s7
  $region1: #{tpu_custom_call.1} parent=0
    #allocation2 [shape = 'u8[12288]{0}', space=vmem, size = 0x3000, scoped, tag = 'input window, operand 2, single buffered']
    #allocation3 [shape = 's32[1]{0}', space=sflag, size = 0x4, scoped, tag = 'scoped memory for tpu_custom_call.1']
    #allocation4 [shape = 's32[1]{0}', space=sflag, size = 0x4, scoped, tag = 'scoped memory for tpu_custom_call.1']
    #allocation5 [shape = 'u8[131072]{0}', space=vmem, size = 0x20000, scoped, tag = 'output window, operand 0, single buffered']
    %11 = vsyncpa [#allocation3], 0
    %12 = vsyncpa [#allocation4], 0
    // Predicated region
    $region2: #{tpu_custom_call.1} parent=1 // pred_check
      _
    $region3: #{tpu_custom_call.1} parent=1 // pred_check_branch
      %14 = sbr.rel (0) target = $region5
    $region4: #{tpu_custom_call.1} parent=1 // pred_region
      _
    $region5: #{tpu_custom_call.1} parent=1 // pred_fallthru
      _
    // Predicated region
    $region6: #{tpu_custom_call.1} parent=1 // pred_check
      _
    $region7: #{tpu_custom_call.1} parent=1 // pred_check_branch
      %16 = sbr.rel (0) target = $region9
    $region8: #{tpu_custom_call.1} parent=1 // pred_region
      _
    $region9: #{tpu_custom_call.1} parent=1 // pred_fallthru
      _
    // Predicated region
    $region10: #{tpu_custom_call.1} parent=1 // pred_check
      _
    $region11: #{tpu_custom_call.1} parent=1 // pred_check_branch
      %18 = sbr.rel (0) target = $region13
    $region12: #{tpu_custom_call.1} parent=1 // pred_region
      %s20 = ssub.s32 384, 384
      %21 = vsyncadd [#allocation3], %s20
      %s22 = sshll.u32 [#allocation2], 4
      %s23 = int_to_ptr.vmem [resolvable:$true] %s22
      %28 = dma.hbm_to_vmem [thread:$0]  %s2, 384, %s23, [#allocation3], 64, 64, 4
    $region13: #{tpu_custom_call.1} parent=1 // pred_fallthru
      _
    // Predicated region
    $region14: #{tpu_custom_call.1} parent=1 // pred_check
      _
    $region15: #{tpu_custom_call.1} parent=1 // pred_check_branch
      %30 = sbr.rel (0) target = $region17
    $region16: #{tpu_custom_call.1} parent=1 // pred_region
      _
    $region17: #{tpu_custom_call.1} parent=1 // pred_fallthru
      _
    // Predicated region
    $region18: #{tpu_custom_call.1} parent=1 // pred_check
      _
    $region19: #{tpu_custom_call.1} parent=1 // pred_check_branch
      %32 = sbr.rel (0) target = $region21
    $region20: #{tpu_custom_call.1} parent=1 // pred_region
      _
    $region21: #{tpu_custom_call.1} parent=1 // pred_fallthru
      _
    // Predicated region
    $region22: #{tpu_custom_call.1} parent=1 // pred_check
      _
    $region23: #{tpu_custom_call.1} parent=1 // pred_check_branch
      %34 = sbr.rel (0) target = $region25
    $region24: #{tpu_custom_call.1} parent=1 // pred_region
      _
    $region25: #{tpu_custom_call.1} parent=1 // pred_fallthru
      _
    // Predicated region
    $region26: #{tpu_custom_call.1} parent=1 // pred_check
      _
    $region27: #{tpu_custom_call.1} parent=1 // pred_check_branch
      %36 = sbr.rel (0) target = $region29
    $region28: #{tpu_custom_call.1} parent=1 // pred_region
      %37 = dma.done [#allocation3], 384
    $region29: #{tpu_custom_call.1} parent=1 // pred_fallthru
      _
    %v39 = vld [vmem:[%s0] sm:$0xf]
    %v40 = vld [vmem:[%s0 + $0x4] sm:$0x1]
    %v41 = vld [vmem:[%s0 + $0x8] sm:$0xf]
    %v42 = vld [vmem:[%s0 + $0xc] sm:$0x1]
    %v43 = vld [vmem:[%s0 + $0x10] sm:$0xf]
    %v44 = vld [vmem:[%s0 + $0x14] sm:$0x1]
    %v45 = vld [vmem:[%s0 + $0x18] sm:$0xf]
    %v46 = vld [vmem:[%s0 + $0x1c] sm:$0x1]
    %v47 = vld [vmem:[%s0 + $0x20] sm:$0xf]
    %v48 = vld [vmem:[%s0 + $0x24] sm:$0x1]
    %v49 = vld [vmem:[%s0 + $0x28] sm:$0xf]
    %v50 = vld [vmem:[%s0 + $0x2c] sm:$0x1]
    %v51 = vld [vmem:[%s0 + $0x30] sm:$0xf]
    %v52 = vld [vmem:[%s0 + $0x34] sm:$0x1]
    %v53 = vld [vmem:[%s0 + $0x38] sm:$0xf]
    %v54 = vld [vmem:[%s0 + $0x3c] sm:$0x1]
    %v55 = vld [vmem:[%s0 + $0x40] sm:$0xf]
    %v56 = vld [vmem:[%s0 + $0x44] sm:$0x1]
    %v57 = vld [vmem:[%s0 + $0x48] sm:$0xf]
    %v58 = vld [vmem:[%s0 + $0x4c] sm:$0x1]
    %v59 = vld [vmem:[%s0 + $0x50] sm:$0xf]
    %v60 = vld [vmem:[%s0 + $0x54] sm:$0x1]
    %v61 = vld [vmem:[%s0 + $0x58] sm:$0xf]
    %v62 = vld [vmem:[%s0 + $0x5c] sm:$0x1]
    %v63 = vld [vmem:[%s0 + $0x60] sm:$0xf]
    %v64 = vld [vmem:[%s0 + $0x64] sm:$0x1]
    %v65 = vld [vmem:[%s0 + $0x68] sm:$0xf]
    %v66 = vld [vmem:[%s0 + $0x6c] sm:$0x1]
    %v67 = vld [vmem:[%s0 + $0x70] sm:$0xf]
    %v68 = vld [vmem:[%s0 + $0x74] sm:$0x1]
    %v69 = vld [vmem:[%s0 + $0x78] sm:$0xf]
    %v70 = vld [vmem:[%s0 + $0x7c] sm:$0x1]
    %v71 = vld [vmem:[%s0 + $0x80] sm:$0xf]
    %v72 = vld [vmem:[%s0 + $0x84] sm:$0x1]
    %v73 = vld [vmem:[%s0 + $0x88] sm:$0xf]
    %v74 = vld [vmem:[%s0 + $0x8c] sm:$0x1]
    %v75 = vld [vmem:[%s0 + $0x90] sm:$0xf]
    %v76 = vld [vmem:[%s0 + $0x94] sm:$0x1]
    %v77 = vld [vmem:[%s0 + $0x98] sm:$0xf]
    %v78 = vld [vmem:[%s0 + $0x9c] sm:$0x1]
    %v79 = vld [vmem:[%s0 + $0xa0] sm:$0xf]
    %v80 = vld [vmem:[%s0 + $0xa4] sm:$0x1]
    %v81 = vld [vmem:[%s0 + $0xa8] sm:$0xf]
    %v82 = vld [vmem:[%s0 + $0xac] sm:$0x1]
    %v83 = vld [vmem:[%s0 + $0xb0] sm:$0xf]
    %v84 = vld [vmem:[%s0 + $0xb4] sm:$0x1]
    %v85 = vld [vmem:[%s0 + $0xb8] sm:$0xf]
    %v86 = vld [vmem:[%s0 + $0xbc] sm:$0x1]
    %v87 = vld [vmem:[%s0 + $0xc0] sm:$0xf]
    %v88 = vld [vmem:[%s0 + $0xc4] sm:$0x1]
    %v89 = vld [vmem:[%s0 + $0xc8] sm:$0xf]
    %v90 = vld [vmem:[%s0 + $0xcc] sm:$0x1]
    %v91 = vld [vmem:[%s0 + $0xd0] sm:$0xf]
    %v92 = vld [vmem:[%s0 + $0xd4] sm:$0x1]
    %v93 = vld [vmem:[%s0 + $0xd8] sm:$0xf]
    %v94 = vld [vmem:[%s0 + $0xdc] sm:$0x1]
    %v95 = vld [vmem:[%s0 + $0xe0] sm:$0xf]
    %v96 = vld [vmem:[%s0 + $0xe4] sm:$0x1]
    %v97 = vld [vmem:[%s0 + $0xe8] sm:$0xf]
    %v98 = vld [vmem:[%s0 + $0xec] sm:$0x1]
    %v99 = vld [vmem:[%s0 + $0xf0] sm:$0xf]
    %v100 = vld [vmem:[%s0 + $0xf4] sm:$0x1]
    %v101 = vld [vmem:[%s0 + $0xf8] sm:$0xf]
    %v102 = vld [vmem:[%s0 + $0xfc] sm:$0x1]
    %v103 = vld [vmem:[%s0 + $0x100] sm:$0xf]
    %v104 = vld [vmem:[%s0 + $0x104] sm:$0x1]
    %v105 = vld [vmem:[%s0 + $0x108] sm:$0xf]
    %v106 = vld [vmem:[%s0 + $0x10c] sm:$0x1]
    %v107 = vld [vmem:[%s0 + $0x110] sm:$0xf]
    %v108 = vld [vmem:[%s0 + $0x114] sm:$0x1]
    %v109 = vld [vmem:[%s0 + $0x118] sm:$0xf]
    %v110 = vld [vmem:[%s0 + $0x11c] sm:$0x1]
    %v111 = vld [vmem:[%s0 + $0x120] sm:$0xf]
    %v112 = vld [vmem:[%s0 + $0x124] sm:$0x1]
    %v113 = vld [vmem:[%s0 + $0x128] sm:$0xf]
    %v114 = vld [vmem:[%s0 + $0x12c] sm:$0x1]
    %v115 = vld [vmem:[%s0 + $0x130] sm:$0xf]
    %v116 = vld [vmem:[%s0 + $0x134] sm:$0x1]
    %v117 = vld [vmem:[%s0 + $0x138] sm:$0xf]
    %v118 = vld [vmem:[%s0 + $0x13c] sm:$0x1]
    %v119 = vld [vmem:[%s0 + $0x140] sm:$0xf]
    %v120 = vld [vmem:[%s0 + $0x144] sm:$0x1]
    %v121 = vld [vmem:[%s0 + $0x148] sm:$0xf]
    %v122 = vld [vmem:[%s0 + $0x14c] sm:$0x1]
    %v123 = vld [vmem:[%s0 + $0x150] sm:$0xf]
    %v124 = vld [vmem:[%s0 + $0x154] sm:$0x1]
    %v125 = vld [vmem:[%s0 + $0x158] sm:$0xf]
    %v126 = vld [vmem:[%s0 + $0x15c] sm:$0x1]
    %v127 = vld [vmem:[%s0 + $0x160] sm:$0xf]
    %v128 = vld [vmem:[%s0 + $0x164] sm:$0x1]
    %v129 = vld [vmem:[%s0 + $0x168] sm:$0xf]
    %v130 = vld [vmem:[%s0 + $0x16c] sm:$0x1]
    %v131 = vld [vmem:[%s0 + $0x170] sm:$0xf]
    %v132 = vld [vmem:[%s0 + $0x174] sm:$0x1]
    %v133 = vld [vmem:[%s0 + $0x178] sm:$0xf]
    %v134 = vld [vmem:[%s0 + $0x17c] sm:$0x1]
    %v135 = vld [vmem:[%s0 + $0x180] sm:$0xf]
    %v136 = vld [vmem:[%s0 + $0x184] sm:$0x1]
    %v137 = vld [vmem:[%s0 + $0x188] sm:$0xf]
    %v138 = vld [vmem:[%s0 + $0x18c] sm:$0x1]
    %v139 = vld [vmem:[%s0 + $0x190] sm:$0xf]
    %v140 = vld [vmem:[%s0 + $0x194] sm:$0x1]
    %v141 = vld [vmem:[%s0 + $0x198] sm:$0xf]
    %v142 = vld [vmem:[%s0 + $0x19c] sm:$0x1]
    %v143 = vld [vmem:[%s0 + $0x1a0] sm:$0xf]
    %v144 = vld [vmem:[%s0 + $0x1a4] sm:$0x1]
    %v145 = vld [vmem:[%s0 + $0x1a8] sm:$0xf]
    %v146 = vld [vmem:[%s0 + $0x1ac] sm:$0x1]
    %v147 = vld [vmem:[%s0 + $0x1b0] sm:$0xf]
    %v148 = vld [vmem:[%s0 + $0x1b4] sm:$0x1]
    %v149 = vld [vmem:[%s0 + $0x1b8] sm:$0xf]
    %v150 = vld [vmem:[%s0 + $0x1bc] sm:$0x1]
    %v151 = vld [vmem:[%s0 + $0x1c0] sm:$0xf]
    %v152 = vld [vmem:[%s0 + $0x1c4] sm:$0x1]
    %v153 = vld [vmem:[%s0 + $0x1c8] sm:$0xf]
    %v154 = vld [vmem:[%s0 + $0x1cc] sm:$0x1]
    %v155 = vld [vmem:[%s0 + $0x1d0] sm:$0xf]
    %v156 = vld [vmem:[%s0 + $0x1d4] sm:$0x1]
    %v157 = vld [vmem:[%s0 + $0x1d8] sm:$0xf]
    %v158 = vld [vmem:[%s0 + $0x1dc] sm:$0x1]
    %v159 = vld [vmem:[%s0 + $0x1e0] sm:$0xf]
    %v160 = vld [vmem:[%s0 + $0x1e4] sm:$0x1]
    %v161 = vld [vmem:[%s0 + $0x1e8] sm:$0xf]
    %v162 = vld [vmem:[%s0 + $0x1ec] sm:$0x1]
    %v163 = vld [vmem:[%s0 + $0x1f0] sm:$0xf]
    %v164 = vld [vmem:[%s0 + $0x1f4] sm:$0x1]
    %v165 = vld [vmem:[%s0 + $0x1f8] sm:$0xf]
    %v166 = vld [vmem:[%s0 + $0x1fc] sm:$0x1]
    %v167 = vld [vmem:[#allocation2] sm:$0xf]
    %v168 = vld [vmem:[#allocation2 + $0x4] sm:$0xf]
    %v169 = vld [vmem:[#allocation2 + $0x8] sm:$0xf]
    %v170 = vld [vmem:[#allocation2 + $0xc] sm:$0xf]
    %v171 = vld [vmem:[#allocation2 + $0x10] sm:$0xf]
    %v172 = vld [vmem:[#allocation2 + $0x14] sm:$0xf]
    %vm173 = vsmask.f32 3328
    %vm174 = vsmask.f32 7440
    %vm175 = vmor %vm173, %vm174
    %v177 = vshrl.u32 %v39, 16
    %v179 = vrot.slane %v177, 4
    %v180 = vshll.u32 %v39, 16
    %v182 = vrot.slane %v180, 5
    %v183 = vor.u32 %v179, %v182
    %v184 = vrot.slane %v183, 4
    %v186 = vshll.u32 %v40, 16
    %v188 = vrot.slane %v186, 5
    %v189 = vsel %vm175, %v184, %v188
    %v191 = vshrl.u32 %v41, 16
    %v193 = vrot.slane %v191, 4
    %v194 = vshll.u32 %v41, 16
    %v196 = vrot.slane %v194, 5
    %v197 = vor.u32 %v193, %v196
    %v198 = vrot.slane %v197, 4
    %v200 = vshll.u32 %v42, 16
    %v202 = vrot.slane %v200, 5
    %v203 = vsel %vm175, %v198, %v202
    %v205 = vshrl.u32 %v43, 16
    %v207 = vrot.slane %v205, 4
    %v208 = vshll.u32 %v43, 16
    %v210 = vrot.slane %v208, 5
    %v211 = vor.u32 %v207, %v210
    %v212 = vrot.slane %v211, 4
    %v214 = vshll.u32 %v44, 16
    %v216 = vrot.slane %v214, 5
    %v217 = vsel %vm175, %v212, %v216
    %v219 = vshrl.u32 %v45, 16
    %v221 = vrot.slane %v219, 4
    %v222 = vshll.u32 %v45, 16
    %v224 = vrot.slane %v222, 5
    %v225 = vor.u32 %v221, %v224
    %v226 = vrot.slane %v225, 4
    %v228 = vshll.u32 %v46, 16
    %v230 = vrot.slane %v228, 5
    %v231 = vsel %vm175, %v226, %v230
    %v233 = vshrl.u32 %v47, 16
    %v235 = vrot.slane %v233, 4
    %v236 = vshll.u32 %v47, 16
    %v238 = vrot.slane %v236, 5
    %v239 = vor.u32 %v235, %v238
    %v240 = vrot.slane %v239, 4
    %v242 = vshll.u32 %v48, 16
    %v244 = vrot.slane %v242, 5
    %v245 = vsel %vm175, %v240, %v244
    %v247 = vshrl.u32 %v49, 16
    %v249 = vrot.slane %v247, 4
    %v250 = vshll.u32 %v49, 16
    %v252 = vrot.slane %v250, 5
    %v253 = vor.u32 %v249, %v252
    %v254 = vrot.slane %v253, 4
    %v256 = vshll.u32 %v50, 16
    %v258 = vrot.slane %v256, 5
    %v259 = vsel %vm175, %v254, %v258
    %v261 = vshrl.u32 %v51, 16
    %v263 = vrot.slane %v261, 4
    %v264 = vshll.u32 %v51, 16
    %v266 = vrot.slane %v264, 5
    %v267 = vor.u32 %v263, %v266
    %v268 = vrot.slane %v267, 4
    %v270 = vshll.u32 %v52, 16
    %v272 = vrot.slane %v270, 5
    %v273 = vsel %vm175, %v268, %v272
    %v275 = vshrl.u32 %v53, 16
    %v277 = vrot.slane %v275, 4
    %v278 = vshll.u32 %v53, 16
    %v280 = vrot.slane %v278, 5
    %v281 = vor.u32 %v277, %v280
    %v282 = vrot.slane %v281, 4
    %v284 = vshll.u32 %v54, 16
    %v286 = vrot.slane %v284, 5
    %v287 = vsel %vm175, %v282, %v286
    %v289 = vshrl.u32 %v55, 16
    %v291 = vrot.slane %v289, 4
    %v292 = vshll.u32 %v55, 16
    %v294 = vrot.slane %v292, 5
    %v295 = vor.u32 %v291, %v294
    %v296 = vrot.slane %v295, 4
    %v298 = vshll.u32 %v56, 16
    %v300 = vrot.slane %v298, 5
    %v301 = vsel %vm175, %v296, %v300
    %v303 = vshrl.u32 %v57, 16
    %v305 = vrot.slane %v303, 4
    %v306 = vshll.u32 %v57, 16
    %v308 = vrot.slane %v306, 5
    %v309 = vor.u32 %v305, %v308
    %v310 = vrot.slane %v309, 4
    %v312 = vshll.u32 %v58, 16
    %v314 = vrot.slane %v312, 5
    %v315 = vsel %vm175, %v310, %v314
    %v317 = vshrl.u32 %v59, 16
    %v319 = vrot.slane %v317, 4
    %v320 = vshll.u32 %v59, 16
    %v322 = vrot.slane %v320, 5
    %v323 = vor.u32 %v319, %v322
    %v324 = vrot.slane %v323, 4
    %v326 = vshll.u32 %v60, 16
    %v328 = vrot.slane %v326, 5
    %v329 = vsel %vm175, %v324, %v328
    %v331 = vshrl.u32 %v61, 16
    %v333 = vrot.slane %v331, 4
    %v334 = vshll.u32 %v61, 16
    %v336 = vrot.slane %v334, 5
    %v337 = vor.u32 %v333, %v336
    %v338 = vrot.slane %v337, 4
    %v340 = vshll.u32 %v62, 16
    %v342 = vrot.slane %v340, 5
    %v343 = vsel %vm175, %v338, %v342
    %v345 = vshrl.u32 %v63, 16
    %v347 = vrot.slane %v345, 4
    %v348 = vshll.u32 %v63, 16
    %v350 = vrot.slane %v348, 5
    %v351 = vor.u32 %v347, %v350
    %v352 = vrot.slane %v351, 4
    %v354 = vshll.u32 %v64, 16
    %v356 = vrot.slane %v354, 5
    %v357 = vsel %vm175, %v352, %v356
    %v359 = vshrl.u32 %v65, 16
    %v361 = vrot.slane %v359, 4
    %v362 = vshll.u32 %v65, 16
    %v364 = vrot.slane %v362, 5
    %v365 = vor.u32 %v361, %v364
    %v366 = vrot.slane %v365, 4
    %v368 = vshll.u32 %v66, 16
    %v370 = vrot.slane %v368, 5
    %v371 = vsel %vm175, %v366, %v370
    %v373 = vshrl.u32 %v67, 16
    %v375 = vrot.slane %v373, 4
    %v376 = vshll.u32 %v67, 16
    %v378 = vrot.slane %v376, 5
    %v379 = vor.u32 %v375, %v378
    %v380 = vrot.slane %v379, 4
    %v382 = vshll.u32 %v68, 16
    %v384 = vrot.slane %v382, 5
    %v385 = vsel %vm175, %v380, %v384
    %v387 = vshrl.u32 %v69, 16
    %v389 = vrot.slane %v387, 4
    %v390 = vshll.u32 %v69, 16
    %v392 = vrot.slane %v390, 5
    %v393 = vor.u32 %v389, %v392
    %v394 = vrot.slane %v393, 4
    %v396 = vshll.u32 %v70, 16
    %v398 = vrot.slane %v396, 5
    %v399 = vsel %vm175, %v394, %v398
    %v401 = vshrl.u32 %v71, 16
    %v403 = vrot.slane %v401, 4
    %v404 = vshll.u32 %v71, 16
    %v406 = vrot.slane %v404, 5
    %v407 = vor.u32 %v403, %v406
    %v408 = vrot.slane %v407, 4
    %v410 = vshll.u32 %v72, 16
    %v412 = vrot.slane %v410, 5
    %v413 = vsel %vm175, %v408, %v412
    %v415 = vshrl.u32 %v73, 16
    %v417 = vrot.slane %v415, 4
    %v418 = vshll.u32 %v73, 16
    %v420 = vrot.slane %v418, 5
    %v421 = vor.u32 %v417, %v420
    %v422 = vrot.slane %v421, 4
    %v424 = vshll.u32 %v74, 16
    %v426 = vrot.slane %v424, 5
    %v427 = vsel %vm175, %v422, %v426
    %v429 = vshrl.u32 %v75, 16
    %v431 = vrot.slane %v429, 4
    %v432 = vshll.u32 %v75, 16
    %v434 = vrot.slane %v432, 5
    %v435 = vor.u32 %v431, %v434
    %v436 = vrot.slane %v435, 4
    %v438 = vshll.u32 %v76, 16
    %v440 = vrot.slane %v438, 5
    %v441 = vsel %vm175, %v436, %v440
    %v443 = vshrl.u32 %v77, 16
    %v445 = vrot.slane %v443, 4
    %v446 = vshll.u32 %v77, 16
    %v448 = vrot.slane %v446, 5
    %v449 = vor.u32 %v445, %v448
    %v450 = vrot.slane %v449, 4
    %v452 = vshll.u32 %v78, 16
    %v454 = vrot.slane %v452, 5
    %v455 = vsel %vm175, %v450, %v454
    %v457 = vshrl.u32 %v79, 16
    %v459 = vrot.slane %v457, 4
    %v460 = vshll.u32 %v79, 16
    %v462 = vrot.slane %v460, 5
    %v463 = vor.u32 %v459, %v462
    %v464 = vrot.slane %v463, 4
    %v466 = vshll.u32 %v80, 16
    %v468 = vrot.slane %v466, 5
    %v469 = vsel %vm175, %v464, %v468
    %v471 = vshrl.u32 %v81, 16
    %v473 = vrot.slane %v471, 4
    %v474 = vshll.u32 %v81, 16
    %v476 = vrot.slane %v474, 5
    %v477 = vor.u32 %v473, %v476
    %v478 = vrot.slane %v477, 4
    %v480 = vshll.u32 %v82, 16
    %v482 = vrot.slane %v480, 5
    %v483 = vsel %vm175, %v478, %v482
    %v485 = vshrl.u32 %v83, 16
    %v487 = vrot.slane %v485, 4
    %v488 = vshll.u32 %v83, 16
    %v490 = vrot.slane %v488, 5
    %v491 = vor.u32 %v487, %v490
    %v492 = vrot.slane %v491, 4
    %v494 = vshll.u32 %v84, 16
    %v496 = vrot.slane %v494, 5
    %v497 = vsel %vm175, %v492, %v496
    %v499 = vshrl.u32 %v85, 16
    %v501 = vrot.slane %v499, 4
    %v502 = vshll.u32 %v85, 16
    %v504 = vrot.slane %v502, 5
    %v505 = vor.u32 %v501, %v504
    %v506 = vrot.slane %v505, 4
    %v508 = vshll.u32 %v86, 16
    %v510 = vrot.slane %v508, 5
    %v511 = vsel %vm175, %v506, %v510
    %v513 = vshrl.u32 %v87, 16
    %v515 = vrot.slane %v513, 4
    %v516 = vshll.u32 %v87, 16
    %v518 = vrot.slane %v516, 5
    %v519 = vor.u32 %v515, %v518
    %v520 = vrot.slane %v519, 4
    %v522 = vshll.u32 %v88, 16
    %v524 = vrot.slane %v522, 5
    %v525 = vsel %vm175, %v520, %v524
    %v527 = vshrl.u32 %v89, 16
    %v529 = vrot.slane %v527, 4
    %v530 = vshll.u32 %v89, 16
    %v532 = vrot.slane %v530, 5
    %v533 = vor.u32 %v529, %v532
    %v534 = vrot.slane %v533, 4
    %v536 = vshll.u32 %v90, 16
    %v538 = vrot.slane %v536, 5
    %v539 = vsel %vm175, %v534, %v538
    %v541 = vshrl.u32 %v91, 16
    %v543 = vrot.slane %v541, 4
    %v544 = vshll.u32 %v91, 16
    %v546 = vrot.slane %v544, 5
    %v547 = vor.u32 %v543, %v546
    %v548 = vrot.slane %v547, 4
    %v550 = vshll.u32 %v92, 16
    %v552 = vrot.slane %v550, 5
    %v553 = vsel %vm175, %v548, %v552
    %v555 = vshrl.u32 %v93, 16
    %v557 = vrot.slane %v555, 4
    %v558 = vshll.u32 %v93, 16
    %v560 = vrot.slane %v558, 5
    %v561 = vor.u32 %v557, %v560
    %v562 = vrot.slane %v561, 4
    %v564 = vshll.u32 %v94, 16
    %v566 = vrot.slane %v564, 5
    %v567 = vsel %vm175, %v562, %v566
    %v569 = vshrl.u32 %v95, 16
    %v571 = vrot.slane %v569, 4
    %v572 = vshll.u32 %v95, 16
    %v574 = vrot.slane %v572, 5
    %v575 = vor.u32 %v571, %v574
    %v576 = vrot.slane %v575, 4
    %v578 = vshll.u32 %v96, 16
    %v580 = vrot.slane %v578, 5
    %v581 = vsel %vm175, %v576, %v580
    %v583 = vshrl.u32 %v97, 16
    %v585 = vrot.slane %v583, 4
    %v586 = vshll.u32 %v97, 16
    %v588 = vrot.slane %v586, 5
    %v589 = vor.u32 %v585, %v588
    %v590 = vrot.slane %v589, 4
    %v592 = vshll.u32 %v98, 16
    %v594 = vrot.slane %v592, 5
    %v595 = vsel %vm175, %v590, %v594
    %v597 = vshrl.u32 %v99, 16
    %v599 = vrot.slane %v597, 4
    %v600 = vshll.u32 %v99, 16
    %v602 = vrot.slane %v600, 5
    %v603 = vor.u32 %v599, %v602
    %v604 = vrot.slane %v603, 4
    %v606 = vshll.u32 %v100, 16
    %v608 = vrot.slane %v606, 5
    %v609 = vsel %vm175, %v604, %v608
    %v611 = vshrl.u32 %v101, 16
    %v613 = vrot.slane %v611, 4
    %v614 = vshll.u32 %v101, 16
    %v616 = vrot.slane %v614, 5
    %v617 = vor.u32 %v613, %v616
    %v618 = vrot.slane %v617, 4
    %v620 = vshll.u32 %v102, 16
    %v622 = vrot.slane %v620, 5
    %v623 = vsel %vm175, %v618, %v622
    %v625 = vshrl.u32 %v103, 16
    %v627 = vrot.slane %v625, 4
    %v628 = vshll.u32 %v103, 16
    %v630 = vrot.slane %v628, 5
    %v631 = vor.u32 %v627, %v630
    %v632 = vrot.slane %v631, 4
    %v634 = vshll.u32 %v104, 16
    %v636 = vrot.slane %v634, 5
    %v637 = vsel %vm175, %v632, %v636
    %v639 = vshrl.u32 %v105, 16
    %v641 = vrot.slane %v639, 4
    %v642 = vshll.u32 %v105, 16
    %v644 = vrot.slane %v642, 5
    %v645 = vor.u32 %v641, %v644
    %v646 = vrot.slane %v645, 4
    %v648 = vshll.u32 %v106, 16
    %v650 = vrot.slane %v648, 5
    %v651 = vsel %vm175, %v646, %v650
    %v653 = vshrl.u32 %v107, 16
    %v655 = vrot.slane %v653, 4
    %v656 = vshll.u32 %v107, 16
    %v658 = vrot.slane %v656, 5
    %v659 = vor.u32 %v655, %v658
    %v660 = vrot.slane %v659, 4
    %v662 = vshll.u32 %v108, 16
    %v664 = vrot.slane %v662, 5
    %v665 = vsel %vm175, %v660, %v664
    %v667 = vshrl.u32 %v109, 16
    %v669 = vrot.slane %v667, 4
    %v670 = vshll.u32 %v109, 16
    %v672 = vrot.slane %v670, 5
    %v673 = vor.u32 %v669, %v672
    %v674 = vrot.slane %v673, 4
    %v676 = vshll.u32 %v110, 16
    %v678 = vrot.slane %v676, 5
    %v679 = vsel %vm175, %v674, %v678
    %v681 = vshrl.u32 %v111, 16
    %v683 = vrot.slane %v681, 4
    %v684 = vshll.u32 %v111, 16
    %v686 = vrot.slane %v684, 5
    %v687 = vor.u32 %v683, %v686
    %v688 = vrot.slane %v687, 4
    %v690 = vshll.u32 %v112, 16
    %v692 = vrot.slane %v690, 5
    %v693 = vsel %vm175, %v688, %v692
    %v695 = vshrl.u32 %v113, 16
    %v697 = vrot.slane %v695, 4
    %v698 = vshll.u32 %v113, 16
    %v700 = vrot.slane %v698, 5
    %v701 = vor.u32 %v697, %v700
    %v702 = vrot.slane %v701, 4
    %v704 = vshll.u32 %v114, 16
    %v706 = vrot.slane %v704, 5
    %v707 = vsel %vm175, %v702, %v706
    %v709 = vshrl.u32 %v115, 16
    %v711 = vrot.slane %v709, 4
    %v712 = vshll.u32 %v115, 16
    %v714 = vrot.slane %v712, 5
    %v715 = vor.u32 %v711, %v714
    %v716 = vrot.slane %v715, 4
    %v718 = vshll.u32 %v116, 16
    %v720 = vrot.slane %v718, 5
    %v721 = vsel %vm175, %v716, %v720
    %v723 = vshrl.u32 %v117, 16
    %v725 = vrot.slane %v723, 4
    %v726 = vshll.u32 %v117, 16
    %v728 = vrot.slane %v726, 5
    %v729 = vor.u32 %v725, %v728
    %v730 = vrot.slane %v729, 4
    %v732 = vshll.u32 %v118, 16
    %v734 = vrot.slane %v732, 5
    %v735 = vsel %vm175, %v730, %v734
    %v737 = vshrl.u32 %v119, 16
    %v739 = vrot.slane %v737, 4
    %v740 = vshll.u32 %v119, 16
    %v742 = vrot.slane %v740, 5
    %v743 = vor.u32 %v739, %v742
    %v744 = vrot.slane %v743, 4
    %v746 = vshll.u32 %v120, 16
    %v748 = vrot.slane %v746, 5
    %v749 = vsel %vm175, %v744, %v748
    %v751 = vshrl.u32 %v121, 16
    %v753 = vrot.slane %v751, 4
    %v754 = vshll.u32 %v121, 16
    %v756 = vrot.slane %v754, 5
    %v757 = vor.u32 %v753, %v756
    %v758 = vrot.slane %v757, 4
    %v760 = vshll.u32 %v122, 16
    %v762 = vrot.slane %v760, 5
    %v763 = vsel %vm175, %v758, %v762
    %v765 = vshrl.u32 %v123, 16
    %v767 = vrot.slane %v765, 4
    %v768 = vshll.u32 %v123, 16
    %v770 = vrot.slane %v768, 5
    %v771 = vor.u32 %v767, %v770
    %v772 = vrot.slane %v771, 4
    %v774 = vshll.u32 %v124, 16
    %v776 = vrot.slane %v774, 5
    %v777 = vsel %vm175, %v772, %v776
    %v779 = vshrl.u32 %v125, 16
    %v781 = vrot.slane %v779, 4
    %v782 = vshll.u32 %v125, 16
    %v784 = vrot.slane %v782, 5
    %v785 = vor.u32 %v781, %v784
    %v786 = vrot.slane %v785, 4
    %v788 = vshll.u32 %v126, 16
    %v790 = vrot.slane %v788, 5
    %v791 = vsel %vm175, %v786, %v790
    %v793 = vshrl.u32 %v127, 16
    %v795 = vrot.slane %v793, 4
    %v796 = vshll.u32 %v127, 16
    %v798 = vrot.slane %v796, 5
    %v799 = vor.u32 %v795, %v798
    %v800 = vrot.slane %v799, 4
    %v802 = vshll.u32 %v128, 16
    %v804 = vrot.slane %v802, 5
    %v805 = vsel %vm175, %v800, %v804
    %v807 = vshrl.u32 %v129, 16
    %v809 = vrot.slane %v807, 4
    %v810 = vshll.u32 %v129, 16
    %v812 = vrot.slane %v810, 5
    %v813 = vor.u32 %v809, %v812
    %v814 = vrot.slane %v813, 4
    %v816 = vshll.u32 %v130, 16
    %v818 = vrot.slane %v816, 5
    %v819 = vsel %vm175, %v814, %v818
    %v821 = vshrl.u32 %v131, 16
    %v823 = vrot.slane %v821, 4
    %v824 = vshll.u32 %v131, 16
    %v826 = vrot.slane %v824, 5
    %v827 = vor.u32 %v823, %v826
    %v828 = vrot.slane %v827, 4
    %v830 = vshll.u32 %v132, 16
    %v832 = vrot.slane %v830, 5
    %v833 = vsel %vm175, %v828, %v832
    %v835 = vshrl.u32 %v133, 16
    %v837 = vrot.slane %v835, 4
    %v838 = vshll.u32 %v133, 16
    %v840 = vrot.slane %v838, 5
    %v841 = vor.u32 %v837, %v840
    %v842 = vrot.slane %v841, 4
    %v844 = vshll.u32 %v134, 16
    %v846 = vrot.slane %v844, 5
    %v847 = vsel %vm175, %v842, %v846
    %v849 = vshrl.u32 %v135, 16
    %v851 = vrot.slane %v849, 4
    %v852 = vshll.u32 %v135, 16
    %v854 = vrot.slane %v852, 5
    %v855 = vor.u32 %v851, %v854
    %v856 = vrot.slane %v855, 4
    %v858 = vshll.u32 %v136, 16
    %v860 = vrot.slane %v858, 5
    %v861 = vsel %vm175, %v856, %v860
    %v863 = vshrl.u32 %v137, 16
    %v865 = vrot.slane %v863, 4
    %v866 = vshll.u32 %v137, 16
    %v868 = vrot.slane %v866, 5
    %v869 = vor.u32 %v865, %v868
    %v870 = vrot.slane %v869, 4
    %v872 = vshll.u32 %v138, 16
    %v874 = vrot.slane %v872, 5
    %v875 = vsel %vm175, %v870, %v874
    %v877 = vshrl.u32 %v139, 16
    %v879 = vrot.slane %v877, 4
    %v880 = vshll.u32 %v139, 16
    %v882 = vrot.slane %v880, 5
    %v883 = vor.u32 %v879, %v882
    %v884 = vrot.slane %v883, 4
    %v886 = vshll.u32 %v140, 16
    %v888 = vrot.slane %v886, 5
    %v889 = vsel %vm175, %v884, %v888
    %v891 = vshrl.u32 %v141, 16
    %v893 = vrot.slane %v891, 4
    %v894 = vshll.u32 %v141, 16
    %v896 = vrot.slane %v894, 5
    %v897 = vor.u32 %v893, %v896
    %v898 = vrot.slane %v897, 4
    %v900 = vshll.u32 %v142, 16
    %v902 = vrot.slane %v900, 5
    %v903 = vsel %vm175, %v898, %v902
    %v905 = vshrl.u32 %v143, 16
    %v907 = vrot.slane %v905, 4
    %v908 = vshll.u32 %v143, 16
    %v910 = vrot.slane %v908, 5
    %v911 = vor.u32 %v907, %v910
    %v912 = vrot.slane %v911, 4
    %v914 = vshll.u32 %v144, 16
    %v916 = vrot.slane %v914, 5
    %v917 = vsel %vm175, %v912, %v916
    %v919 = vshrl.u32 %v145, 16
    %v921 = vrot.slane %v919, 4
    %v922 = vshll.u32 %v145, 16
    %v924 = vrot.slane %v922, 5
    %v925 = vor.u32 %v921, %v924
    %v926 = vrot.slane %v925, 4
    %v928 = vshll.u32 %v146, 16
    %v930 = vrot.slane %v928, 5
    %v931 = vsel %vm175, %v926, %v930
    %v933 = vshrl.u32 %v147, 16
    %v935 = vrot.slane %v933, 4
    %v936 = vshll.u32 %v147, 16
    %v938 = vrot.slane %v936, 5
    %v939 = vor.u32 %v935, %v938
    %v940 = vrot.slane %v939, 4
    %v942 = vshll.u32 %v148, 16
    %v944 = vrot.slane %v942, 5
    %v945 = vsel %vm175, %v940, %v944
    %v947 = vshrl.u32 %v149, 16
    %v949 = vrot.slane %v947, 4
    %v950 = vshll.u32 %v149, 16
    %v952 = vrot.slane %v950, 5
    %v953 = vor.u32 %v949, %v952
    %v954 = vrot.slane %v953, 4
    %v956 = vshll.u32 %v150, 16
    %v958 = vrot.slane %v956, 5
    %v959 = vsel %vm175, %v954, %v958
    %v961 = vshrl.u32 %v151, 16
    %v963 = vrot.slane %v961, 4
    %v964 = vshll.u32 %v151, 16
    %v966 = vrot.slane %v964, 5
    %v967 = vor.u32 %v963, %v966
    %v968 = vrot.slane %v967, 4
    %v970 = vshll.u32 %v152, 16
    %v972 = vrot.slane %v970, 5
    %v973 = vsel %vm175, %v968, %v972
    %v975 = vshrl.u32 %v153, 16
    %v977 = vrot.slane %v975, 4
    %v978 = vshll.u32 %v153, 16
    %v980 = vrot.slane %v978, 5
    %v981 = vor.u32 %v977, %v980
    %v982 = vrot.slane %v981, 4
    %v984 = vshll.u32 %v154, 16
    %v986 = vrot.slane %v984, 5
    %v987 = vsel %vm175, %v982, %v986
    %v989 = vshrl.u32 %v155, 16
    %v991 = vrot.slane %v989, 4
    %v992 = vshll.u32 %v155, 16
    %v994 = vrot.slane %v992, 5
    %v995 = vor.u32 %v991, %v994
    %v996 = vrot.slane %v995, 4
    %v998 = vshll.u32 %v156, 16
    %v1000 = vrot.slane %v998, 5
    %v1001 = vsel %vm175, %v996, %v1000
    %v1003 = vshrl.u32 %v157, 16
    %v1005 = vrot.slane %v1003, 4
    %v1006 = vshll.u32 %v157, 16
    %v1008 = vrot.slane %v1006, 5
    %v1009 = vor.u32 %v1005, %v1008
    %v1010 = vrot.slane %v1009, 4
    %v1012 = vshll.u32 %v158, 16
    %v1014 = vrot.slane %v1012, 5
    %v1015 = vsel %vm175, %v1010, %v1014
    %v1017 = vshrl.u32 %v159, 16
    %v1019 = vrot.slane %v1017, 4
    %v1020 = vshll.u32 %v159, 16
    %v1022 = vrot.slane %v1020, 5
    %v1023 = vor.u32 %v1019, %v1022
    %v1024 = vrot.slane %v1023, 4
    %v1026 = vshll.u32 %v160, 16
    %v1028 = vrot.slane %v1026, 5
    %v1029 = vsel %vm175, %v1024, %v1028
    %v1031 = vshrl.u32 %v161, 16
    %v1033 = vrot.slane %v1031, 4
    %v1034 = vshll.u32 %v161, 16
    %v1036 = vrot.slane %v1034, 5
    %v1037 = vor.u32 %v1033, %v1036
    %v1038 = vrot.slane %v1037, 4
    %v1040 = vshll.u32 %v162, 16
    %v1042 = vrot.slane %v1040, 5
    %v1043 = vsel %vm175, %v1038, %v1042
    %v1045 = vshrl.u32 %v163, 16
    %v1047 = vrot.slane %v1045, 4
    %v1048 = vshll.u32 %v163, 16
    %v1050 = vrot.slane %v1048, 5
    %v1051 = vor.u32 %v1047, %v1050
    %v1052 = vrot.slane %v1051, 4
    %v1054 = vshll.u32 %v164, 16
    %v1056 = vrot.slane %v1054, 5
    %v1057 = vsel %vm175, %v1052, %v1056
    %v1059 = vshrl.u32 %v165, 16
    %v1061 = vrot.slane %v1059, 4
    %v1062 = vshll.u32 %v165, 16
    %v1064 = vrot.slane %v1062, 5
    %v1065 = vor.u32 %v1061, %v1064
    %v1066 = vrot.slane %v1065, 4
    %v1068 = vshll.u32 %v166, 16
    %v1070 = vrot.slane %v1068, 5
    %v1071 = vsel %vm175, %v1066, %v1070
    %v1072 = vunpack.c.l.b16 %v189
    %v1073 = vunpack.c.l.b16 %v203
    %v1074 = vunpack.c.l.b16 %v217
    %v1075 = vunpack.c.l.b16 %v231
    %v1076 = vunpack.c.l.b16 %v245
    %v1077 = vunpack.c.l.b16 %v259
    %v1078 = vunpack.c.l.b16 %v273
    %v1079 = vunpack.c.l.b16 %v287
    %v1080 = vunpack.c.l.b16 %v301
    %v1081 = vunpack.c.l.b16 %v315
    %v1082 = vunpack.c.l.b16 %v329
    %v1083 = vunpack.c.l.b16 %v343
    %v1084 = vunpack.c.l.b16 %v357
    %v1085 = vunpack.c.l.b16 %v371
    %v1086 = vunpack.c.l.b16 %v385
    %v1087 = vunpack.c.l.b16 %v399
    %v1088 = vunpack.c.l.b16 %v413
    %v1089 = vunpack.c.l.b16 %v427
    %v1090 = vunpack.c.l.b16 %v441
    %v1091 = vunpack.c.l.b16 %v455
    %v1092 = vunpack.c.l.b16 %v469
    %v1093 = vunpack.c.l.b16 %v483
    %v1094 = vunpack.c.l.b16 %v497
    %v1095 = vunpack.c.l.b16 %v511
    %v1096 = vunpack.c.l.b16 %v525
    %v1097 = vunpack.c.l.b16 %v539
    %v1098 = vunpack.c.l.b16 %v553
    %v1099 = vunpack.c.l.b16 %v567
    %v1100 = vunpack.c.l.b16 %v581
    %v1101 = vunpack.c.l.b16 %v595
    %v1102 = vunpack.c.l.b16 %v609
    %v1103 = vunpack.c.l.b16 %v623
    %v1104 = vunpack.c.l.b16 %v637
    %v1105 = vunpack.c.l.b16 %v651
    %v1106 = vunpack.c.l.b16 %v665
    %v1107 = vunpack.c.l.b16 %v679
    %v1108 = vunpack.c.l.b16 %v693
    %v1109 = vunpack.c.l.b16 %v707
    %v1110 = vunpack.c.l.b16 %v721
    %v1111 = vunpack.c.l.b16 %v735
    %v1112 = vunpack.c.l.b16 %v749
    %v1113 = vunpack.c.l.b16 %v763
    %v1114 = vunpack.c.l.b16 %v777
    %v1115 = vunpack.c.l.b16 %v791
    %v1116 = vunpack.c.l.b16 %v805
    %v1117 = vunpack.c.l.b16 %v819
    %v1118 = vunpack.c.l.b16 %v833
    %v1119 = vunpack.c.l.b16 %v847
    %v1120 = vunpack.c.l.b16 %v861
    %v1121 = vunpack.c.l.b16 %v875
    %v1122 = vunpack.c.l.b16 %v889
    %v1123 = vunpack.c.l.b16 %v903
    %v1124 = vunpack.c.l.b16 %v917
    %v1125 = vunpack.c.l.b16 %v931
    %v1126 = vunpack.c.l.b16 %v945
    %v1127 = vunpack.c.l.b16 %v959
    %v1128 = vunpack.c.l.b16 %v973
    %v1129 = vunpack.c.l.b16 %v987
    %v1130 = vunpack.c.l.b16 %v1001
    %v1131 = vunpack.c.l.b16 %v1015
    %v1132 = vunpack.c.l.b16 %v1029
    %v1133 = vunpack.c.l.b16 %v1043
    %v1134 = vunpack.c.l.b16 %v1057
    %v1135 = vunpack.c.l.b16 %v1071
    %v1136 = vpack.c.b16 %v1073, %v1072
    %v1137 = vpack.c.b16 %v1075, %v1074
    %v1138 = vpack.c.b16 %v1077, %v1076
    %v1139 = vpack.c.b16 %v1079, %v1078
    %v1140 = vpack.c.b16 %v1081, %v1080
    %v1141 = vpack.c.b16 %v1083, %v1082
    %v1142 = vpack.c.b16 %v1085, %v1084
    %v1143 = vpack.c.b16 %v1087, %v1086
    %v1144 = vpack.c.b16 %v1089, %v1088
    %v1145 = vpack.c.b16 %v1091, %v1090
    %v1146 = vpack.c.b16 %v1093, %v1092
    %v1147 = vpack.c.b16 %v1095, %v1094
    %v1148 = vpack.c.b16 %v1097, %v1096
    %v1149 = vpack.c.b16 %v1099, %v1098
    %v1150 = vpack.c.b16 %v1101, %v1100
    %v1151 = vpack.c.b16 %v1103, %v1102
    %v1152 = vpack.c.b16 %v1105, %v1104
    %v1153 = vpack.c.b16 %v1107, %v1106
    %v1154 = vpack.c.b16 %v1109, %v1108
    %v1155 = vpack.c.b16 %v1111, %v1110
    %v1156 = vpack.c.b16 %v1113, %v1112
    %v1157 = vpack.c.b16 %v1115, %v1114
    %v1158 = vpack.c.b16 %v1117, %v1116
    %v1159 = vpack.c.b16 %v1119, %v1118
    %v1160 = vpack.c.b16 %v1121, %v1120
    %v1161 = vpack.c.b16 %v1123, %v1122
    %v1162 = vpack.c.b16 %v1125, %v1124
    %v1163 = vpack.c.b16 %v1127, %v1126
    %v1164 = vpack.c.b16 %v1129, %v1128
    %v1165 = vpack.c.b16 %v1131, %v1130
    %v1166 = vpack.c.b16 %v1133, %v1132
    %v1167 = vpack.c.b16 %v1135, %v1134
    %v1170 = vunpack.c.l.b16 %v169
    %v1171 = vunpack.c.l.b16 %v170
    %v1172 = vpack.c.b16 %v1171, %v1170
    %vm1174 = vcmask 130048
    %v1176 = vsel %vm1174, %v1136, 0
    %v1179 = vsel %vm1174, %v1137, 0
    %v1182 = vsel %vm1174, %v1138, 0
    %v1185 = vsel %vm1174, %v1139, 0
    %v1188 = vsel %vm1174, %v1140, 0
    %v1191 = vsel %vm1174, %v1141, 0
    %v1194 = vsel %vm1174, %v1142, 0
    %v1197 = vsel %vm1174, %v1143, 0
    %v1200 = vsel %vm1174, %v1144, 0
    %v1203 = vsel %vm1174, %v1145, 0
    %v1206 = vsel %vm1174, %v1146, 0
    %v1209 = vsel %vm1174, %v1147, 0
    %v1212 = vsel %vm1174, %v1148, 0
    %v1215 = vsel %vm1174, %v1149, 0
    %v1218 = vsel %vm1174, %v1150, 0
    %v1221 = vsel %vm1174, %v1151, 0
    %v1224 = vsel %vm1174, %v1152, 0
    %v1227 = vsel %vm1174, %v1153, 0
    %v1230 = vsel %vm1174, %v1154, 0
    %v1233 = vsel %vm1174, %v1155, 0
    %v1236 = vsel %vm1174, %v1156, 0
    %v1239 = vsel %vm1174, %v1157, 0
    %v1242 = vsel %vm1174, %v1158, 0
    %v1245 = vsel %vm1174, %v1159, 0
    %v1248 = vsel %vm1174, %v1160, 0
    %v1251 = vsel %vm1174, %v1161, 0
    %v1254 = vsel %vm1174, %v1162, 0
    %v1257 = vsel %vm1174, %v1163, 0
    %v1260 = vsel %vm1174, %v1164, 0
    %v1263 = vsel %vm1174, %v1165, 0
    %v1266 = vsel %vm1174, %v1166, 0
    %v1269 = vsel %vm1174, %v1167, 0
    %1271 = vmatprep.subr.bf16.mxu0 0
    %1272 = vmatpush1.bf16.msra.mxu0 %v1172
    %1273 = vmatprep.subr.bf16.mxu0 0
    %1274 = vmatpush1.bf16.msra.mxu0 0
    %1275 = vmatprep.subr.bf16.mxu0 0
    %1276 = vmatpush1.bf16.msra.mxu0 0
    %1277 = vmatprep.subr.bf16.mxu0 0
    %1278 = vmatpush1.bf16.msra.mxu0 0
    %1279 = vmatprep.subr.bf16.mxu0 0
    %1280 = vmatpush1.bf16.msra.mxu0 0
    %1281 = vmatprep.subr.bf16.mxu0 0
    %1282 = vmatpush1.bf16.msra.mxu0 0
    %1283 = vmatprep.subr.bf16.mxu0 0
    %1284 = vmatpush1.bf16.msra.mxu0 0
    %1285 = vmatprep.subr.bf16.mxu0 0
    %1286 = vmatpush1.bf16.msra.mxu0 0
    %1287 = vmatprep.subr.bf16.mxu0 0
    %1288 = vmatpush1.bf16.msra.mxu0 0
    %1289 = vmatprep.subr.bf16.mxu0 0
    %1290 = vmatpush1.bf16.msra.mxu0 0
    %1291 = vmatprep.subr.bf16.mxu0 0
    %1292 = vmatpush1.bf16.msra.mxu0 0
    %1293 = vmatprep.subr.bf16.mxu0 0
    %1294 = vmatpush1.bf16.msra.mxu0 0
    %1295 = vmatprep.subr.bf16.mxu0 0
    %1296 = vmatpush1.bf16.msra.mxu0 0
    %1297 = vmatprep.subr.bf16.mxu0 0
    %1298 = vmatpush1.bf16.msra.mxu0 0
    %1299 = vmatprep.subr.bf16.mxu0 0
    %1300 = vmatpush1.bf16.msra.mxu0 0
    %1301 = vmatprep.subr.bf16.mxu0 0
    %1302 = vmatpush1.bf16.msra.mxu0 0
    %1303 = vmatprep.mubr.bf16.mxu0 0
    %1304 = vmatmul.mubr.bf16.gmra.mrb[0].mxu0 %v1176
    %v1305 = vpop.f32.mrb[0].mxu0
    %v1306 = vadd.f32 0.0, %v1305
    %v1307 = vpop.f32.mrb[0].mxu0
    %v1308 = vpop.f32.mrb[0].mxu0
    %v1309 = vadd.f32 0.0, %v1308
    %v1310 = vpop.f32.mrb[0].mxu0
    %1311 = vmatprep.mubr.bf16.mxu0 0
    %1312 = vmatmul.mubr.bf16.gmra.mrb[0].mxu0 %v1179
    %v1313 = vpop.f32.mrb[0].mxu0
    %v1314 = vadd.f32 0.0, %v1313
    %v1315 = vpop.f32.mrb[0].mxu0
    %v1316 = vpop.f32.mrb[0].mxu0
    %v1317 = vadd.f32 0.0, %v1316
    %v1318 = vpop.f32.mrb[0].mxu0
    %1319 = vmatprep.mubr.bf16.mxu0 0
    %1320 = vmatmul.mubr.bf16.gmra.mrb[0].mxu0 %v1182
    %v1321 = vpop.f32.mrb[0].mxu0
    %v1322 = vadd.f32 0.0, %v1321
    %v1323 = vpop.f32.mrb[0].mxu0
    %v1324 = vpop.f32.mrb[0].mxu0
    %v1325 = vadd.f32 0.0, %v1324
    %v1326 = vpop.f32.mrb[0].mxu0
    %1327 = vmatprep.mubr.bf16.mxu0 0
    %1328 = vmatmul.mubr.bf16.gmra.mrb[0].mxu0 %v1185
    %v1329 = vpop.f32.mrb[0].mxu0
    %v1330 = vadd.f32 0.0, %v1329
    %v1331 = vpop.f32.mrb[0].mxu0
    %v1332 = vpop.f32.mrb[0].mxu0
    %v1333 = vadd.f32 0.0, %v1332
    %v1334 = vpop.f32.mrb[0].mxu0
    %1335 = vmatprep.mubr.bf16.mxu0 0
    %1336 = vmatmul.mubr.bf16.gmra.mrb[0].mxu0 %v1188
    %v1337 = vpop.f32.mrb[0].mxu0
    %v1338 = vadd.f32 0.0, %v1337
    %v1339 = vpop.f32.mrb[0].mxu0
    %v1340 = vpop.f32.mrb[0].mxu0
    %v1341 = vadd.f32 0.0, %v1340
    %v1342 = vpop.f32.mrb[0].mxu0
    %1343 = vmatprep.mubr.bf16.mxu0 0
    %1344 = vmatmul.mubr.bf16.gmra.mrb[0].mxu0 %v1191
    %v1345 = vpop.f32.mrb[0].mxu0
    %v1346 = vadd.f32 0.0, %v1345
    %v1347 = vpop.f32.mrb[0].mxu0
    %v1348 = vpop.f32.mrb[0].mxu0
    %v1349 = vadd.f32 0.0, %v1348
    %v1350 = vpop.f32.mrb[0].mxu0
    %1351 = vmatprep.mubr.bf16.mxu0 0
    %1352 = vmatmul.mubr.bf16.gmra.mrb[0].mxu0 %v1194
    %v1353 = vpop.f32.mrb[0].mxu0
    %v1354 = vadd.f32 0.0, %v1353
    %v1355 = vpop.f32.mrb[0].mxu0
    %v1356 = vpop.f32.mrb[0].mxu0
    %v1357 = vadd.f32 0.0, %v1356
    %v1358 = vpop.f32.mrb[0].mxu0
    %1359 = vmatprep.mubr.bf16.mxu0 0
    %1360 = vmatmul.mubr.bf16.gmra.mrb[0].mxu0 %v1197
    %v1361 = vpop.f32.mrb[0].mxu0
    %v1362 = vadd.f32 0.0, %v1361
    %v1363 = vpop.f32.mrb[0].mxu0
    %v1364 = vpop.f32.mrb[0].mxu0
    %v1365 = vadd.f32 0.0, %v1364
    %v1366 = vpop.f32.mrb[0].mxu0
    %1367 = vmatprep.mubr.bf16.mxu0 0
    %1368 = vmatmul.mubr.bf16.gmra.mrb[0].mxu0 %v1200
    %v1369 = vpop.f32.mrb[0].mxu0
    %v1370 = vadd.f32 0.0, %v1369
    %v1371 = vpop.f32.mrb[0].mxu0
    %v1372 = vpop.f32.mrb[0].mxu0
    %v1373 = vadd.f32 0.0, %v1372
    %v1374 = vpop.f32.mrb[0].mxu0
    %1375 = vmatprep.mubr.bf16.mxu0 0
    %1376 = vmatmul.mubr.bf16.gmra.mrb[0].mxu0 %v1203
    %v1377 = vpop.f32.mrb[0].mxu0
    %v1378 = vadd.f32 0.0, %v1377
    %v1379 = vpop.f32.mrb[0].mxu0
    %v1380 = vpop.f32.mrb[0].mxu0
    %v1381 = vadd.f32 0.0, %v1380
    %v1382 = vpop.f32.mrb[0].mxu0
    %1383 = vmatprep.mubr.bf16.mxu0 0
    %1384 = vmatmul.mubr.bf16.gmra.mrb[0].mxu0 %v1206
    %v1385 = vpop.f32.mrb[0].mxu0
    %v1386 = vadd.f32 0.0, %v1385
    %v1387 = vpop.f32.mrb[0].mxu0
    %v1388 = vpop.f32.mrb[0].mxu0
    %v1389 = vadd.f32 0.0, %v1388
    %v1390 = vpop.f32.mrb[0].mxu0
    %1391 = vmatprep.mubr.bf16.mxu0 0
    %1392 = vmatmul.mubr.bf16.gmra.mrb[0].mxu0 %v1209
    %v1393 = vpop.f32.mrb[0].mxu0
    %v1394 = vadd.f32 0.0, %v1393
    %v1395 = vpop.f32.mrb[0].mxu0
    %v1396 = vpop.f32.mrb[0].mxu0
    %v1397 = vadd.f32 0.0, %v1396
    %v1398 = vpop.f32.mrb[0].mxu0
    %1399 = vmatprep.mubr.bf16.mxu0 0
    %1400 = vmatmul.mubr.bf16.gmra.mrb[0].mxu0 %v1212
    %v1401 = vpop.f32.mrb[0].mxu0
    %v1402 = vadd.f32 0.0, %v1401
    %v1403 = vpop.f32.mrb[0].mxu0
    %v1404 = vpop.f32.mrb[0].mxu0
    %v1405 = vadd.f32 0.0, %v1404
    %v1406 = vpop.f32.mrb[0].mxu0
    %1407 = vmatprep.mubr.bf16.mxu0 0
    %1408 = vmatmul.mubr.bf16.gmra.mrb[0].mxu0 %v1215
    %v1409 = vpop.f32.mrb[0].mxu0
    %v1410 = vadd.f32 0.0, %v1409
    %v1411 = vpop.f32.mrb[0].mxu0
    %v1412 = vpop.f32.mrb[0].mxu0
    %v1413 = vadd.f32 0.0, %v1412
    %v1414 = vpop.f32.mrb[0].mxu0
    %1415 = vmatprep.mubr.bf16.mxu0 0
    %1416 = vmatmul.mubr.bf16.gmra.mrb[0].mxu0 %v1218
    %v1417 = vpop.f32.mrb[0].mxu0
    %v1418 = vadd.f32 0.0, %v1417
    %v1419 = vpop.f32.mrb[0].mxu0
    %v1420 = vpop.f32.mrb[0].mxu0
    %v1421 = vadd.f32 0.0, %v1420
    %v1422 = vpop.f32.mrb[0].mxu0
    %1423 = vmatprep.mubr.bf16.mxu0 0
    %1424 = vmatmul.mubr.bf16.gmra.mrb[0].mxu0 %v1221
    %v1425 = vpop.f32.mrb[0].mxu0
    %v1426 = vadd.f32 0.0, %v1425
    %v1427 = vpop.f32.mrb[0].mxu0
    %v1428 = vpop.f32.mrb[0].mxu0
    %v1429 = vadd.f32 0.0, %v1428
    %v1430 = vpop.f32.mrb[0].mxu0
    %1431 = vmatprep.mubr.bf16.mxu0 0
    %1432 = vmatmul.mubr.bf16.gmra.mrb[0].mxu0 %v1224
    %v1433 = vpop.f32.mrb[0].mxu0
    %v1434 = vadd.f32 0.0, %v1433
    %v1435 = vpop.f32.mrb[0].mxu0
    %v1436 = vpop.f32.mrb[0].mxu0
    %v1437 = vadd.f32 0.0, %v1436
    %v1438 = vpop.f32.mrb[0].mxu0
    %1439 = vmatprep.mubr.bf16.mxu0 0
    %1440 = vmatmul.mubr.bf16.gmra.mrb[0].mxu0 %v1227
    %v1441 = vpop.f32.mrb[0].mxu0
    %v1442 = vadd.f32 0.0, %v1441
    %v1443 = vpop.f32.mrb[0].mxu0
    %v1444 = vpop.f32.mrb[0].mxu0
    %v1445 = vadd.f32 0.0, %v1444
    %v1446 = vpop.f32.mrb[0].mxu0
    %1447 = vmatprep.mubr.bf16.mxu0 0
    %1448 = vmatmul.mubr.bf16.gmra.mrb[0].mxu0 %v1230
    %v1449 = vpop.f32.mrb[0].mxu0
    %v1450 = vadd.f32 0.0, %v1449
    %v1451 = vpop.f32.mrb[0].mxu0
    %v1452 = vpop.f32.mrb[0].mxu0
    %v1453 = vadd.f32 0.0, %v1452
    %v1454 = vpop.f32.mrb[0].mxu0
    %1455 = vmatprep.mubr.bf16.mxu0 0
    %1456 = vmatmul.mubr.bf16.gmra.mrb[0].mxu0 %v1233
    %v1457 = vpop.f32.mrb[0].mxu0
    %v1458 = vadd.f32 0.0, %v1457
    %v1459 = vpop.f32.mrb[0].mxu0
    %v1460 = vpop.f32.mrb[0].mxu0
    %v1461 = vadd.f32 0.0, %v1460
    %v1462 = vpop.f32.mrb[0].mxu0
    %1463 = vmatprep.mubr.bf16.mxu0 0
    %1464 = vmatmul.mubr.bf16.gmra.mrb[0].mxu0 %v1236
    %v1465 = vpop.f32.mrb[0].mxu0
    %v1466 = vadd.f32 0.0, %v1465
    %v1467 = vpop.f32.mrb[0].mxu0
    %v1468 = vpop.f32.mrb[0].mxu0
    %v1469 = vadd.f32 0.0, %v1468
    %v1470 = vpop.f32.mrb[0].mxu0
    %1471 = vmatprep.mubr.bf16.mxu0 0
    %1472 = vmatmul.mubr.bf16.gmra.mrb[0].mxu0 %v1239
    %v1473 = vpop.f32.mrb[0].mxu0
    %v1474 = vadd.f32 0.0, %v1473
    %v1475 = vpop.f32.mrb[0].mxu0
    %v1476 = vpop.f32.mrb[0].mxu0
    %v1477 = vadd.f32 0.0, %v1476
    %v1478 = vpop.f32.mrb[0].mxu0
    %1479 = vmatprep.mubr.bf16.mxu0 0
    %1480 = vmatmul.mubr.bf16.gmra.mrb[0].mxu0 %v1242
    %v1481 = vpop.f32.mrb[0].mxu0
    %v1482 = vadd.f32 0.0, %v1481
    %v1483 = vpop.f32.mrb[0].mxu0
    %v1484 = vpop.f32.mrb[0].mxu0
    %v1485 = vadd.f32 0.0, %v1484
    %v1486 = vpop.f32.mrb[0].mxu0
    %1487 = vmatprep.mubr.bf16.mxu0 0
    %1488 = vmatmul.mubr.bf16.gmra.mrb[0].mxu0 %v1245
    %v1489 = vpop.f32.mrb[0].mxu0
    %v1490 = vadd.f32 0.0, %v1489
    %v1491 = vpop.f32.mrb[0].mxu0
    %v1492 = vpop.f32.mrb[0].mxu0
    %v1493 = vadd.f32 0.0, %v1492
    %v1494 = vpop.f32.mrb[0].mxu0
    %1495 = vmatprep.mubr.bf16.mxu0 0
    %1496 = vmatmul.mubr.bf16.gmra.mrb[0].mxu0 %v1248
    %v1497 = vpop.f32.mrb[0].mxu0
    %v1498 = vadd.f32 0.0, %v1497
    %v1499 = vpop.f32.mrb[0].mxu0
    %v1500 = vpop.f32.mrb[0].mxu0
    %v1501 = vadd.f32 0.0, %v1500
    %v1502 = vpop.f32.mrb[0].mxu0
    %1503 = vmatprep.mubr.bf16.mxu0 0
    %1504 = vmatmul.mubr.bf16.gmra.mrb[0].mxu0 %v1251
    %v1505 = vpop.f32.mrb[0].mxu0
    %v1506 = vadd.f32 0.0, %v1505
    %v1507 = vpop.f32.mrb[0].mxu0
    %v1508 = vpop.f32.mrb[0].mxu0
    %v1509 = vadd.f32 0.0, %v1508
    %v1510 = vpop.f32.mrb[0].mxu0
    %1511 = vmatprep.mubr.bf16.mxu0 0
    %1512 = vmatmul.mubr.bf16.gmra.mrb[0].mxu0 %v1254
    %v1513 = vpop.f32.mrb[0].mxu0
    %v1514 = vadd.f32 0.0, %v1513
    %v1515 = vpop.f32.mrb[0].mxu0
    %v1516 = vpop.f32.mrb[0].mxu0
    %v1517 = vadd.f32 0.0, %v1516
    %v1518 = vpop.f32.mrb[0].mxu0
    %1519 = vmatprep.mubr.bf16.mxu0 0
    %1520 = vmatmul.mubr.bf16.gmra.mrb[0].mxu0 %v1257
    %v1521 = vpop.f32.mrb[0].mxu0
    %v1522 = vadd.f32 0.0, %v1521
    %v1523 = vpop.f32.mrb[0].mxu0
    %v1524 = vpop.f32.mrb[0].mxu0
    %v1525 = vadd.f32 0.0, %v1524
    %v1526 = vpop.f32.mrb[0].mxu0
    %1527 = vmatprep.mubr.bf16.mxu0 0
    %1528 = vmatmul.mubr.bf16.gmra.mrb[0].mxu0 %v1260
    %v1529 = vpop.f32.mrb[0].mxu0
    %v1530 = vadd.f32 0.0, %v1529
    %v1531 = vpop.f32.mrb[0].mxu0
    %v1532 = vpop.f32.mrb[0].mxu0
    %v1533 = vadd.f32 0.0, %v1532
    %v1534 = vpop.f32.mrb[0].mxu0
    %1535 = vmatprep.mubr.bf16.mxu0 0
    %1536 = vmatmul.mubr.bf16.gmra.mrb[0].mxu0 %v1263
    %v1537 = vpop.f32.mrb[0].mxu0
    %v1538 = vadd.f32 0.0, %v1537
    %v1539 = vpop.f32.mrb[0].mxu0
    %v1540 = vpop.f32.mrb[0].mxu0
    %v1541 = vadd.f32 0.0, %v1540
    %v1542 = vpop.f32.mrb[0].mxu0
    %1543 = vmatprep.mubr.bf16.mxu0 0
    %1544 = vmatmul.mubr.bf16.gmra.mrb[0].mxu0 %v1266
    %v1545 = vpop.f32.mrb[0].mxu0
    %v1546 = vadd.f32 0.0, %v1545
    %v1547 = vpop.f32.mrb[0].mxu0
    %v1548 = vpop.f32.mrb[0].mxu0
    %v1549 = vadd.f32 0.0, %v1548
    %v1550 = vpop.f32.mrb[0].mxu0
    %1551 = vmatprep.mubr.bf16.mxu0 0
    %1552 = vmatmul.mubr.bf16.gmra.mrb[0].mxu0 %v1269
    %v1553 = vpop.f32.mrb[0].mxu0
    %v1554 = vadd.f32 0.0, %v1553
    %v1555 = vpop.f32.mrb[0].mxu0
    %v1556 = vpop.f32.mrb[0].mxu0
    %v1557 = vadd.f32 0.0, %v1556
    %v1558 = vpop.f32.mrb[0].mxu0
    %1559 = vdwg.mxu0
    %v1624 = vunpack.c.l.b16 %v39
    %v1625 = vunpack.c.l.b16 %v41
    %v1626 = vunpack.c.l.b16 %v43
    %v1627 = vunpack.c.l.b16 %v45
    %v1628 = vunpack.c.l.b16 %v47
    %v1629 = vunpack.c.l.b16 %v49
    %v1630 = vunpack.c.l.b16 %v51
    %v1631 = vunpack.c.l.b16 %v53
    %v1632 = vunpack.c.l.b16 %v55
    %v1633 = vunpack.c.l.b16 %v57
    %v1634 = vunpack.c.l.b16 %v59
    %v1635 = vunpack.c.l.b16 %v61
    %v1636 = vunpack.c.l.b16 %v63
    %v1637 = vunpack.c.l.b16 %v65
    %v1638 = vunpack.c.l.b16 %v67
    %v1639 = vunpack.c.l.b16 %v69
    %v1640 = vunpack.c.l.b16 %v71
    %v1641 = vunpack.c.l.b16 %v73
    %v1642 = vunpack.c.l.b16 %v75
    %v1643 = vunpack.c.l.b16 %v77
    %v1644 = vunpack.c.l.b16 %v79
    %v1645 = vunpack.c.l.b16 %v81
    %v1646 = vunpack.c.l.b16 %v83
    %v1647 = vunpack.c.l.b16 %v85
    %v1648 = vunpack.c.l.b16 %v87
    %v1649 = vunpack.c.l.b16 %v89
    %v1650 = vunpack.c.l.b16 %v91
    %v1651 = vunpack.c.l.b16 %v93
    %v1652 = vunpack.c.l.b16 %v95
    %v1653 = vunpack.c.l.b16 %v97
    %v1654 = vunpack.c.l.b16 %v99
    %v1655 = vunpack.c.l.b16 %v101
    %v1656 = vunpack.c.l.b16 %v103
    %v1657 = vunpack.c.l.b16 %v105
    %v1658 = vunpack.c.l.b16 %v107
    %v1659 = vunpack.c.l.b16 %v109
    %v1660 = vunpack.c.l.b16 %v111
    %v1661 = vunpack.c.l.b16 %v113
    %v1662 = vunpack.c.l.b16 %v115
    %v1663 = vunpack.c.l.b16 %v117
    %v1664 = vunpack.c.l.b16 %v119
    %v1665 = vunpack.c.l.b16 %v121
    %v1666 = vunpack.c.l.b16 %v123
    %v1667 = vunpack.c.l.b16 %v125
    %v1668 = vunpack.c.l.b16 %v127
    %v1669 = vunpack.c.l.b16 %v129
    %v1670 = vunpack.c.l.b16 %v131
    %v1671 = vunpack.c.l.b16 %v133
    %v1672 = vunpack.c.l.b16 %v135
    %v1673 = vunpack.c.l.b16 %v137
    %v1674 = vunpack.c.l.b16 %v139
    %v1675 = vunpack.c.l.b16 %v141
    %v1676 = vunpack.c.l.b16 %v143
    %v1677 = vunpack.c.l.b16 %v145
    %v1678 = vunpack.c.l.b16 %v147
    %v1679 = vunpack.c.l.b16 %v149
    %v1680 = vunpack.c.l.b16 %v151
    %v1681 = vunpack.c.l.b16 %v153
    %v1682 = vunpack.c.l.b16 %v155
    %v1683 = vunpack.c.l.b16 %v157
    %v1684 = vunpack.c.l.b16 %v159
    %v1685 = vunpack.c.l.b16 %v161
    %v1686 = vunpack.c.l.b16 %v163
    %v1687 = vunpack.c.l.b16 %v165
    %v1688 = vpack.c.b16 %v1625, %v1624
    %v1689 = vpack.c.b16 %v1627, %v1626
    %v1690 = vpack.c.b16 %v1629, %v1628
    %v1691 = vpack.c.b16 %v1631, %v1630
    %v1692 = vpack.c.b16 %v1633, %v1632
    %v1693 = vpack.c.b16 %v1635, %v1634
    %v1694 = vpack.c.b16 %v1637, %v1636
    %v1695 = vpack.c.b16 %v1639, %v1638
    %v1696 = vpack.c.b16 %v1641, %v1640
    %v1697 = vpack.c.b16 %v1643, %v1642
    %v1698 = vpack.c.b16 %v1645, %v1644
    %v1699 = vpack.c.b16 %v1647, %v1646
    %v1700 = vpack.c.b16 %v1649, %v1648
    %v1701 = vpack.c.b16 %v1651, %v1650
    %v1702 = vpack.c.b16 %v1653, %v1652
    %v1703 = vpack.c.b16 %v1655, %v1654
    %v1704 = vpack.c.b16 %v1657, %v1656
    %v1705 = vpack.c.b16 %v1659, %v1658
    %v1706 = vpack.c.b16 %v1661, %v1660
    %v1707 = vpack.c.b16 %v1663, %v1662
    %v1708 = vpack.c.b16 %v1665, %v1664
    %v1709 = vpack.c.b16 %v1667, %v1666
    %v1710 = vpack.c.b16 %v1669, %v1668
    %v1711 = vpack.c.b16 %v1671, %v1670
    %v1712 = vpack.c.b16 %v1673, %v1672
    %v1713 = vpack.c.b16 %v1675, %v1674
    %v1714 = vpack.c.b16 %v1677, %v1676
    %v1715 = vpack.c.b16 %v1679, %v1678
    %v1716 = vpack.c.b16 %v1681, %v1680
    %v1717 = vpack.c.b16 %v1683, %v1682
    %v1718 = vpack.c.b16 %v1685, %v1684
    %v1719 = vpack.c.b16 %v1687, %v1686
    %v1722 = vunpack.c.l.b16 %v167
    %v1723 = vunpack.c.l.b16 %v168
    %v1724 = vpack.c.b16 %v1723, %v1722
    %v1727 = vsel %vm1174, %v1688, 0
    %v1730 = vsel %vm1174, %v1689, 0
    %v1733 = vsel %vm1174, %v1690, 0
    %v1736 = vsel %vm1174, %v1691, 0
    %v1739 = vsel %vm1174, %v1692, 0
    %v1742 = vsel %vm1174, %v1693, 0
    %v1745 = vsel %vm1174, %v1694, 0
    %v1748 = vsel %vm1174, %v1695, 0
    %v1751 = vsel %vm1174, %v1696, 0
    %v1754 = vsel %vm1174, %v1697, 0
    %v1757 = vsel %vm1174, %v1698, 0
    %v1760 = vsel %vm1174, %v1699, 0
    %v1763 = vsel %vm1174, %v1700, 0
    %v1766 = vsel %vm1174, %v1701, 0
    %v1769 = vsel %vm1174, %v1702, 0
    %v1772 = vsel %vm1174, %v1703, 0
    %v1775 = vsel %vm1174, %v1704, 0
    %v1778 = vsel %vm1174, %v1705, 0
    %v1781 = vsel %vm1174, %v1706, 0
    %v1784 = vsel %vm1174, %v1707, 0
    %v1787 = vsel %vm1174, %v1708, 0
    %v1790 = vsel %vm1174, %v1709, 0
    %v1793 = vsel %vm1174, %v1710, 0
    %v1796 = vsel %vm1174, %v1711, 0
    %v1799 = vsel %vm1174, %v1712, 0
    %v1802 = vsel %vm1174, %v1713, 0
    %v1805 = vsel %vm1174, %v1714, 0
    %v1808 = vsel %vm1174, %v1715, 0
    %v1811 = vsel %vm1174, %v1716, 0
    %v1814 = vsel %vm1174, %v1717, 0
    %v1817 = vsel %vm1174, %v1718, 0
    %v1820 = vsel %vm1174, %v1719, 0
    %1822 = vmatprep.subr.bf16.mxu0 0
    %1823 = vmatpush1.bf16.msra.mxu0 %v1724
    %1824 = vmatprep.subr.bf16.mxu0 0
    %1825 = vmatpush1.bf16.msra.mxu0 0
    %1826 = vmatprep.subr.bf16.mxu0 0
    %1827 = vmatpush1.bf16.msra.mxu0 0
    %1828 = vmatprep.subr.bf16.mxu0 0
    %1829 = vmatpush1.bf16.msra.mxu0 0
    %1830 = vmatprep.subr.bf16.mxu0 0
    %1831 = vmatpush1.bf16.msra.mxu0 0
    %1832 = vmatprep.subr.bf16.mxu0 0
    %1833 = vmatpush1.bf16.msra.mxu0 0
    %1834 = vmatprep.subr.bf16.mxu0 0
    %1835 = vmatpush1.bf16.msra.mxu0 0
    %1836 = vmatprep.subr.bf16.mxu0 0
    %1837 = vmatpush1.bf16.msra.mxu0 0
    %1838 = vmatprep.subr.bf16.mxu0 0
    %1839 = vmatpush1.bf16.msra.mxu0 0
    %1840 = vmatprep.subr.bf16.mxu0 0
    %1841 = vmatpush1.bf16.msra.mxu0 0
    %1842 = vmatprep.subr.bf16.mxu0 0
    %1843 = vmatpush1.bf16.msra.mxu0 0
    %1844 = vmatprep.subr.bf16.mxu0 0
    %1845 = vmatpush1.bf16.msra.mxu0 0
    %1846 = vmatprep.subr.bf16.mxu0 0
    %1847 = vmatpush1.bf16.msra.mxu0 0
    %1848 = vmatprep.subr.bf16.mxu0 0
    %1849 = vmatpush1.bf16.msra.mxu0 0
    %1850 = vmatprep.subr.bf16.mxu0 0
    %1851 = vmatpush1.bf16.msra.mxu0 0
    %1852 = vmatprep.subr.bf16.mxu0 0
    %1853 = vmatpush1.bf16.msra.mxu0 0
    %1854 = vmatprep.mubr.bf16.mxu0 0
    %1855 = vmatmul.mubr.bf16.gmra.mrb[0].mxu0 %v1727
    %v1856 = vpop.f32.mrb[0].mxu0
    %v1857 = vadd.f32 %v1306, %v1856
    %v1858 = vpop.f32.mrb[0].mxu0
    %v1859 = vpop.f32.mrb[0].mxu0
    %v1860 = vadd.f32 %v1309, %v1859
    %v1861 = vpop.f32.mrb[0].mxu0
    %1862 = vmatprep.mubr.bf16.mxu0 0
    %1863 = vmatmul.mubr.bf16.gmra.mrb[0].mxu0 %v1730
    %v1864 = vpop.f32.mrb[0].mxu0
    %v1865 = vadd.f32 %v1314, %v1864
    %v1866 = vpop.f32.mrb[0].mxu0
    %v1867 = vpop.f32.mrb[0].mxu0
    %v1868 = vadd.f32 %v1317, %v1867
    %v1869 = vpop.f32.mrb[0].mxu0
    %1870 = vmatprep.mubr.bf16.mxu0 0
    %1871 = vmatmul.mubr.bf16.gmra.mrb[0].mxu0 %v1733
    %v1872 = vpop.f32.mrb[0].mxu0
    %v1873 = vadd.f32 %v1322, %v1872
    %v1874 = vpop.f32.mrb[0].mxu0
    %v1875 = vpop.f32.mrb[0].mxu0
    %v1876 = vadd.f32 %v1325, %v1875
    %v1877 = vpop.f32.mrb[0].mxu0
    %1878 = vmatprep.mubr.bf16.mxu0 0
    %1879 = vmatmul.mubr.bf16.gmra.mrb[0].mxu0 %v1736
    %v1880 = vpop.f32.mrb[0].mxu0
    %v1881 = vadd.f32 %v1330, %v1880
    %v1882 = vpop.f32.mrb[0].mxu0
    %v1883 = vpop.f32.mrb[0].mxu0
    %v1884 = vadd.f32 %v1333, %v1883
    %v1885 = vpop.f32.mrb[0].mxu0
    %1886 = vmatprep.mubr.bf16.mxu0 0
    %1887 = vmatmul.mubr.bf16.gmra.mrb[0].mxu0 %v1739
    %v1888 = vpop.f32.mrb[0].mxu0
    %v1889 = vadd.f32 %v1338, %v1888
    %v1890 = vpop.f32.mrb[0].mxu0
    %v1891 = vpop.f32.mrb[0].mxu0
    %v1892 = vadd.f32 %v1341, %v1891
    %v1893 = vpop.f32.mrb[0].mxu0
    %1894 = vmatprep.mubr.bf16.mxu0 0
    %1895 = vmatmul.mubr.bf16.gmra.mrb[0].mxu0 %v1742
    %v1896 = vpop.f32.mrb[0].mxu0
    %v1897 = vadd.f32 %v1346, %v1896
    %v1898 = vpop.f32.mrb[0].mxu0
    %v1899 = vpop.f32.mrb[0].mxu0
    %v1900 = vadd.f32 %v1349, %v1899
    %v1901 = vpop.f32.mrb[0].mxu0
    %1902 = vmatprep.mubr.bf16.mxu0 0
    %1903 = vmatmul.mubr.bf16.gmra.mrb[0].mxu0 %v1745
    %v1904 = vpop.f32.mrb[0].mxu0
    %v1905 = vadd.f32 %v1354, %v1904
    %v1906 = vpop.f32.mrb[0].mxu0
    %v1907 = vpop.f32.mrb[0].mxu0
    %v1908 = vadd.f32 %v1357, %v1907
    %v1909 = vpop.f32.mrb[0].mxu0
    %1910 = vmatprep.mubr.bf16.mxu0 0
    %1911 = vmatmul.mubr.bf16.gmra.mrb[0].mxu0 %v1748
    %v1912 = vpop.f32.mrb[0].mxu0
    %v1913 = vadd.f32 %v1362, %v1912
    %v1914 = vpop.f32.mrb[0].mxu0
    %v1915 = vpop.f32.mrb[0].mxu0
    %v1916 = vadd.f32 %v1365, %v1915
    %v1917 = vpop.f32.mrb[0].mxu0
    %1918 = vmatprep.mubr.bf16.mxu0 0
    %1919 = vmatmul.mubr.bf16.gmra.mrb[0].mxu0 %v1751
    %v1920 = vpop.f32.mrb[0].mxu0
    %v1921 = vadd.f32 %v1370, %v1920
    %v1922 = vpop.f32.mrb[0].mxu0
    %v1923 = vpop.f32.mrb[0].mxu0
    %v1924 = vadd.f32 %v1373, %v1923
    %v1925 = vpop.f32.mrb[0].mxu0
    %1926 = vmatprep.mubr.bf16.mxu0 0
    %1927 = vmatmul.mubr.bf16.gmra.mrb[0].mxu0 %v1754
    %v1928 = vpop.f32.mrb[0].mxu0
    %v1929 = vadd.f32 %v1378, %v1928
    %v1930 = vpop.f32.mrb[0].mxu0
    %v1931 = vpop.f32.mrb[0].mxu0
    %v1932 = vadd.f32 %v1381, %v1931
    %v1933 = vpop.f32.mrb[0].mxu0
    %1934 = vmatprep.mubr.bf16.mxu0 0
    %1935 = vmatmul.mubr.bf16.gmra.mrb[0].mxu0 %v1757
    %v1936 = vpop.f32.mrb[0].mxu0
    %v1937 = vadd.f32 %v1386, %v1936
    %v1938 = vpop.f32.mrb[0].mxu0
    %v1939 = vpop.f32.mrb[0].mxu0
    %v1940 = vadd.f32 %v1389, %v1939
    %v1941 = vpop.f32.mrb[0].mxu0
    %1942 = vmatprep.mubr.bf16.mxu0 0
    %1943 = vmatmul.mubr.bf16.gmra.mrb[0].mxu0 %v1760
    %v1944 = vpop.f32.mrb[0].mxu0
    %v1945 = vadd.f32 %v1394, %v1944
    %v1946 = vpop.f32.mrb[0].mxu0
    %v1947 = vpop.f32.mrb[0].mxu0
    %v1948 = vadd.f32 %v1397, %v1947
    %v1949 = vpop.f32.mrb[0].mxu0
    %1950 = vmatprep.mubr.bf16.mxu0 0
    %1951 = vmatmul.mubr.bf16.gmra.mrb[0].mxu0 %v1763
    %v1952 = vpop.f32.mrb[0].mxu0
    %v1953 = vadd.f32 %v1402, %v1952
    %v1954 = vpop.f32.mrb[0].mxu0
    %v1955 = vpop.f32.mrb[0].mxu0
    %v1956 = vadd.f32 %v1405, %v1955
    %v1957 = vpop.f32.mrb[0].mxu0
    %1958 = vmatprep.mubr.bf16.mxu0 0
    %1959 = vmatmul.mubr.bf16.gmra.mrb[0].mxu0 %v1766
    %v1960 = vpop.f32.mrb[0].mxu0
    %v1961 = vadd.f32 %v1410, %v1960
    %v1962 = vpop.f32.mrb[0].mxu0
    %v1963 = vpop.f32.mrb[0].mxu0
    %v1964 = vadd.f32 %v1413, %v1963
    %v1965 = vpop.f32.mrb[0].mxu0
    %1966 = vmatprep.mubr.bf16.mxu0 0
    %1967 = vmatmul.mubr.bf16.gmra.mrb[0].mxu0 %v1769
    %v1968 = vpop.f32.mrb[0].mxu0
    %v1969 = vadd.f32 %v1418, %v1968
    %v1970 = vpop.f32.mrb[0].mxu0
    %v1971 = vpop.f32.mrb[0].mxu0
    %v1972 = vadd.f32 %v1421, %v1971
    %v1973 = vpop.f32.mrb[0].mxu0
    %1974 = vmatprep.mubr.bf16.mxu0 0
    %1975 = vmatmul.mubr.bf16.gmra.mrb[0].mxu0 %v1772
    %v1976 = vpop.f32.mrb[0].mxu0
    %v1977 = vadd.f32 %v1426, %v1976
    %v1978 = vpop.f32.mrb[0].mxu0
    %v1979 = vpop.f32.mrb[0].mxu0
    %v1980 = vadd.f32 %v1429, %v1979
    %v1981 = vpop.f32.mrb[0].mxu0
    %1982 = vmatprep.mubr.bf16.mxu0 0
    %1983 = vmatmul.mubr.bf16.gmra.mrb[0].mxu0 %v1775
    %v1984 = vpop.f32.mrb[0].mxu0
    %v1985 = vadd.f32 %v1434, %v1984
    %v1986 = vpop.f32.mrb[0].mxu0
    %v1987 = vpop.f32.mrb[0].mxu0
    %v1988 = vadd.f32 %v1437, %v1987
    %v1989 = vpop.f32.mrb[0].mxu0
    %1990 = vmatprep.mubr.bf16.mxu0 0
    %1991 = vmatmul.mubr.bf16.gmra.mrb[0].mxu0 %v1778
    %v1992 = vpop.f32.mrb[0].mxu0
    %v1993 = vadd.f32 %v1442, %v1992
    %v1994 = vpop.f32.mrb[0].mxu0
    %v1995 = vpop.f32.mrb[0].mxu0
    %v1996 = vadd.f32 %v1445, %v1995
    %v1997 = vpop.f32.mrb[0].mxu0
    %1998 = vmatprep.mubr.bf16.mxu0 0
    %1999 = vmatmul.mubr.bf16.gmra.mrb[0].mxu0 %v1781
    %v2000 = vpop.f32.mrb[0].mxu0
    %v2001 = vadd.f32 %v1450, %v2000
    %v2002 = vpop.f32.mrb[0].mxu0
    %v2003 = vpop.f32.mrb[0].mxu0
    %v2004 = vadd.f32 %v1453, %v2003
    %v2005 = vpop.f32.mrb[0].mxu0
    %2006 = vmatprep.mubr.bf16.mxu0 0
    %2007 = vmatmul.mubr.bf16.gmra.mrb[0].mxu0 %v1784
    %v2008 = vpop.f32.mrb[0].mxu0
    %v2009 = vadd.f32 %v1458, %v2008
    %v2010 = vpop.f32.mrb[0].mxu0
    %v2011 = vpop.f32.mrb[0].mxu0
    %v2012 = vadd.f32 %v1461, %v2011
    %v2013 = vpop.f32.mrb[0].mxu0
    %2014 = vmatprep.mubr.bf16.mxu0 0
    %2015 = vmatmul.mubr.bf16.gmra.mrb[0].mxu0 %v1787
    %v2016 = vpop.f32.mrb[0].mxu0
    %v2017 = vadd.f32 %v1466, %v2016
    %v2018 = vpop.f32.mrb[0].mxu0
    %v2019 = vpop.f32.mrb[0].mxu0
    %v2020 = vadd.f32 %v1469, %v2019
    %v2021 = vpop.f32.mrb[0].mxu0
    %2022 = vmatprep.mubr.bf16.mxu0 0
    %2023 = vmatmul.mubr.bf16.gmra.mrb[0].mxu0 %v1790
    %v2024 = vpop.f32.mrb[0].mxu0
    %v2025 = vadd.f32 %v1474, %v2024
    %v2026 = vpop.f32.mrb[0].mxu0
    %v2027 = vpop.f32.mrb[0].mxu0
    %v2028 = vadd.f32 %v1477, %v2027
    %v2029 = vpop.f32.mrb[0].mxu0
    %2030 = vmatprep.mubr.bf16.mxu0 0
    %2031 = vmatmul.mubr.bf16.gmra.mrb[0].mxu0 %v1793
    %v2032 = vpop.f32.mrb[0].mxu0
    %v2033 = vadd.f32 %v1482, %v2032
    %v2034 = vpop.f32.mrb[0].mxu0
    %v2035 = vpop.f32.mrb[0].mxu0
    %v2036 = vadd.f32 %v1485, %v2035
    %v2037 = vpop.f32.mrb[0].mxu0
    %2038 = vmatprep.mubr.bf16.mxu0 0
    %2039 = vmatmul.mubr.bf16.gmra.mrb[0].mxu0 %v1796
    %v2040 = vpop.f32.mrb[0].mxu0
    %v2041 = vadd.f32 %v1490, %v2040
    %v2042 = vpop.f32.mrb[0].mxu0
    %v2043 = vpop.f32.mrb[0].mxu0
    %v2044 = vadd.f32 %v1493, %v2043
    %v2045 = vpop.f32.mrb[0].mxu0
    %2046 = vmatprep.mubr.bf16.mxu0 0
    %2047 = vmatmul.mubr.bf16.gmra.mrb[0].mxu0 %v1799
    %v2048 = vpop.f32.mrb[0].mxu0
    %v2049 = vadd.f32 %v1498, %v2048
    %v2050 = vpop.f32.mrb[0].mxu0
    %v2051 = vpop.f32.mrb[0].mxu0
    %v2052 = vadd.f32 %v1501, %v2051
    %v2053 = vpop.f32.mrb[0].mxu0
    %2054 = vmatprep.mubr.bf16.mxu0 0
    %2055 = vmatmul.mubr.bf16.gmra.mrb[0].mxu0 %v1802
    %v2056 = vpop.f32.mrb[0].mxu0
    %v2057 = vadd.f32 %v1506, %v2056
    %v2058 = vpop.f32.mrb[0].mxu0
    %v2059 = vpop.f32.mrb[0].mxu0
    %v2060 = vadd.f32 %v1509, %v2059
    %v2061 = vpop.f32.mrb[0].mxu0
    %2062 = vmatprep.mubr.bf16.mxu0 0
    %2063 = vmatmul.mubr.bf16.gmra.mrb[0].mxu0 %v1805
    %v2064 = vpop.f32.mrb[0].mxu0
    %v2065 = vadd.f32 %v1514, %v2064
    %v2066 = vpop.f32.mrb[0].mxu0
    %v2067 = vpop.f32.mrb[0].mxu0
    %v2068 = vadd.f32 %v1517, %v2067
    %v2069 = vpop.f32.mrb[0].mxu0
    %2070 = vmatprep.mubr.bf16.mxu0 0
    %2071 = vmatmul.mubr.bf16.gmra.mrb[0].mxu0 %v1808
    %v2072 = vpop.f32.mrb[0].mxu0
    %v2073 = vadd.f32 %v1522, %v2072
    %v2074 = vpop.f32.mrb[0].mxu0
    %v2075 = vpop.f32.mrb[0].mxu0
    %v2076 = vadd.f32 %v1525, %v2075
    %v2077 = vpop.f32.mrb[0].mxu0
    %2078 = vmatprep.mubr.bf16.mxu0 0
    %2079 = vmatmul.mubr.bf16.gmra.mrb[0].mxu0 %v1811
    %v2080 = vpop.f32.mrb[0].mxu0
    %v2081 = vadd.f32 %v1530, %v2080
    %v2082 = vpop.f32.mrb[0].mxu0
    %v2083 = vpop.f32.mrb[0].mxu0
    %v2084 = vadd.f32 %v1533, %v2083
    %v2085 = vpop.f32.mrb[0].mxu0
    %2086 = vmatprep.mubr.bf16.mxu0 0
    %2087 = vmatmul.mubr.bf16.gmra.mrb[0].mxu0 %v1814
    %v2088 = vpop.f32.mrb[0].mxu0
    %v2089 = vadd.f32 %v1538, %v2088
    %v2090 = vpop.f32.mrb[0].mxu0
    %v2091 = vpop.f32.mrb[0].mxu0
    %v2092 = vadd.f32 %v1541, %v2091
    %v2093 = vpop.f32.mrb[0].mxu0
    %2094 = vmatprep.mubr.bf16.mxu0 0
    %2095 = vmatmul.mubr.bf16.gmra.mrb[0].mxu0 %v1817
    %v2096 = vpop.f32.mrb[0].mxu0
    %v2097 = vadd.f32 %v1546, %v2096
    %v2098 = vpop.f32.mrb[0].mxu0
    %v2099 = vpop.f32.mrb[0].mxu0
    %v2100 = vadd.f32 %v1549, %v2099
    %v2101 = vpop.f32.mrb[0].mxu0
    %2102 = vmatprep.mubr.bf16.mxu0 0
    %2103 = vmatmul.mubr.bf16.gmra.mrb[0].mxu0 %v1820
    %v2104 = vpop.f32.mrb[0].mxu0
    %v2105 = vadd.f32 %v1554, %v2104
    %v2106 = vpop.f32.mrb[0].mxu0
    %v2107 = vpop.f32.mrb[0].mxu0
    %v2108 = vadd.f32 %v1557, %v2107
    %v2109 = vpop.f32.mrb[0].mxu0
    %2110 = vdwg.mxu0
    %vm2175 = vcmask 1042432
    %vm2176 = vcmask 1046532
    %vm2177 = vmor %vm2175, %vm2176
    %v2178 = vrot.slane %v39, 5
    %v2179 = vrot.slane %v2178, 4
    %v2180 = vrot.slane %v40, 5
    %v2181 = vsel %vm2177, %v2179, %v2180
    %v2182 = vrot.slane %v41, 5
    %v2183 = vrot.slane %v2182, 4
    %v2184 = vrot.slane %v42, 5
    %v2185 = vsel %vm2177, %v2183, %v2184
    %v2186 = vrot.slane %v43, 5
    %v2187 = vrot.slane %v2186, 4
    %v2188 = vrot.slane %v44, 5
    %v2189 = vsel %vm2177, %v2187, %v2188
    %v2190 = vrot.slane %v45, 5
    %v2191 = vrot.slane %v2190, 4
    %v2192 = vrot.slane %v46, 5
    %v2193 = vsel %vm2177, %v2191, %v2192
    %v2194 = vrot.slane %v47, 5
    %v2195 = vrot.slane %v2194, 4
    %v2196 = vrot.slane %v48, 5
    %v2197 = vsel %vm2177, %v2195, %v2196
    %v2198 = vrot.slane %v49, 5
    %v2199 = vrot.slane %v2198, 4
    %v2200 = vrot.slane %v50, 5
    %v2201 = vsel %vm2177, %v2199, %v2200
    %v2202 = vrot.slane %v51, 5
    %v2203 = vrot.slane %v2202, 4
    %v2204 = vrot.slane %v52, 5
    %v2205 = vsel %vm2177, %v2203, %v2204
    %v2206 = vrot.slane %v53, 5
    %v2207 = vrot.slane %v2206, 4
    %v2208 = vrot.slane %v54, 5
    %v2209 = vsel %vm2177, %v2207, %v2208
    %v2210 = vrot.slane %v55, 5
    %v2211 = vrot.slane %v2210, 4
    %v2212 = vrot.slane %v56, 5
    %v2213 = vsel %vm2177, %v2211, %v2212
    %v2214 = vrot.slane %v57, 5
    %v2215 = vrot.slane %v2214, 4
    %v2216 = vrot.slane %v58, 5
    %v2217 = vsel %vm2177, %v2215, %v2216
    %v2218 = vrot.slane %v59, 5
    %v2219 = vrot.slane %v2218, 4
    %v2220 = vrot.slane %v60, 5
    %v2221 = vsel %vm2177, %v2219, %v2220
    %v2222 = vrot.slane %v61, 5
    %v2223 = vrot.slane %v2222, 4
    %v2224 = vrot.slane %v62, 5
    %v2225 = vsel %vm2177, %v2223, %v2224
    %v2226 = vrot.slane %v63, 5
    %v2227 = vrot.slane %v2226, 4
    %v2228 = vrot.slane %v64, 5
    %v2229 = vsel %vm2177, %v2227, %v2228
    %v2230 = vrot.slane %v65, 5
    %v2231 = vrot.slane %v2230, 4
    %v2232 = vrot.slane %v66, 5
    %v2233 = vsel %vm2177, %v2231, %v2232
    %v2234 = vrot.slane %v67, 5
    %v2235 = vrot.slane %v2234, 4
    %v2236 = vrot.slane %v68, 5
    %v2237 = vsel %vm2177, %v2235, %v2236
    %v2238 = vrot.slane %v69, 5
    %v2239 = vrot.slane %v2238, 4
    %v2240 = vrot.slane %v70, 5
    %v2241 = vsel %vm2177, %v2239, %v2240
    %v2242 = vrot.slane %v71, 5
    %v2243 = vrot.slane %v2242, 4
    %v2244 = vrot.slane %v72, 5
    %v2245 = vsel %vm2177, %v2243, %v2244
    %v2246 = vrot.slane %v73, 5
    %v2247 = vrot.slane %v2246, 4
    %v2248 = vrot.slane %v74, 5
    %v2249 = vsel %vm2177, %v2247, %v2248
    %v2250 = vrot.slane %v75, 5
    %v2251 = vrot.slane %v2250, 4
    %v2252 = vrot.slane %v76, 5
    %v2253 = vsel %vm2177, %v2251, %v2252
    %v2254 = vrot.slane %v77, 5
    %v2255 = vrot.slane %v2254, 4
    %v2256 = vrot.slane %v78, 5
    %v2257 = vsel %vm2177, %v2255, %v2256
    %v2258 = vrot.slane %v79, 5
    %v2259 = vrot.slane %v2258, 4
    %v2260 = vrot.slane %v80, 5
    %v2261 = vsel %vm2177, %v2259, %v2260
    %v2262 = vrot.slane %v81, 5
    %v2263 = vrot.slane %v2262, 4
    %v2264 = vrot.slane %v82, 5
    %v2265 = vsel %vm2177, %v2263, %v2264
    %v2266 = vrot.slane %v83, 5
    %v2267 = vrot.slane %v2266, 4
    %v2268 = vrot.slane %v84, 5
    %v2269 = vsel %vm2177, %v2267, %v2268
    %v2270 = vrot.slane %v85, 5
    %v2271 = vrot.slane %v2270, 4
    %v2272 = vrot.slane %v86, 5
    %v2273 = vsel %vm2177, %v2271, %v2272
    %v2274 = vrot.slane %v87, 5
    %v2275 = vrot.slane %v2274, 4
    %v2276 = vrot.slane %v88, 5
    %v2277 = vsel %vm2177, %v2275, %v2276
    %v2278 = vrot.slane %v89, 5
    %v2279 = vrot.slane %v2278, 4
    %v2280 = vrot.slane %v90, 5
    %v2281 = vsel %vm2177, %v2279, %v2280
    %v2282 = vrot.slane %v91, 5
    %v2283 = vrot.slane %v2282, 4
    %v2284 = vrot.slane %v92, 5
    %v2285 = vsel %vm2177, %v2283, %v2284
    %v2286 = vrot.slane %v93, 5
    %v2287 = vrot.slane %v2286, 4
    %v2288 = vrot.slane %v94, 5
    %v2289 = vsel %vm2177, %v2287, %v2288
    %v2290 = vrot.slane %v95, 5
    %v2291 = vrot.slane %v2290, 4
    %v2292 = vrot.slane %v96, 5
    %v2293 = vsel %vm2177, %v2291, %v2292
    %v2294 = vrot.slane %v97, 5
    %v2295 = vrot.slane %v2294, 4
    %v2296 = vrot.slane %v98, 5
    %v2297 = vsel %vm2177, %v2295, %v2296
    %v2298 = vrot.slane %v99, 5
    %v2299 = vrot.slane %v2298, 4
    %v2300 = vrot.slane %v100, 5
    %v2301 = vsel %vm2177, %v2299, %v2300
    %v2302 = vrot.slane %v101, 5
    %v2303 = vrot.slane %v2302, 4
    %v2304 = vrot.slane %v102, 5
    %v2305 = vsel %vm2177, %v2303, %v2304
    %v2306 = vrot.slane %v103, 5
    %v2307 = vrot.slane %v2306, 4
    %v2308 = vrot.slane %v104, 5
    %v2309 = vsel %vm2177, %v2307, %v2308
    %v2310 = vrot.slane %v105, 5
    %v2311 = vrot.slane %v2310, 4
    %v2312 = vrot.slane %v106, 5
    %v2313 = vsel %vm2177, %v2311, %v2312
    %v2314 = vrot.slane %v107, 5
    %v2315 = vrot.slane %v2314, 4
    %v2316 = vrot.slane %v108, 5
    %v2317 = vsel %vm2177, %v2315, %v2316
    %v2318 = vrot.slane %v109, 5
    %v2319 = vrot.slane %v2318, 4
    %v2320 = vrot.slane %v110, 5
    %v2321 = vsel %vm2177, %v2319, %v2320
    %v2322 = vrot.slane %v111, 5
    %v2323 = vrot.slane %v2322, 4
    %v2324 = vrot.slane %v112, 5
    %v2325 = vsel %vm2177, %v2323, %v2324
    %v2326 = vrot.slane %v113, 5
    %v2327 = vrot.slane %v2326, 4
    %v2328 = vrot.slane %v114, 5
    %v2329 = vsel %vm2177, %v2327, %v2328
    %v2330 = vrot.slane %v115, 5
    %v2331 = vrot.slane %v2330, 4
    %v2332 = vrot.slane %v116, 5
    %v2333 = vsel %vm2177, %v2331, %v2332
    %v2334 = vrot.slane %v117, 5
    %v2335 = vrot.slane %v2334, 4
    %v2336 = vrot.slane %v118, 5
    %v2337 = vsel %vm2177, %v2335, %v2336
    %v2338 = vrot.slane %v119, 5
    %v2339 = vrot.slane %v2338, 4
    %v2340 = vrot.slane %v120, 5
    %v2341 = vsel %vm2177, %v2339, %v2340
    %v2342 = vrot.slane %v121, 5
    %v2343 = vrot.slane %v2342, 4
    %v2344 = vrot.slane %v122, 5
    %v2345 = vsel %vm2177, %v2343, %v2344
    %v2346 = vrot.slane %v123, 5
    %v2347 = vrot.slane %v2346, 4
    %v2348 = vrot.slane %v124, 5
    %v2349 = vsel %vm2177, %v2347, %v2348
    %v2350 = vrot.slane %v125, 5
    %v2351 = vrot.slane %v2350, 4
    %v2352 = vrot.slane %v126, 5
    %v2353 = vsel %vm2177, %v2351, %v2352
    %v2354 = vrot.slane %v127, 5
    %v2355 = vrot.slane %v2354, 4
    %v2356 = vrot.slane %v128, 5
    %v2357 = vsel %vm2177, %v2355, %v2356
    %v2358 = vrot.slane %v129, 5
    %v2359 = vrot.slane %v2358, 4
    %v2360 = vrot.slane %v130, 5
    %v2361 = vsel %vm2177, %v2359, %v2360
    %v2362 = vrot.slane %v131, 5
    %v2363 = vrot.slane %v2362, 4
    %v2364 = vrot.slane %v132, 5
    %v2365 = vsel %vm2177, %v2363, %v2364
    %v2366 = vrot.slane %v133, 5
    %v2367 = vrot.slane %v2366, 4
    %v2368 = vrot.slane %v134, 5
    %v2369 = vsel %vm2177, %v2367, %v2368
    %v2370 = vrot.slane %v135, 5
    %v2371 = vrot.slane %v2370, 4
    %v2372 = vrot.slane %v136, 5
    %v2373 = vsel %vm2177, %v2371, %v2372
    %v2374 = vrot.slane %v137, 5
    %v2375 = vrot.slane %v2374, 4
    %v2376 = vrot.slane %v138, 5
    %v2377 = vsel %vm2177, %v2375, %v2376
    %v2378 = vrot.slane %v139, 5
    %v2379 = vrot.slane %v2378, 4
    %v2380 = vrot.slane %v140, 5
    %v2381 = vsel %vm2177, %v2379, %v2380
    %v2382 = vrot.slane %v141, 5
    %v2383 = vrot.slane %v2382, 4
    %v2384 = vrot.slane %v142, 5
    %v2385 = vsel %vm2177, %v2383, %v2384
    %v2386 = vrot.slane %v143, 5
    %v2387 = vrot.slane %v2386, 4
    %v2388 = vrot.slane %v144, 5
    %v2389 = vsel %vm2177, %v2387, %v2388
    %v2390 = vrot.slane %v145, 5
    %v2391 = vrot.slane %v2390, 4
    %v2392 = vrot.slane %v146, 5
    %v2393 = vsel %vm2177, %v2391, %v2392
    %v2394 = vrot.slane %v147, 5
    %v2395 = vrot.slane %v2394, 4
    %v2396 = vrot.slane %v148, 5
    %v2397 = vsel %vm2177, %v2395, %v2396
    %v2398 = vrot.slane %v149, 5
    %v2399 = vrot.slane %v2398, 4
    %v2400 = vrot.slane %v150, 5
    %v2401 = vsel %vm2177, %v2399, %v2400
    %v2402 = vrot.slane %v151, 5
    %v2403 = vrot.slane %v2402, 4
    %v2404 = vrot.slane %v152, 5
    %v2405 = vsel %vm2177, %v2403, %v2404
    %v2406 = vrot.slane %v153, 5
    %v2407 = vrot.slane %v2406, 4
    %v2408 = vrot.slane %v154, 5
    %v2409 = vsel %vm2177, %v2407, %v2408
    %v2410 = vrot.slane %v155, 5
    %v2411 = vrot.slane %v2410, 4
    %v2412 = vrot.slane %v156, 5
    %v2413 = vsel %vm2177, %v2411, %v2412
    %v2414 = vrot.slane %v157, 5
    %v2415 = vrot.slane %v2414, 4
    %v2416 = vrot.slane %v158, 5
    %v2417 = vsel %vm2177, %v2415, %v2416
    %v2418 = vrot.slane %v159, 5
    %v2419 = vrot.slane %v2418, 4
    %v2420 = vrot.slane %v160, 5
    %v2421 = vsel %vm2177, %v2419, %v2420
    %v2422 = vrot.slane %v161, 5
    %v2423 = vrot.slane %v2422, 4
    %v2424 = vrot.slane %v162, 5
    %v2425 = vsel %vm2177, %v2423, %v2424
    %v2426 = vrot.slane %v163, 5
    %v2427 = vrot.slane %v2426, 4
    %v2428 = vrot.slane %v164, 5
    %v2429 = vsel %vm2177, %v2427, %v2428
    %v2430 = vrot.slane %v165, 5
    %v2431 = vrot.slane %v2430, 4
    %v2432 = vrot.slane %v166, 5
    %v2433 = vsel %vm2177, %v2431, %v2432
    %v2434 = vunpack.c.l.b16 %v2181
    %v2435 = vunpack.c.l.b16 %v2185
    %v2436 = vunpack.c.l.b16 %v2189
    %v2437 = vunpack.c.l.b16 %v2193
    %v2438 = vunpack.c.l.b16 %v2197
    %v2439 = vunpack.c.l.b16 %v2201
    %v2440 = vunpack.c.l.b16 %v2205
    %v2441 = vunpack.c.l.b16 %v2209
    %v2442 = vunpack.c.l.b16 %v2213
    %v2443 = vunpack.c.l.b16 %v2217
    %v2444 = vunpack.c.l.b16 %v2221
    %v2445 = vunpack.c.l.b16 %v2225
    %v2446 = vunpack.c.l.b16 %v2229
    %v2447 = vunpack.c.l.b16 %v2233
    %v2448 = vunpack.c.l.b16 %v2237
    %v2449 = vunpack.c.l.b16 %v2241
    %v2450 = vunpack.c.l.b16 %v2245
    %v2451 = vunpack.c.l.b16 %v2249
    %v2452 = vunpack.c.l.b16 %v2253
    %v2453 = vunpack.c.l.b16 %v2257
    %v2454 = vunpack.c.l.b16 %v2261
    %v2455 = vunpack.c.l.b16 %v2265
    %v2456 = vunpack.c.l.b16 %v2269
    %v2457 = vunpack.c.l.b16 %v2273
    %v2458 = vunpack.c.l.b16 %v2277
    %v2459 = vunpack.c.l.b16 %v2281
    %v2460 = vunpack.c.l.b16 %v2285
    %v2461 = vunpack.c.l.b16 %v2289
    %v2462 = vunpack.c.l.b16 %v2293
    %v2463 = vunpack.c.l.b16 %v2297
    %v2464 = vunpack.c.l.b16 %v2301
    %v2465 = vunpack.c.l.b16 %v2305
    %v2466 = vunpack.c.l.b16 %v2309
    %v2467 = vunpack.c.l.b16 %v2313
    %v2468 = vunpack.c.l.b16 %v2317
    %v2469 = vunpack.c.l.b16 %v2321
    %v2470 = vunpack.c.l.b16 %v2325
    %v2471 = vunpack.c.l.b16 %v2329
    %v2472 = vunpack.c.l.b16 %v2333
    %v2473 = vunpack.c.l.b16 %v2337
    %v2474 = vunpack.c.l.b16 %v2341
    %v2475 = vunpack.c.l.b16 %v2345
    %v2476 = vunpack.c.l.b16 %v2349
    %v2477 = vunpack.c.l.b16 %v2353
    %v2478 = vunpack.c.l.b16 %v2357
    %v2479 = vunpack.c.l.b16 %v2361
    %v2480 = vunpack.c.l.b16 %v2365
    %v2481 = vunpack.c.l.b16 %v2369
    %v2482 = vunpack.c.l.b16 %v2373
    %v2483 = vunpack.c.l.b16 %v2377
    %v2484 = vunpack.c.l.b16 %v2381
    %v2485 = vunpack.c.l.b16 %v2385
    %v2486 = vunpack.c.l.b16 %v2389
    %v2487 = vunpack.c.l.b16 %v2393
    %v2488 = vunpack.c.l.b16 %v2397
    %v2489 = vunpack.c.l.b16 %v2401
    %v2490 = vunpack.c.l.b16 %v2405
    %v2491 = vunpack.c.l.b16 %v2409
    %v2492 = vunpack.c.l.b16 %v2413
    %v2493 = vunpack.c.l.b16 %v2417
    %v2494 = vunpack.c.l.b16 %v2421
    %v2495 = vunpack.c.l.b16 %v2425
    %v2496 = vunpack.c.l.b16 %v2429
    %v2497 = vunpack.c.l.b16 %v2433
    %v2498 = vpack.c.b16 %v2435, %v2434
    %v2499 = vpack.c.b16 %v2437, %v2436
    %v2500 = vpack.c.b16 %v2439, %v2438
    %v2501 = vpack.c.b16 %v2441, %v2440
    %v2502 = vpack.c.b16 %v2443, %v2442
    %v2503 = vpack.c.b16 %v2445, %v2444
    %v2504 = vpack.c.b16 %v2447, %v2446
    %v2505 = vpack.c.b16 %v2449, %v2448
    %v2506 = vpack.c.b16 %v2451, %v2450
    %v2507 = vpack.c.b16 %v2453, %v2452
    %v2508 = vpack.c.b16 %v2455, %v2454
    %v2509 = vpack.c.b16 %v2457, %v2456
    %v2510 = vpack.c.b16 %v2459, %v2458
    %v2511 = vpack.c.b16 %v2461, %v2460
    %v2512 = vpack.c.b16 %v2463, %v2462
    %v2513 = vpack.c.b16 %v2465, %v2464
    %v2514 = vpack.c.b16 %v2467, %v2466
    %v2515 = vpack.c.b16 %v2469, %v2468
    %v2516 = vpack.c.b16 %v2471, %v2470
    %v2517 = vpack.c.b16 %v2473, %v2472
    %v2518 = vpack.c.b16 %v2475, %v2474
    %v2519 = vpack.c.b16 %v2477, %v2476
    %v2520 = vpack.c.b16 %v2479, %v2478
    %v2521 = vpack.c.b16 %v2481, %v2480
    %v2522 = vpack.c.b16 %v2483, %v2482
    %v2523 = vpack.c.b16 %v2485, %v2484
    %v2524 = vpack.c.b16 %v2487, %v2486
    %v2525 = vpack.c.b16 %v2489, %v2488
    %v2526 = vpack.c.b16 %v2491, %v2490
    %v2527 = vpack.c.b16 %v2493, %v2492
    %v2528 = vpack.c.b16 %v2495, %v2494
    %v2529 = vpack.c.b16 %v2497, %v2496
    %v2532 = vunpack.c.l.b16 %v171
    %v2533 = vunpack.c.l.b16 %v172
    %v2534 = vpack.c.b16 %v2533, %v2532
    %v2537 = vsel %vm1174, %v2498, 0
    %v2540 = vsel %vm1174, %v2499, 0
    %v2543 = vsel %vm1174, %v2500, 0
    %v2546 = vsel %vm1174, %v2501, 0
    %v2549 = vsel %vm1174, %v2502, 0
    %v2552 = vsel %vm1174, %v2503, 0
    %v2555 = vsel %vm1174, %v2504, 0
    %v2558 = vsel %vm1174, %v2505, 0
    %v2561 = vsel %vm1174, %v2506, 0
    %v2564 = vsel %vm1174, %v2507, 0
    %v2567 = vsel %vm1174, %v2508, 0
    %v2570 = vsel %vm1174, %v2509, 0
    %v2573 = vsel %vm1174, %v2510, 0
    %v2576 = vsel %vm1174, %v2511, 0
    %v2579 = vsel %vm1174, %v2512, 0
    %v2582 = vsel %vm1174, %v2513, 0
    %v2585 = vsel %vm1174, %v2514, 0
    %v2588 = vsel %vm1174, %v2515, 0
    %v2591 = vsel %vm1174, %v2516, 0
    %v2594 = vsel %vm1174, %v2517, 0
    %v2597 = vsel %vm1174, %v2518, 0
    %v2600 = vsel %vm1174, %v2519, 0
    %v2603 = vsel %vm1174, %v2520, 0
    %v2606 = vsel %vm1174, %v2521, 0
    %v2609 = vsel %vm1174, %v2522, 0
    %v2612 = vsel %vm1174, %v2523, 0
    %v2615 = vsel %vm1174, %v2524, 0
    %v2618 = vsel %vm1174, %v2525, 0
    %v2621 = vsel %vm1174, %v2526, 0
    %v2624 = vsel %vm1174, %v2527, 0
    %v2627 = vsel %vm1174, %v2528, 0
    %v2630 = vsel %vm1174, %v2529, 0
    %2632 = vmatprep.subr.bf16.mxu0 0
    %2633 = vmatpush1.bf16.msra.mxu0 %v2534
    %2634 = vmatprep.subr.bf16.mxu0 0
    %2635 = vmatpush1.bf16.msra.mxu0 0
    %2636 = vmatprep.subr.bf16.mxu0 0
    %2637 = vmatpush1.bf16.msra.mxu0 0
    %2638 = vmatprep.subr.bf16.mxu0 0
    %2639 = vmatpush1.bf16.msra.mxu0 0
    %2640 = vmatprep.subr.bf16.mxu0 0
    %2641 = vmatpush1.bf16.msra.mxu0 0
    %2642 = vmatprep.subr.bf16.mxu0 0
    %2643 = vmatpush1.bf16.msra.mxu0 0
    %2644 = vmatprep.subr.bf16.mxu0 0
    %2645 = vmatpush1.bf16.msra.mxu0 0
    %2646 = vmatprep.subr.bf16.mxu0 0
    %2647 = vmatpush1.bf16.msra.mxu0 0
    %2648 = vmatprep.subr.bf16.mxu0 0
    %2649 = vmatpush1.bf16.msra.mxu0 0
    %2650 = vmatprep.subr.bf16.mxu0 0
    %2651 = vmatpush1.bf16.msra.mxu0 0
    %2652 = vmatprep.subr.bf16.mxu0 0
    %2653 = vmatpush1.bf16.msra.mxu0 0
    %2654 = vmatprep.subr.bf16.mxu0 0
    %2655 = vmatpush1.bf16.msra.mxu0 0
    %2656 = vmatprep.subr.bf16.mxu0 0
    %2657 = vmatpush1.bf16.msra.mxu0 0
    %2658 = vmatprep.subr.bf16.mxu0 0
    %2659 = vmatpush1.bf16.msra.mxu0 0
    %2660 = vmatprep.subr.bf16.mxu0 0
    %2661 = vmatpush1.bf16.msra.mxu0 0
    %2662 = vmatprep.subr.bf16.mxu0 0
    %2663 = vmatpush1.bf16.msra.mxu0 0
    %2664 = vmatprep.mubr.bf16.mxu0 0
    %2665 = vmatmul.mubr.bf16.gmra.mrb[0].mxu0 %v2537
    %v2666 = vpop.f32.mrb[0].mxu0
    %v2667 = vadd.f32 0.0, %v2666
    %v2668 = vpop.f32.mrb[0].mxu0
    %v2669 = vpop.f32.mrb[0].mxu0
    %v2670 = vadd.f32 0.0, %v2669
    %v2671 = vpop.f32.mrb[0].mxu0
    %2672 = vmatprep.mubr.bf16.mxu0 0
    %2673 = vmatmul.mubr.bf16.gmra.mrb[0].mxu0 %v2540
    %v2674 = vpop.f32.mrb[0].mxu0
    %v2675 = vadd.f32 0.0, %v2674
    %v2676 = vpop.f32.mrb[0].mxu0
    %v2677 = vpop.f32.mrb[0].mxu0
    %v2678 = vadd.f32 0.0, %v2677
    %v2679 = vpop.f32.mrb[0].mxu0
    %2680 = vmatprep.mubr.bf16.mxu0 0
    %2681 = vmatmul.mubr.bf16.gmra.mrb[0].mxu0 %v2543
    %v2682 = vpop.f32.mrb[0].mxu0
    %v2683 = vadd.f32 0.0, %v2682
    %v2684 = vpop.f32.mrb[0].mxu0
    %v2685 = vpop.f32.mrb[0].mxu0
    %v2686 = vadd.f32 0.0, %v2685
    %v2687 = vpop.f32.mrb[0].mxu0
    %2688 = vmatprep.mubr.bf16.mxu0 0
    %2689 = vmatmul.mubr.bf16.gmra.mrb[0].mxu0 %v2546
    %v2690 = vpop.f32.mrb[0].mxu0
    %v2691 = vadd.f32 0.0, %v2690
    %v2692 = vpop.f32.mrb[0].mxu0
    %v2693 = vpop.f32.mrb[0].mxu0
    %v2694 = vadd.f32 0.0, %v2693
    %v2695 = vpop.f32.mrb[0].mxu0
    %2696 = vmatprep.mubr.bf16.mxu0 0
    %2697 = vmatmul.mubr.bf16.gmra.mrb[0].mxu0 %v2549
    %v2698 = vpop.f32.mrb[0].mxu0
    %v2699 = vadd.f32 0.0, %v2698
    %v2700 = vpop.f32.mrb[0].mxu0
    %v2701 = vpop.f32.mrb[0].mxu0
    %v2702 = vadd.f32 0.0, %v2701
    %v2703 = vpop.f32.mrb[0].mxu0
    %2704 = vmatprep.mubr.bf16.mxu0 0
    %2705 = vmatmul.mubr.bf16.gmra.mrb[0].mxu0 %v2552
    %v2706 = vpop.f32.mrb[0].mxu0
    %v2707 = vadd.f32 0.0, %v2706
    %v2708 = vpop.f32.mrb[0].mxu0
    %v2709 = vpop.f32.mrb[0].mxu0
    %v2710 = vadd.f32 0.0, %v2709
    %v2711 = vpop.f32.mrb[0].mxu0
    %2712 = vmatprep.mubr.bf16.mxu0 0
    %2713 = vmatmul.mubr.bf16.gmra.mrb[0].mxu0 %v2555
    %v2714 = vpop.f32.mrb[0].mxu0
    %v2715 = vadd.f32 0.0, %v2714
    %v2716 = vpop.f32.mrb[0].mxu0
    %v2717 = vpop.f32.mrb[0].mxu0
    %v2718 = vadd.f32 0.0, %v2717
    %v2719 = vpop.f32.mrb[0].mxu0
    %2720 = vmatprep.mubr.bf16.mxu0 0
    %2721 = vmatmul.mubr.bf16.gmra.mrb[0].mxu0 %v2558
    %v2722 = vpop.f32.mrb[0].mxu0
    %v2723 = vadd.f32 0.0, %v2722
    %v2724 = vpop.f32.mrb[0].mxu0
    %v2725 = vpop.f32.mrb[0].mxu0
    %v2726 = vadd.f32 0.0, %v2725
    %v2727 = vpop.f32.mrb[0].mxu0
    %2728 = vmatprep.mubr.bf16.mxu0 0
    %2729 = vmatmul.mubr.bf16.gmra.mrb[0].mxu0 %v2561
    %v2730 = vpop.f32.mrb[0].mxu0
    %v2731 = vadd.f32 0.0, %v2730
    %v2732 = vpop.f32.mrb[0].mxu0
    %v2733 = vpop.f32.mrb[0].mxu0
    %v2734 = vadd.f32 0.0, %v2733
    %v2735 = vpop.f32.mrb[0].mxu0
    %2736 = vmatprep.mubr.bf16.mxu0 0
    %2737 = vmatmul.mubr.bf16.gmra.mrb[0].mxu0 %v2564
    %v2738 = vpop.f32.mrb[0].mxu0
    %v2739 = vadd.f32 0.0, %v2738
    %v2740 = vpop.f32.mrb[0].mxu0
    %v2741 = vpop.f32.mrb[0].mxu0
    %v2742 = vadd.f32 0.0, %v2741
    %v2743 = vpop.f32.mrb[0].mxu0
    %2744 = vmatprep.mubr.bf16.mxu0 0
    %2745 = vmatmul.mubr.bf16.gmra.mrb[0].mxu0 %v2567
    %v2746 = vpop.f32.mrb[0].mxu0
    %v2747 = vadd.f32 0.0, %v2746
    %v2748 = vpop.f32.mrb[0].mxu0
    %v2749 = vpop.f32.mrb[0].mxu0
    %v2750 = vadd.f32 0.0, %v2749
    %v2751 = vpop.f32.mrb[0].mxu0
    %2752 = vmatprep.mubr.bf16.mxu0 0
    %2753 = vmatmul.mubr.bf16.gmra.mrb[0].mxu0 %v2570
    %v2754 = vpop.f32.mrb[0].mxu0
    %v2755 = vadd.f32 0.0, %v2754
    %v2756 = vpop.f32.mrb[0].mxu0
    %v2757 = vpop.f32.mrb[0].mxu0
    %v2758 = vadd.f32 0.0, %v2757
    %v2759 = vpop.f32.mrb[0].mxu0
    %2760 = vmatprep.mubr.bf16.mxu0 0
    %2761 = vmatmul.mubr.bf16.gmra.mrb[0].mxu0 %v2573
    %v2762 = vpop.f32.mrb[0].mxu0
    %v2763 = vadd.f32 0.0, %v2762
    %v2764 = vpop.f32.mrb[0].mxu0
    %v2765 = vpop.f32.mrb[0].mxu0
    %v2766 = vadd.f32 0.0, %v2765
    %v2767 = vpop.f32.mrb[0].mxu0
    %2768 = vmatprep.mubr.bf16.mxu0 0
    %2769 = vmatmul.mubr.bf16.gmra.mrb[0].mxu0 %v2576
    %v2770 = vpop.f32.mrb[0].mxu0
    %v2771 = vadd.f32 0.0, %v2770
    %v2772 = vpop.f32.mrb[0].mxu0
    %v2773 = vpop.f32.mrb[0].mxu0
    %v2774 = vadd.f32 0.0, %v2773
    %v2775 = vpop.f32.mrb[0].mxu0
    %2776 = vmatprep.mubr.bf16.mxu0 0
    %2777 = vmatmul.mubr.bf16.gmra.mrb[0].mxu0 %v2579
    %v2778 = vpop.f32.mrb[0].mxu0
    %v2779 = vadd.f32 0.0, %v2778
    %v2780 = vpop.f32.mrb[0].mxu0
    %v2781 = vpop.f32.mrb[0].mxu0
    %v2782 = vadd.f32 0.0, %v2781
    %v2783 = vpop.f32.mrb[0].mxu0
    %2784 = vmatprep.mubr.bf16.mxu0 0
    %2785 = vmatmul.mubr.bf16.gmra.mrb[0].mxu0 %v2582
    %v2786 = vpop.f32.mrb[0].mxu0
    %v2787 = vadd.f32 0.0, %v2786
    %v2788 = vpop.f32.mrb[0].mxu0
    %v2789 = vpop.f32.mrb[0].mxu0
    %v2790 = vadd.f32 0.0, %v2789
    %v2791 = vpop.f32.mrb[0].mxu0
    %2792 = vmatprep.mubr.bf16.mxu0 0
    %2793 = vmatmul.mubr.bf16.gmra.mrb[0].mxu0 %v2585
    %v2794 = vpop.f32.mrb[0].mxu0
    %v2795 = vadd.f32 0.0, %v2794
    %v2796 = vpop.f32.mrb[0].mxu0
    %v2797 = vpop.f32.mrb[0].mxu0
    %v2798 = vadd.f32 0.0, %v2797
    %v2799 = vpop.f32.mrb[0].mxu0
    %2800 = vmatprep.mubr.bf16.mxu0 0
    %2801 = vmatmul.mubr.bf16.gmra.mrb[0].mxu0 %v2588
    %v2802 = vpop.f32.mrb[0].mxu0
    %v2803 = vadd.f32 0.0, %v2802
    %v2804 = vpop.f32.mrb[0].mxu0
    %v2805 = vpop.f32.mrb[0].mxu0
    %v2806 = vadd.f32 0.0, %v2805
    %v2807 = vpop.f32.mrb[0].mxu0
    %2808 = vmatprep.mubr.bf16.mxu0 0
    %2809 = vmatmul.mubr.bf16.gmra.mrb[0].mxu0 %v2591
    %v2810 = vpop.f32.mrb[0].mxu0
    %v2811 = vadd.f32 0.0, %v2810
    %v2812 = vpop.f32.mrb[0].mxu0
    %v2813 = vpop.f32.mrb[0].mxu0
    %v2814 = vadd.f32 0.0, %v2813
    %v2815 = vpop.f32.mrb[0].mxu0
    %2816 = vmatprep.mubr.bf16.mxu0 0
    %2817 = vmatmul.mubr.bf16.gmra.mrb[0].mxu0 %v2594
    %v2818 = vpop.f32.mrb[0].mxu0
    %v2819 = vadd.f32 0.0, %v2818
    %v2820 = vpop.f32.mrb[0].mxu0
    %v2821 = vpop.f32.mrb[0].mxu0
    %v2822 = vadd.f32 0.0, %v2821
    %v2823 = vpop.f32.mrb[0].mxu0
    %2824 = vmatprep.mubr.bf16.mxu0 0
    %2825 = vmatmul.mubr.bf16.gmra.mrb[0].mxu0 %v2597
    %v2826 = vpop.f32.mrb[0].mxu0
    %v2827 = vadd.f32 0.0, %v2826
    %v2828 = vpop.f32.mrb[0].mxu0
    %v2829 = vpop.f32.mrb[0].mxu0
    %v2830 = vadd.f32 0.0, %v2829
    %v2831 = vpop.f32.mrb[0].mxu0
    %2832 = vmatprep.mubr.bf16.mxu0 0
    %2833 = vmatmul.mubr.bf16.gmra.mrb[0].mxu0 %v2600
    %v2834 = vpop.f32.mrb[0].mxu0
    %v2835 = vadd.f32 0.0, %v2834
    %v2836 = vpop.f32.mrb[0].mxu0
    %v2837 = vpop.f32.mrb[0].mxu0
    %v2838 = vadd.f32 0.0, %v2837
    %v2839 = vpop.f32.mrb[0].mxu0
    %2840 = vmatprep.mubr.bf16.mxu0 0
    %2841 = vmatmul.mubr.bf16.gmra.mrb[0].mxu0 %v2603
    %v2842 = vpop.f32.mrb[0].mxu0
    %v2843 = vadd.f32 0.0, %v2842
    %v2844 = vpop.f32.mrb[0].mxu0
    %v2845 = vpop.f32.mrb[0].mxu0
    %v2846 = vadd.f32 0.0, %v2845
    %v2847 = vpop.f32.mrb[0].mxu0
    %2848 = vmatprep.mubr.bf16.mxu0 0
    %2849 = vmatmul.mubr.bf16.gmra.mrb[0].mxu0 %v2606
    %v2850 = vpop.f32.mrb[0].mxu0
    %v2851 = vadd.f32 0.0, %v2850
    %v2852 = vpop.f32.mrb[0].mxu0
    %v2853 = vpop.f32.mrb[0].mxu0
    %v2854 = vadd.f32 0.0, %v2853
    %v2855 = vpop.f32.mrb[0].mxu0
    %2856 = vmatprep.mubr.bf16.mxu0 0
    %2857 = vmatmul.mubr.bf16.gmra.mrb[0].mxu0 %v2609
    %v2858 = vpop.f32.mrb[0].mxu0
    %v2859 = vadd.f32 0.0, %v2858
    %v2860 = vpop.f32.mrb[0].mxu0
    %v2861 = vpop.f32.mrb[0].mxu0
    %v2862 = vadd.f32 0.0, %v2861
    %v2863 = vpop.f32.mrb[0].mxu0
    %2864 = vmatprep.mubr.bf16.mxu0 0
    %2865 = vmatmul.mubr.bf16.gmra.mrb[0].mxu0 %v2612
    %v2866 = vpop.f32.mrb[0].mxu0
    %v2867 = vadd.f32 0.0, %v2866
    %v2868 = vpop.f32.mrb[0].mxu0
    %v2869 = vpop.f32.mrb[0].mxu0
    %v2870 = vadd.f32 0.0, %v2869
    %v2871 = vpop.f32.mrb[0].mxu0
    %2872 = vmatprep.mubr.bf16.mxu0 0
    %2873 = vmatmul.mubr.bf16.gmra.mrb[0].mxu0 %v2615
    %v2874 = vpop.f32.mrb[0].mxu0
    %v2875 = vadd.f32 0.0, %v2874
    %v2876 = vpop.f32.mrb[0].mxu0
    %v2877 = vpop.f32.mrb[0].mxu0
    %v2878 = vadd.f32 0.0, %v2877
    %v2879 = vpop.f32.mrb[0].mxu0
    %2880 = vmatprep.mubr.bf16.mxu0 0
    %2881 = vmatmul.mubr.bf16.gmra.mrb[0].mxu0 %v2618
    %v2882 = vpop.f32.mrb[0].mxu0
    %v2883 = vadd.f32 0.0, %v2882
    %v2884 = vpop.f32.mrb[0].mxu0
    %v2885 = vpop.f32.mrb[0].mxu0
    %v2886 = vadd.f32 0.0, %v2885
    %v2887 = vpop.f32.mrb[0].mxu0
    %2888 = vmatprep.mubr.bf16.mxu0 0
    %2889 = vmatmul.mubr.bf16.gmra.mrb[0].mxu0 %v2621
    %v2890 = vpop.f32.mrb[0].mxu0
    %v2891 = vadd.f32 0.0, %v2890
    %v2892 = vpop.f32.mrb[0].mxu0
    %v2893 = vpop.f32.mrb[0].mxu0
    %v2894 = vadd.f32 0.0, %v2893
    %v2895 = vpop.f32.mrb[0].mxu0
    %2896 = vmatprep.mubr.bf16.mxu0 0
    %2897 = vmatmul.mubr.bf16.gmra.mrb[0].mxu0 %v2624
    %v2898 = vpop.f32.mrb[0].mxu0
    %v2899 = vadd.f32 0.0, %v2898
    %v2900 = vpop.f32.mrb[0].mxu0
    %v2901 = vpop.f32.mrb[0].mxu0
    %v2902 = vadd.f32 0.0, %v2901
    %v2903 = vpop.f32.mrb[0].mxu0
    %2904 = vmatprep.mubr.bf16.mxu0 0
    %2905 = vmatmul.mubr.bf16.gmra.mrb[0].mxu0 %v2627
    %v2906 = vpop.f32.mrb[0].mxu0
    %v2907 = vadd.f32 0.0, %v2906
    %v2908 = vpop.f32.mrb[0].mxu0
    %v2909 = vpop.f32.mrb[0].mxu0
    %v2910 = vadd.f32 0.0, %v2909
    %v2911 = vpop.f32.mrb[0].mxu0
    %2912 = vmatprep.mubr.bf16.mxu0 0
    %2913 = vmatmul.mubr.bf16.gmra.mrb[0].mxu0 %v2630
    %v2914 = vpop.f32.mrb[0].mxu0
    %v2915 = vadd.f32 0.0, %v2914
    %v2916 = vpop.f32.mrb[0].mxu0
    %v2917 = vpop.f32.mrb[0].mxu0
    %v2918 = vadd.f32 0.0, %v2917
    %v2919 = vpop.f32.mrb[0].mxu0
    %2920 = vdwg.mxu0
    %v2921 = vadd.f32 %v1857, %v2667
    %v2922 = vadd.f32 %v1860, %v2670
    %v2923 = vadd.f32 %v1865, %v2675
    %v2924 = vadd.f32 %v1868, %v2678
    %v2925 = vadd.f32 %v1873, %v2683
    %v2926 = vadd.f32 %v1876, %v2686
    %v2927 = vadd.f32 %v1881, %v2691
    %v2928 = vadd.f32 %v1884, %v2694
    %v2929 = vadd.f32 %v1889, %v2699
    %v2930 = vadd.f32 %v1892, %v2702
    %v2931 = vadd.f32 %v1897, %v2707
    %v2932 = vadd.f32 %v1900, %v2710
    %v2933 = vadd.f32 %v1905, %v2715
    %v2934 = vadd.f32 %v1908, %v2718
    %v2935 = vadd.f32 %v1913, %v2723
    %v2936 = vadd.f32 %v1916, %v2726
    %v2937 = vadd.f32 %v1921, %v2731
    %v2938 = vadd.f32 %v1924, %v2734
    %v2939 = vadd.f32 %v1929, %v2739
    %v2940 = vadd.f32 %v1932, %v2742
    %v2941 = vadd.f32 %v1937, %v2747
    %v2942 = vadd.f32 %v1940, %v2750
    %v2943 = vadd.f32 %v1945, %v2755
    %v2944 = vadd.f32 %v1948, %v2758
    %v2945 = vadd.f32 %v1953, %v2763
    %v2946 = vadd.f32 %v1956, %v2766
    %v2947 = vadd.f32 %v1961, %v2771
    %v2948 = vadd.f32 %v1964, %v2774
    %v2949 = vadd.f32 %v1969, %v2779
    %v2950 = vadd.f32 %v1972, %v2782
    %v2951 = vadd.f32 %v1977, %v2787
    %v2952 = vadd.f32 %v1980, %v2790
    %v2953 = vadd.f32 %v1985, %v2795
    %v2954 = vadd.f32 %v1988, %v2798
    %v2955 = vadd.f32 %v1993, %v2803
    %v2956 = vadd.f32 %v1996, %v2806
    %v2957 = vadd.f32 %v2001, %v2811
    %v2958 = vadd.f32 %v2004, %v2814
    %v2959 = vadd.f32 %v2009, %v2819
    %v2960 = vadd.f32 %v2012, %v2822
    %v2961 = vadd.f32 %v2017, %v2827
    %v2962 = vadd.f32 %v2020, %v2830
    %v2963 = vadd.f32 %v2025, %v2835
    %v2964 = vadd.f32 %v2028, %v2838
    %v2965 = vadd.f32 %v2033, %v2843
    %v2966 = vadd.f32 %v2036, %v2846
    %v2967 = vadd.f32 %v2041, %v2851
    %v2968 = vadd.f32 %v2044, %v2854
    %v2969 = vadd.f32 %v2049, %v2859
    %v2970 = vadd.f32 %v2052, %v2862
    %v2971 = vadd.f32 %v2057, %v2867
    %v2972 = vadd.f32 %v2060, %v2870
    %v2973 = vadd.f32 %v2065, %v2875
    %v2974 = vadd.f32 %v2068, %v2878
    %v2975 = vadd.f32 %v2073, %v2883
    %v2976 = vadd.f32 %v2076, %v2886
    %v2977 = vadd.f32 %v2081, %v2891
    %v2978 = vadd.f32 %v2084, %v2894
    %v2979 = vadd.f32 %v2089, %v2899
    %v2980 = vadd.f32 %v2092, %v2902
    %v2981 = vadd.f32 %v2097, %v2907
    %v2982 = vadd.f32 %v2100, %v2910
    %v2983 = vadd.f32 %v2105, %v2915
    %v2984 = vadd.f32 %v2108, %v2918
    %v2985 = vld [vmem:[%s3] sm:$0x1]
    %v2987 = vlaneseq
    %v2988 = vshrl.u32 %v2987, 7
    %v2989 = vsub.s32 0, %v2988
    %v2990 = vrot.slane %v2985, %v2989
    %v2992 = vadd.f32 %v2921, %v2990
    %v2993 = vadd.f32 %v2922, %v2990
    %v2994 = vadd.f32 %v2923, %v2990
    %v2995 = vadd.f32 %v2924, %v2990
    %v2996 = vadd.f32 %v2925, %v2990
    %v2997 = vadd.f32 %v2926, %v2990
    %v2998 = vadd.f32 %v2927, %v2990
    %v2999 = vadd.f32 %v2928, %v2990
    %v3000 = vadd.f32 %v2929, %v2990
    %v3001 = vadd.f32 %v2930, %v2990
    %v3002 = vadd.f32 %v2931, %v2990
    %v3003 = vadd.f32 %v2932, %v2990
    %v3004 = vadd.f32 %v2933, %v2990
    %v3005 = vadd.f32 %v2934, %v2990
    %v3006 = vadd.f32 %v2935, %v2990
    %v3007 = vadd.f32 %v2936, %v2990
    %v3008 = vadd.f32 %v2937, %v2990
    %v3009 = vadd.f32 %v2938, %v2990
    %v3010 = vadd.f32 %v2939, %v2990
    %v3011 = vadd.f32 %v2940, %v2990
    %v3012 = vadd.f32 %v2941, %v2990
    %v3013 = vadd.f32 %v2942, %v2990
    %v3014 = vadd.f32 %v2943, %v2990
    %v3015 = vadd.f32 %v2944, %v2990
    %v3016 = vadd.f32 %v2945, %v2990
    %v3017 = vadd.f32 %v2946, %v2990
    %v3018 = vadd.f32 %v2947, %v2990
    %v3019 = vadd.f32 %v2948, %v2990
    %v3020 = vadd.f32 %v2949, %v2990
    %v3021 = vadd.f32 %v2950, %v2990
    %v3022 = vadd.f32 %v2951, %v2990
    %v3023 = vadd.f32 %v2952, %v2990
    %v3024 = vadd.f32 %v2953, %v2990
    %v3025 = vadd.f32 %v2954, %v2990
    %v3026 = vadd.f32 %v2955, %v2990
    %v3027 = vadd.f32 %v2956, %v2990
    %v3028 = vadd.f32 %v2957, %v2990
    %v3029 = vadd.f32 %v2958, %v2990
    %v3030 = vadd.f32 %v2959, %v2990
    %v3031 = vadd.f32 %v2960, %v2990
    %v3032 = vadd.f32 %v2961, %v2990
    %v3033 = vadd.f32 %v2962, %v2990
    %v3034 = vadd.f32 %v2963, %v2990
    %v3035 = vadd.f32 %v2964, %v2990
    %v3036 = vadd.f32 %v2965, %v2990
    %v3037 = vadd.f32 %v2966, %v2990
    %v3038 = vadd.f32 %v2967, %v2990
    %v3039 = vadd.f32 %v2968, %v2990
    %v3040 = vadd.f32 %v2969, %v2990
    %v3041 = vadd.f32 %v2970, %v2990
    %v3042 = vadd.f32 %v2971, %v2990
    %v3043 = vadd.f32 %v2972, %v2990
    %v3044 = vadd.f32 %v2973, %v2990
    %v3045 = vadd.f32 %v2974, %v2990
    %v3046 = vadd.f32 %v2975, %v2990
    %v3047 = vadd.f32 %v2976, %v2990
    %v3048 = vadd.f32 %v2977, %v2990
    %v3049 = vadd.f32 %v2978, %v2990
    %v3050 = vadd.f32 %v2979, %v2990
    %v3051 = vadd.f32 %v2980, %v2990
    %v3052 = vadd.f32 %v2981, %v2990
    %v3053 = vadd.f32 %v2982, %v2990
    %v3054 = vadd.f32 %v2983, %v2990
    %v3055 = vadd.f32 %v2984, %v2990
    %v3056 = vrot.slane %v2992, 4
    %v3057 = vmax.f32 %v2992, %v3056
    %v3058 = vrot.slane %v3057, 2
    %v3059 = vmax.f32 %v3057, %v3058
    %v3060 = vrot.slane %v3059, 1
    %v3061 = vmax.f32 %v3059, %v3060
    %v3062 = vrot.slane %v2993, 4
    %v3063 = vmax.f32 %v2993, %v3062
    %v3064 = vrot.slane %v3063, 2
    %v3065 = vmax.f32 %v3063, %v3064
    %v3066 = vrot.slane %v3065, 1
    %v3067 = vmax.f32 %v3065, %v3066
    %v3068 = vrot.slane %v2994, 4
    %v3069 = vmax.f32 %v2994, %v3068
    %v3070 = vrot.slane %v3069, 2
    %v3071 = vmax.f32 %v3069, %v3070
    %v3072 = vrot.slane %v3071, 1
    %v3073 = vmax.f32 %v3071, %v3072
    %v3074 = vrot.slane %v2995, 4
    %v3075 = vmax.f32 %v2995, %v3074
    %v3076 = vrot.slane %v3075, 2
    %v3077 = vmax.f32 %v3075, %v3076
    %v3078 = vrot.slane %v3077, 1
    %v3079 = vmax.f32 %v3077, %v3078
    %v3080 = vrot.slane %v2996, 4
    %v3081 = vmax.f32 %v2996, %v3080
    %v3082 = vrot.slane %v3081, 2
    %v3083 = vmax.f32 %v3081, %v3082
    %v3084 = vrot.slane %v3083, 1
    %v3085 = vmax.f32 %v3083, %v3084
    %v3086 = vrot.slane %v2997, 4
    %v3087 = vmax.f32 %v2997, %v3086
    %v3088 = vrot.slane %v3087, 2
    %v3089 = vmax.f32 %v3087, %v3088
    %v3090 = vrot.slane %v3089, 1
    %v3091 = vmax.f32 %v3089, %v3090
    %v3092 = vrot.slane %v2998, 4
    %v3093 = vmax.f32 %v2998, %v3092
    %v3094 = vrot.slane %v3093, 2
    %v3095 = vmax.f32 %v3093, %v3094
    %v3096 = vrot.slane %v3095, 1
    %v3097 = vmax.f32 %v3095, %v3096
    %v3098 = vrot.slane %v2999, 4
    %v3099 = vmax.f32 %v2999, %v3098
    %v3100 = vrot.slane %v3099, 2
    %v3101 = vmax.f32 %v3099, %v3100
    %v3102 = vrot.slane %v3101, 1
    %v3103 = vmax.f32 %v3101, %v3102
    %v3104 = vrot.slane %v3000, 4
    %v3105 = vmax.f32 %v3000, %v3104
    %v3106 = vrot.slane %v3105, 2
    %v3107 = vmax.f32 %v3105, %v3106
    %v3108 = vrot.slane %v3107, 1
    %v3109 = vmax.f32 %v3107, %v3108
    %v3110 = vrot.slane %v3001, 4
    %v3111 = vmax.f32 %v3001, %v3110
    %v3112 = vrot.slane %v3111, 2
    %v3113 = vmax.f32 %v3111, %v3112
    %v3114 = vrot.slane %v3113, 1
    %v3115 = vmax.f32 %v3113, %v3114
    %v3116 = vrot.slane %v3002, 4
    %v3117 = vmax.f32 %v3002, %v3116
    %v3118 = vrot.slane %v3117, 2
    %v3119 = vmax.f32 %v3117, %v3118
    %v3120 = vrot.slane %v3119, 1
    %v3121 = vmax.f32 %v3119, %v3120
    %v3122 = vrot.slane %v3003, 4
    %v3123 = vmax.f32 %v3003, %v3122
    %v3124 = vrot.slane %v3123, 2
    %v3125 = vmax.f32 %v3123, %v3124
    %v3126 = vrot.slane %v3125, 1
    %v3127 = vmax.f32 %v3125, %v3126
    %v3128 = vrot.slane %v3004, 4
    %v3129 = vmax.f32 %v3004, %v3128
    %v3130 = vrot.slane %v3129, 2
    %v3131 = vmax.f32 %v3129, %v3130
    %v3132 = vrot.slane %v3131, 1
    %v3133 = vmax.f32 %v3131, %v3132
    %v3134 = vrot.slane %v3005, 4
    %v3135 = vmax.f32 %v3005, %v3134
    %v3136 = vrot.slane %v3135, 2
    %v3137 = vmax.f32 %v3135, %v3136
    %v3138 = vrot.slane %v3137, 1
    %v3139 = vmax.f32 %v3137, %v3138
    %v3140 = vrot.slane %v3006, 4
    %v3141 = vmax.f32 %v3006, %v3140
    %v3142 = vrot.slane %v3141, 2
    %v3143 = vmax.f32 %v3141, %v3142
    %v3144 = vrot.slane %v3143, 1
    %v3145 = vmax.f32 %v3143, %v3144
    %v3146 = vrot.slane %v3007, 4
    %v3147 = vmax.f32 %v3007, %v3146
    %v3148 = vrot.slane %v3147, 2
    %v3149 = vmax.f32 %v3147, %v3148
    %v3150 = vrot.slane %v3149, 1
    %v3151 = vmax.f32 %v3149, %v3150
    %v3152 = vrot.slane %v3008, 4
    %v3153 = vmax.f32 %v3008, %v3152
    %v3154 = vrot.slane %v3153, 2
    %v3155 = vmax.f32 %v3153, %v3154
    %v3156 = vrot.slane %v3155, 1
    %v3157 = vmax.f32 %v3155, %v3156
    %v3158 = vrot.slane %v3009, 4
    %v3159 = vmax.f32 %v3009, %v3158
    %v3160 = vrot.slane %v3159, 2
    %v3161 = vmax.f32 %v3159, %v3160
    %v3162 = vrot.slane %v3161, 1
    %v3163 = vmax.f32 %v3161, %v3162
    %v3164 = vrot.slane %v3010, 4
    %v3165 = vmax.f32 %v3010, %v3164
    %v3166 = vrot.slane %v3165, 2
    %v3167 = vmax.f32 %v3165, %v3166
    %v3168 = vrot.slane %v3167, 1
    %v3169 = vmax.f32 %v3167, %v3168
    %v3170 = vrot.slane %v3011, 4
    %v3171 = vmax.f32 %v3011, %v3170
    %v3172 = vrot.slane %v3171, 2
    %v3173 = vmax.f32 %v3171, %v3172
    %v3174 = vrot.slane %v3173, 1
    %v3175 = vmax.f32 %v3173, %v3174
    %v3176 = vrot.slane %v3012, 4
    %v3177 = vmax.f32 %v3012, %v3176
    %v3178 = vrot.slane %v3177, 2
    %v3179 = vmax.f32 %v3177, %v3178
    %v3180 = vrot.slane %v3179, 1
    %v3181 = vmax.f32 %v3179, %v3180
    %v3182 = vrot.slane %v3013, 4
    %v3183 = vmax.f32 %v3013, %v3182
    %v3184 = vrot.slane %v3183, 2
    %v3185 = vmax.f32 %v3183, %v3184
    %v3186 = vrot.slane %v3185, 1
    %v3187 = vmax.f32 %v3185, %v3186
    %v3188 = vrot.slane %v3014, 4
    %v3189 = vmax.f32 %v3014, %v3188
    %v3190 = vrot.slane %v3189, 2
    %v3191 = vmax.f32 %v3189, %v3190
    %v3192 = vrot.slane %v3191, 1
    %v3193 = vmax.f32 %v3191, %v3192
    %v3194 = vrot.slane %v3015, 4
    %v3195 = vmax.f32 %v3015, %v3194
    %v3196 = vrot.slane %v3195, 2
    %v3197 = vmax.f32 %v3195, %v3196
    %v3198 = vrot.slane %v3197, 1
    %v3199 = vmax.f32 %v3197, %v3198
    %v3200 = vrot.slane %v3016, 4
    %v3201 = vmax.f32 %v3016, %v3200
    %v3202 = vrot.slane %v3201, 2
    %v3203 = vmax.f32 %v3201, %v3202
    %v3204 = vrot.slane %v3203, 1
    %v3205 = vmax.f32 %v3203, %v3204
    %v3206 = vrot.slane %v3017, 4
    %v3207 = vmax.f32 %v3017, %v3206
    %v3208 = vrot.slane %v3207, 2
    %v3209 = vmax.f32 %v3207, %v3208
    %v3210 = vrot.slane %v3209, 1
    %v3211 = vmax.f32 %v3209, %v3210
    %v3212 = vrot.slane %v3018, 4
    %v3213 = vmax.f32 %v3018, %v3212
    %v3214 = vrot.slane %v3213, 2
    %v3215 = vmax.f32 %v3213, %v3214
    %v3216 = vrot.slane %v3215, 1
    %v3217 = vmax.f32 %v3215, %v3216
    %v3218 = vrot.slane %v3019, 4
    %v3219 = vmax.f32 %v3019, %v3218
    %v3220 = vrot.slane %v3219, 2
    %v3221 = vmax.f32 %v3219, %v3220
    %v3222 = vrot.slane %v3221, 1
    %v3223 = vmax.f32 %v3221, %v3222
    %v3224 = vrot.slane %v3020, 4
    %v3225 = vmax.f32 %v3020, %v3224
    %v3226 = vrot.slane %v3225, 2
    %v3227 = vmax.f32 %v3225, %v3226
    %v3228 = vrot.slane %v3227, 1
    %v3229 = vmax.f32 %v3227, %v3228
    %v3230 = vrot.slane %v3021, 4
    %v3231 = vmax.f32 %v3021, %v3230
    %v3232 = vrot.slane %v3231, 2
    %v3233 = vmax.f32 %v3231, %v3232
    %v3234 = vrot.slane %v3233, 1
    %v3235 = vmax.f32 %v3233, %v3234
    %v3236 = vrot.slane %v3022, 4
    %v3237 = vmax.f32 %v3022, %v3236
    %v3238 = vrot.slane %v3237, 2
    %v3239 = vmax.f32 %v3237, %v3238
    %v3240 = vrot.slane %v3239, 1
    %v3241 = vmax.f32 %v3239, %v3240
    %v3242 = vrot.slane %v3023, 4
    %v3243 = vmax.f32 %v3023, %v3242
    %v3244 = vrot.slane %v3243, 2
    %v3245 = vmax.f32 %v3243, %v3244
    %v3246 = vrot.slane %v3245, 1
    %v3247 = vmax.f32 %v3245, %v3246
    %v3248 = vrot.slane %v3024, 4
    %v3249 = vmax.f32 %v3024, %v3248
    %v3250 = vrot.slane %v3249, 2
    %v3251 = vmax.f32 %v3249, %v3250
    %v3252 = vrot.slane %v3251, 1
    %v3253 = vmax.f32 %v3251, %v3252
    %v3254 = vrot.slane %v3025, 4
    %v3255 = vmax.f32 %v3025, %v3254
    %v3256 = vrot.slane %v3255, 2
    %v3257 = vmax.f32 %v3255, %v3256
    %v3258 = vrot.slane %v3257, 1
    %v3259 = vmax.f32 %v3257, %v3258
    %v3260 = vrot.slane %v3026, 4
    %v3261 = vmax.f32 %v3026, %v3260
    %v3262 = vrot.slane %v3261, 2
    %v3263 = vmax.f32 %v3261, %v3262
    %v3264 = vrot.slane %v3263, 1
    %v3265 = vmax.f32 %v3263, %v3264
    %v3266 = vrot.slane %v3027, 4
    %v3267 = vmax.f32 %v3027, %v3266
    %v3268 = vrot.slane %v3267, 2
    %v3269 = vmax.f32 %v3267, %v3268
    %v3270 = vrot.slane %v3269, 1
    %v3271 = vmax.f32 %v3269, %v3270
    %v3272 = vrot.slane %v3028, 4
    %v3273 = vmax.f32 %v3028, %v3272
    %v3274 = vrot.slane %v3273, 2
    %v3275 = vmax.f32 %v3273, %v3274
    %v3276 = vrot.slane %v3275, 1
    %v3277 = vmax.f32 %v3275, %v3276
    %v3278 = vrot.slane %v3029, 4
    %v3279 = vmax.f32 %v3029, %v3278
    %v3280 = vrot.slane %v3279, 2
    %v3281 = vmax.f32 %v3279, %v3280
    %v3282 = vrot.slane %v3281, 1
    %v3283 = vmax.f32 %v3281, %v3282
    %v3284 = vrot.slane %v3030, 4
    %v3285 = vmax.f32 %v3030, %v3284
    %v3286 = vrot.slane %v3285, 2
    %v3287 = vmax.f32 %v3285, %v3286
    %v3288 = vrot.slane %v3287, 1
    %v3289 = vmax.f32 %v3287, %v3288
    %v3290 = vrot.slane %v3031, 4
    %v3291 = vmax.f32 %v3031, %v3290
    %v3292 = vrot.slane %v3291, 2
    %v3293 = vmax.f32 %v3291, %v3292
    %v3294 = vrot.slane %v3293, 1
    %v3295 = vmax.f32 %v3293, %v3294
    %v3296 = vrot.slane %v3032, 4
    %v3297 = vmax.f32 %v3032, %v3296
    %v3298 = vrot.slane %v3297, 2
    %v3299 = vmax.f32 %v3297, %v3298
    %v3300 = vrot.slane %v3299, 1
    %v3301 = vmax.f32 %v3299, %v3300
    %v3302 = vrot.slane %v3033, 4
    %v3303 = vmax.f32 %v3033, %v3302
    %v3304 = vrot.slane %v3303, 2
    %v3305 = vmax.f32 %v3303, %v3304
    %v3306 = vrot.slane %v3305, 1
    %v3307 = vmax.f32 %v3305, %v3306
    %v3308 = vrot.slane %v3034, 4
    %v3309 = vmax.f32 %v3034, %v3308
    %v3310 = vrot.slane %v3309, 2
    %v3311 = vmax.f32 %v3309, %v3310
    %v3312 = vrot.slane %v3311, 1
    %v3313 = vmax.f32 %v3311, %v3312
    %v3314 = vrot.slane %v3035, 4
    %v3315 = vmax.f32 %v3035, %v3314
    %v3316 = vrot.slane %v3315, 2
    %v3317 = vmax.f32 %v3315, %v3316
    %v3318 = vrot.slane %v3317, 1
    %v3319 = vmax.f32 %v3317, %v3318
    %v3320 = vrot.slane %v3036, 4
    %v3321 = vmax.f32 %v3036, %v3320
    %v3322 = vrot.slane %v3321, 2
    %v3323 = vmax.f32 %v3321, %v3322
    %v3324 = vrot.slane %v3323, 1
    %v3325 = vmax.f32 %v3323, %v3324
    %v3326 = vrot.slane %v3037, 4
    %v3327 = vmax.f32 %v3037, %v3326
    %v3328 = vrot.slane %v3327, 2
    %v3329 = vmax.f32 %v3327, %v3328
    %v3330 = vrot.slane %v3329, 1
    %v3331 = vmax.f32 %v3329, %v3330
    %v3332 = vrot.slane %v3038, 4
    %v3333 = vmax.f32 %v3038, %v3332
    %v3334 = vrot.slane %v3333, 2
    %v3335 = vmax.f32 %v3333, %v3334
    %v3336 = vrot.slane %v3335, 1
    %v3337 = vmax.f32 %v3335, %v3336
    %v3338 = vrot.slane %v3039, 4
    %v3339 = vmax.f32 %v3039, %v3338
    %v3340 = vrot.slane %v3339, 2
    %v3341 = vmax.f32 %v3339, %v3340
    %v3342 = vrot.slane %v3341, 1
    %v3343 = vmax.f32 %v3341, %v3342
    %v3344 = vrot.slane %v3040, 4
    %v3345 = vmax.f32 %v3040, %v3344
    %v3346 = vrot.slane %v3345, 2
    %v3347 = vmax.f32 %v3345, %v3346
    %v3348 = vrot.slane %v3347, 1
    %v3349 = vmax.f32 %v3347, %v3348
    %v3350 = vrot.slane %v3041, 4
    %v3351 = vmax.f32 %v3041, %v3350
    %v3352 = vrot.slane %v3351, 2
    %v3353 = vmax.f32 %v3351, %v3352
    %v3354 = vrot.slane %v3353, 1
    %v3355 = vmax.f32 %v3353, %v3354
    %v3356 = vrot.slane %v3042, 4
    %v3357 = vmax.f32 %v3042, %v3356
    %v3358 = vrot.slane %v3357, 2
    %v3359 = vmax.f32 %v3357, %v3358
    %v3360 = vrot.slane %v3359, 1
    %v3361 = vmax.f32 %v3359, %v3360
    %v3362 = vrot.slane %v3043, 4
    %v3363 = vmax.f32 %v3043, %v3362
    %v3364 = vrot.slane %v3363, 2
    %v3365 = vmax.f32 %v3363, %v3364
    %v3366 = vrot.slane %v3365, 1
    %v3367 = vmax.f32 %v3365, %v3366
    %v3368 = vrot.slane %v3044, 4
    %v3369 = vmax.f32 %v3044, %v3368
    %v3370 = vrot.slane %v3369, 2
    %v3371 = vmax.f32 %v3369, %v3370
    %v3372 = vrot.slane %v3371, 1
    %v3373 = vmax.f32 %v3371, %v3372
    %v3374 = vrot.slane %v3045, 4
    %v3375 = vmax.f32 %v3045, %v3374
    %v3376 = vrot.slane %v3375, 2
    %v3377 = vmax.f32 %v3375, %v3376
    %v3378 = vrot.slane %v3377, 1
    %v3379 = vmax.f32 %v3377, %v3378
    %v3380 = vrot.slane %v3046, 4
    %v3381 = vmax.f32 %v3046, %v3380
    %v3382 = vrot.slane %v3381, 2
    %v3383 = vmax.f32 %v3381, %v3382
    %v3384 = vrot.slane %v3383, 1
    %v3385 = vmax.f32 %v3383, %v3384
    %v3386 = vrot.slane %v3047, 4
    %v3387 = vmax.f32 %v3047, %v3386
    %v3388 = vrot.slane %v3387, 2
    %v3389 = vmax.f32 %v3387, %v3388
    %v3390 = vrot.slane %v3389, 1
    %v3391 = vmax.f32 %v3389, %v3390
    %v3392 = vrot.slane %v3048, 4
    %v3393 = vmax.f32 %v3048, %v3392
    %v3394 = vrot.slane %v3393, 2
    %v3395 = vmax.f32 %v3393, %v3394
    %v3396 = vrot.slane %v3395, 1
    %v3397 = vmax.f32 %v3395, %v3396
    %v3398 = vrot.slane %v3049, 4
    %v3399 = vmax.f32 %v3049, %v3398
    %v3400 = vrot.slane %v3399, 2
    %v3401 = vmax.f32 %v3399, %v3400
    %v3402 = vrot.slane %v3401, 1
    %v3403 = vmax.f32 %v3401, %v3402
    %v3404 = vrot.slane %v3050, 4
    %v3405 = vmax.f32 %v3050, %v3404
    %v3406 = vrot.slane %v3405, 2
    %v3407 = vmax.f32 %v3405, %v3406
    %v3408 = vrot.slane %v3407, 1
    %v3409 = vmax.f32 %v3407, %v3408
    %v3410 = vrot.slane %v3051, 4
    %v3411 = vmax.f32 %v3051, %v3410
    %v3412 = vrot.slane %v3411, 2
    %v3413 = vmax.f32 %v3411, %v3412
    %v3414 = vrot.slane %v3413, 1
    %v3415 = vmax.f32 %v3413, %v3414
    %v3416 = vrot.slane %v3052, 4
    %v3417 = vmax.f32 %v3052, %v3416
    %v3418 = vrot.slane %v3417, 2
    %v3419 = vmax.f32 %v3417, %v3418
    %v3420 = vrot.slane %v3419, 1
    %v3421 = vmax.f32 %v3419, %v3420
    %v3422 = vrot.slane %v3053, 4
    %v3423 = vmax.f32 %v3053, %v3422
    %v3424 = vrot.slane %v3423, 2
    %v3425 = vmax.f32 %v3423, %v3424
    %v3426 = vrot.slane %v3425, 1
    %v3427 = vmax.f32 %v3425, %v3426
    %v3428 = vrot.slane %v3054, 4
    %v3429 = vmax.f32 %v3054, %v3428
    %v3430 = vrot.slane %v3429, 2
    %v3431 = vmax.f32 %v3429, %v3430
    %v3432 = vrot.slane %v3431, 1
    %v3433 = vmax.f32 %v3431, %v3432
    %v3434 = vrot.slane %v3055, 4
    %v3435 = vmax.f32 %v3055, %v3434
    %v3436 = vrot.slane %v3435, 2
    %v3437 = vmax.f32 %v3435, %v3436
    %v3438 = vrot.slane %v3437, 1
    %v3439 = vmax.f32 %v3437, %v3438
    %v3440 = vpack.c.bf16 %v3061, %v3061
    %v3441 = vpack.c.bf16 %v3067, %v3067
    %v3442 = vpack.c.bf16 %v3073, %v3073
    %v3443 = vpack.c.bf16 %v3079, %v3079
    %v3444 = vpack.c.bf16 %v3085, %v3085
    %v3445 = vpack.c.bf16 %v3091, %v3091
    %v3446 = vpack.c.bf16 %v3097, %v3097
    %v3447 = vpack.c.bf16 %v3103, %v3103
    %v3448 = vpack.c.bf16 %v3109, %v3109
    %v3449 = vpack.c.bf16 %v3115, %v3115
    %v3450 = vpack.c.bf16 %v3121, %v3121
    %v3451 = vpack.c.bf16 %v3127, %v3127
    %v3452 = vpack.c.bf16 %v3133, %v3133
    %v3453 = vpack.c.bf16 %v3139, %v3139
    %v3454 = vpack.c.bf16 %v3145, %v3145
    %v3455 = vpack.c.bf16 %v3151, %v3151
    %v3456 = vpack.c.bf16 %v3157, %v3157
    %v3457 = vpack.c.bf16 %v3163, %v3163
    %v3458 = vpack.c.bf16 %v3169, %v3169
    %v3459 = vpack.c.bf16 %v3175, %v3175
    %v3460 = vpack.c.bf16 %v3181, %v3181
    %v3461 = vpack.c.bf16 %v3187, %v3187
    %v3462 = vpack.c.bf16 %v3193, %v3193
    %v3463 = vpack.c.bf16 %v3199, %v3199
    %v3464 = vpack.c.bf16 %v3205, %v3205
    %v3465 = vpack.c.bf16 %v3211, %v3211
    %v3466 = vpack.c.bf16 %v3217, %v3217
    %v3467 = vpack.c.bf16 %v3223, %v3223
    %v3468 = vpack.c.bf16 %v3229, %v3229
    %v3469 = vpack.c.bf16 %v3235, %v3235
    %v3470 = vpack.c.bf16 %v3241, %v3241
    %v3471 = vpack.c.bf16 %v3247, %v3247
    %v3472 = vpack.c.bf16 %v3253, %v3253
    %v3473 = vpack.c.bf16 %v3259, %v3259
    %v3474 = vpack.c.bf16 %v3265, %v3265
    %v3475 = vpack.c.bf16 %v3271, %v3271
    %v3476 = vpack.c.bf16 %v3277, %v3277
    %v3477 = vpack.c.bf16 %v3283, %v3283
    %v3478 = vpack.c.bf16 %v3289, %v3289
    %v3479 = vpack.c.bf16 %v3295, %v3295
    %v3480 = vpack.c.bf16 %v3301, %v3301
    %v3481 = vpack.c.bf16 %v3307, %v3307
    %v3482 = vpack.c.bf16 %v3313, %v3313
    %v3483 = vpack.c.bf16 %v3319, %v3319
    %v3484 = vpack.c.bf16 %v3325, %v3325
    %v3485 = vpack.c.bf16 %v3331, %v3331
    %v3486 = vpack.c.bf16 %v3337, %v3337
    %v3487 = vpack.c.bf16 %v3343, %v3343
    %v3488 = vpack.c.bf16 %v3349, %v3349
    %v3489 = vpack.c.bf16 %v3355, %v3355
    %v3490 = vpack.c.bf16 %v3361, %v3361
    %v3491 = vpack.c.bf16 %v3367, %v3367
    %v3492 = vpack.c.bf16 %v3373, %v3373
    %v3493 = vpack.c.bf16 %v3379, %v3379
    %v3494 = vpack.c.bf16 %v3385, %v3385
    %v3495 = vpack.c.bf16 %v3391, %v3391
    %v3496 = vpack.c.bf16 %v3397, %v3397
    %v3497 = vpack.c.bf16 %v3403, %v3403
    %v3498 = vpack.c.bf16 %v3409, %v3409
    %v3499 = vpack.c.bf16 %v3415, %v3415
    %v3500 = vpack.c.bf16 %v3421, %v3421
    %v3501 = vpack.c.bf16 %v3427, %v3427
    %v3502 = vpack.c.bf16 %v3433, %v3433
    %v3503 = vpack.c.bf16 %v3439, %v3439
    %v3504 = vld [vmem:[%s1] sm:$0xf]
    %v3505 = vld [vmem:[%s1 + $0x4] sm:$0xf]
    %v3506 = vld [vmem:[%s1 + $0x8] sm:$0xf]
    %v3507 = vld [vmem:[%s1 + $0xc] sm:$0xf]
    %v3508 = vld [vmem:[%s1 + $0x10] sm:$0xf]
    %v3509 = vld [vmem:[%s1 + $0x14] sm:$0xf]
    %v3510 = vld [vmem:[%s1 + $0x18] sm:$0xf]
    %v3511 = vld [vmem:[%s1 + $0x1c] sm:$0xf]
    %v3576 = vunpack.c.l.b16 %v3440
    %v3577 = vunpack.c.l.b16 %v3441
    %v3578 = vunpack.c.l.b16 %v3442
    %v3579 = vunpack.c.l.b16 %v3443
    %v3580 = vunpack.c.l.b16 %v3444
    %v3581 = vunpack.c.l.b16 %v3445
    %v3582 = vunpack.c.l.b16 %v3446
    %v3583 = vunpack.c.l.b16 %v3447
    %v3584 = vunpack.c.l.b16 %v3448
    %v3585 = vunpack.c.l.b16 %v3449
    %v3586 = vunpack.c.l.b16 %v3450
    %v3587 = vunpack.c.l.b16 %v3451
    %v3588 = vunpack.c.l.b16 %v3452
    %v3589 = vunpack.c.l.b16 %v3453
    %v3590 = vunpack.c.l.b16 %v3454
    %v3591 = vunpack.c.l.b16 %v3455
    %v3592 = vunpack.c.l.b16 %v3456
    %v3593 = vunpack.c.l.b16 %v3457
    %v3594 = vunpack.c.l.b16 %v3458
    %v3595 = vunpack.c.l.b16 %v3459
    %v3596 = vunpack.c.l.b16 %v3460
    %v3597 = vunpack.c.l.b16 %v3461
    %v3598 = vunpack.c.l.b16 %v3462
    %v3599 = vunpack.c.l.b16 %v3463
    %v3600 = vunpack.c.l.b16 %v3464
    %v3601 = vunpack.c.l.b16 %v3465
    %v3602 = vunpack.c.l.b16 %v3466
    %v3603 = vunpack.c.l.b16 %v3467
    %v3604 = vunpack.c.l.b16 %v3468
    %v3605 = vunpack.c.l.b16 %v3469
    %v3606 = vunpack.c.l.b16 %v3470
    %v3607 = vunpack.c.l.b16 %v3471
    %v3608 = vunpack.c.l.b16 %v3472
    %v3609 = vunpack.c.l.b16 %v3473
    %v3610 = vunpack.c.l.b16 %v3474
    %v3611 = vunpack.c.l.b16 %v3475
    %v3612 = vunpack.c.l.b16 %v3476
    %v3613 = vunpack.c.l.b16 %v3477
    %v3614 = vunpack.c.l.b16 %v3478
    %v3615 = vunpack.c.l.b16 %v3479
    %v3616 = vunpack.c.l.b16 %v3480
    %v3617 = vunpack.c.l.b16 %v3481
    %v3618 = vunpack.c.l.b16 %v3482
    %v3619 = vunpack.c.l.b16 %v3483
    %v3620 = vunpack.c.l.b16 %v3484
    %v3621 = vunpack.c.l.b16 %v3485
    %v3622 = vunpack.c.l.b16 %v3486
    %v3623 = vunpack.c.l.b16 %v3487
    %v3624 = vunpack.c.l.b16 %v3488
    %v3625 = vunpack.c.l.b16 %v3489
    %v3626 = vunpack.c.l.b16 %v3490
    %v3627 = vunpack.c.l.b16 %v3491
    %v3628 = vunpack.c.l.b16 %v3492
    %v3629 = vunpack.c.l.b16 %v3493
    %v3630 = vunpack.c.l.b16 %v3494
    %v3631 = vunpack.c.l.b16 %v3495
    %v3632 = vunpack.c.l.b16 %v3496
    %v3633 = vunpack.c.l.b16 %v3497
    %v3634 = vunpack.c.l.b16 %v3498
    %v3635 = vunpack.c.l.b16 %v3499
    %v3636 = vunpack.c.l.b16 %v3500
    %v3637 = vunpack.c.l.b16 %v3501
    %v3638 = vunpack.c.l.b16 %v3502
    %v3639 = vunpack.c.l.b16 %v3503
    %vm3640 = vcmask 1041409
    %v3641 = vsel %vm3640, %v3577, %v3576
    %vm3642 = vcmask 1042434
    %v3643 = vsel %vm3642, %v3578, %v3641
    %vm3644 = vcmask 1043459
    %v3645 = vsel %vm3644, %v3579, %v3643
    %vm3646 = vcmask 1044484
    %v3647 = vsel %vm3646, %v3580, %v3645
    %vm3648 = vcmask 1045509
    %v3649 = vsel %vm3648, %v3581, %v3647
    %vm3650 = vcmask 1046534
    %v3651 = vsel %vm3650, %v3582, %v3649
    %vm3652 = vcmask 1047559
    %v3653 = vsel %vm3652, %v3583, %v3651
    %v3654 = vsel %vm3640, %v3585, %v3584
    %v3655 = vsel %vm3642, %v3586, %v3654
    %v3656 = vsel %vm3644, %v3587, %v3655
    %v3657 = vsel %vm3646, %v3588, %v3656
    %v3658 = vsel %vm3648, %v3589, %v3657
    %v3659 = vsel %vm3650, %v3590, %v3658
    %v3660 = vsel %vm3652, %v3591, %v3659
    %v3661 = vsel %vm3640, %v3593, %v3592
    %v3662 = vsel %vm3642, %v3594, %v3661
    %v3663 = vsel %vm3644, %v3595, %v3662
    %v3664 = vsel %vm3646, %v3596, %v3663
    %v3665 = vsel %vm3648, %v3597, %v3664
    %v3666 = vsel %vm3650, %v3598, %v3665
    %v3667 = vsel %vm3652, %v3599, %v3666
    %v3668 = vsel %vm3640, %v3601, %v3600
    %v3669 = vsel %vm3642, %v3602, %v3668
    %v3670 = vsel %vm3644, %v3603, %v3669
    %v3671 = vsel %vm3646, %v3604, %v3670
    %v3672 = vsel %vm3648, %v3605, %v3671
    %v3673 = vsel %vm3650, %v3606, %v3672
    %v3674 = vsel %vm3652, %v3607, %v3673
    %v3675 = vsel %vm3640, %v3609, %v3608
    %v3676 = vsel %vm3642, %v3610, %v3675
    %v3677 = vsel %vm3644, %v3611, %v3676
    %v3678 = vsel %vm3646, %v3612, %v3677
    %v3679 = vsel %vm3648, %v3613, %v3678
    %v3680 = vsel %vm3650, %v3614, %v3679
    %v3681 = vsel %vm3652, %v3615, %v3680
    %v3682 = vsel %vm3640, %v3617, %v3616
    %v3683 = vsel %vm3642, %v3618, %v3682
    %v3684 = vsel %vm3644, %v3619, %v3683
    %v3685 = vsel %vm3646, %v3620, %v3684
    %v3686 = vsel %vm3648, %v3621, %v3685
    %v3687 = vsel %vm3650, %v3622, %v3686
    %v3688 = vsel %vm3652, %v3623, %v3687
    %v3689 = vsel %vm3640, %v3625, %v3624
    %v3690 = vsel %vm3642, %v3626, %v3689
    %v3691 = vsel %vm3644, %v3627, %v3690
    %v3692 = vsel %vm3646, %v3628, %v3691
    %v3693 = vsel %vm3648, %v3629, %v3692
    %v3694 = vsel %vm3650, %v3630, %v3693
    %v3695 = vsel %vm3652, %v3631, %v3694
    %v3696 = vsel %vm3640, %v3633, %v3632
    %v3697 = vsel %vm3642, %v3634, %v3696
    %v3698 = vsel %vm3644, %v3635, %v3697
    %v3699 = vsel %vm3646, %v3636, %v3698
    %v3700 = vsel %vm3648, %v3637, %v3699
    %v3701 = vsel %vm3650, %v3638, %v3700
    %v3702 = vsel %vm3652, %v3639, %v3701
    %v3703 = vpack.c.b16 %v3660, %v3653
    %v3704 = vpack.c.b16 %v3674, %v3667
    %v3705 = vpack.c.b16 %v3688, %v3681
    %v3706 = vpack.c.b16 %v3702, %v3695
    %v3719 = vunpack.c.l.b16 %v3504
    %v3720 = vunpack.c.l.b16 %v3505
    %v3721 = vunpack.c.l.b16 %v3506
    %v3722 = vunpack.c.l.b16 %v3507
    %v3723 = vunpack.c.l.b16 %v3508
    %v3724 = vunpack.c.l.b16 %v3509
    %v3725 = vunpack.c.l.b16 %v3510
    %v3726 = vunpack.c.l.b16 %v3511
    %v3727 = vpack.c.b16 %v3720, %v3719
    %v3728 = vpack.c.b16 %v3722, %v3721
    %v3729 = vpack.c.b16 %v3724, %v3723
    %v3730 = vpack.c.b16 %v3726, %v3725
    %v3731 = vld [vmem:[%s4] sm:$0xff]
    %v3732 = vld [vmem:[%s4 + $0x8] sm:$0xff]
    %v3733 = vld [vmem:[%s4 + $0x10] sm:$0xff]
    %v3734 = vld [vmem:[%s4 + $0x18] sm:$0xff]
    %v3735 = vld [vmem:[%s4 + $0x20] sm:$0xff]
    %v3736 = vld [vmem:[%s4 + $0x28] sm:$0xff]
    %v3737 = vld [vmem:[%s4 + $0x30] sm:$0xff]
    %v3738 = vld [vmem:[%s4 + $0x38] sm:$0xff]
    %v3739 = vld [vmem:[%s4 + $0x40] sm:$0xff]
    %v3740 = vld [vmem:[%s4 + $0x48] sm:$0xff]
    %v3741 = vld [vmem:[%s4 + $0x50] sm:$0xff]
    %v3742 = vld [vmem:[%s4 + $0x58] sm:$0xff]
    %v3743 = vld [vmem:[%s4 + $0x60] sm:$0xff]
    %v3744 = vld [vmem:[%s4 + $0x68] sm:$0xff]
    %v3745 = vld [vmem:[%s4 + $0x70] sm:$0xff]
    %v3746 = vld [vmem:[%s4 + $0x78] sm:$0xff]
    %v3747 = vld [vmem:[%s4 + $0x80] sm:$0xff]
    %v3748 = vld [vmem:[%s4 + $0x88] sm:$0xff]
    %v3749 = vld [vmem:[%s4 + $0x90] sm:$0xff]
    %v3750 = vld [vmem:[%s4 + $0x98] sm:$0xff]
    %v3751 = vld [vmem:[%s4 + $0xa0] sm:$0xff]
    %v3752 = vld [vmem:[%s4 + $0xa8] sm:$0xff]
    %v3753 = vld [vmem:[%s4 + $0xb0] sm:$0xff]
    %v3754 = vld [vmem:[%s4 + $0xb8] sm:$0xff]
    %v3755 = vld [vmem:[%s4 + $0xc0] sm:$0xff]
    %v3756 = vld [vmem:[%s4 + $0xc8] sm:$0xff]
    %v3757 = vld [vmem:[%s4 + $0xd0] sm:$0xff]
    %v3758 = vld [vmem:[%s4 + $0xd8] sm:$0xff]
    %v3759 = vld [vmem:[%s4 + $0xe0] sm:$0xff]
    %v3760 = vld [vmem:[%s4 + $0xe8] sm:$0xff]
    %v3761 = vld [vmem:[%s4 + $0xf0] sm:$0xff]
    %v3762 = vld [vmem:[%s4 + $0xf8] sm:$0xff]
    %v3763 = vld [vmem:[%s4 + $0x100] sm:$0xff]
    %v3764 = vld [vmem:[%s4 + $0x108] sm:$0xff]
    %v3765 = vld [vmem:[%s4 + $0x110] sm:$0xff]
    %v3766 = vld [vmem:[%s4 + $0x118] sm:$0xff]
    %v3767 = vld [vmem:[%s4 + $0x120] sm:$0xff]
    %v3768 = vld [vmem:[%s4 + $0x128] sm:$0xff]
    %v3769 = vld [vmem:[%s4 + $0x130] sm:$0xff]
    %v3770 = vld [vmem:[%s4 + $0x138] sm:$0xff]
    %v3771 = vld [vmem:[%s4 + $0x140] sm:$0xff]
    %v3772 = vld [vmem:[%s4 + $0x148] sm:$0xff]
    %v3773 = vld [vmem:[%s4 + $0x150] sm:$0xff]
    %v3774 = vld [vmem:[%s4 + $0x158] sm:$0xff]
    %v3775 = vld [vmem:[%s4 + $0x160] sm:$0xff]
    %v3776 = vld [vmem:[%s4 + $0x168] sm:$0xff]
    %v3777 = vld [vmem:[%s4 + $0x170] sm:$0xff]
    %v3778 = vld [vmem:[%s4 + $0x178] sm:$0xff]
    %v3779 = vld [vmem:[%s4 + $0x180] sm:$0xff]
    %v3780 = vld [vmem:[%s4 + $0x188] sm:$0xff]
    %v3781 = vld [vmem:[%s4 + $0x190] sm:$0xff]
    %v3782 = vld [vmem:[%s4 + $0x198] sm:$0xff]
    %v3783 = vld [vmem:[%s4 + $0x1a0] sm:$0xff]
    %v3784 = vld [vmem:[%s4 + $0x1a8] sm:$0xff]
    %v3785 = vld [vmem:[%s4 + $0x1b0] sm:$0xff]
    %v3786 = vld [vmem:[%s4 + $0x1b8] sm:$0xff]
    %v3787 = vld [vmem:[%s4 + $0x1c0] sm:$0xff]
    %v3788 = vld [vmem:[%s4 + $0x1c8] sm:$0xff]
    %v3789 = vld [vmem:[%s4 + $0x1d0] sm:$0xff]
    %v3790 = vld [vmem:[%s4 + $0x1d8] sm:$0xff]
    %v3791 = vld [vmem:[%s4 + $0x1e0] sm:$0xff]
    %v3792 = vld [vmem:[%s4 + $0x1e8] sm:$0xff]
    %v3793 = vld [vmem:[%s4 + $0x1f0] sm:$0xff]
    %v3794 = vld [vmem:[%s4 + $0x1f8] sm:$0xff]
    %v3795 = vld [vmem:[%s4 + $0x200] sm:$0xff]
    %v3796 = vld [vmem:[%s4 + $0x208] sm:$0xff]
    %v3797 = vld [vmem:[%s4 + $0x210] sm:$0xff]
    %v3798 = vld [vmem:[%s4 + $0x218] sm:$0xff]
    %v3799 = vld [vmem:[%s4 + $0x220] sm:$0xff]
    %v3800 = vld [vmem:[%s4 + $0x228] sm:$0xff]
    %v3801 = vld [vmem:[%s4 + $0x230] sm:$0xff]
    %v3802 = vld [vmem:[%s4 + $0x238] sm:$0xff]
    %v3803 = vld [vmem:[%s4 + $0x240] sm:$0xff]
    %v3804 = vld [vmem:[%s4 + $0x248] sm:$0xff]
    %v3805 = vld [vmem:[%s4 + $0x250] sm:$0xff]
    %v3806 = vld [vmem:[%s4 + $0x258] sm:$0xff]
    %v3807 = vld [vmem:[%s4 + $0x260] sm:$0xff]
    %v3808 = vld [vmem:[%s4 + $0x268] sm:$0xff]
    %v3809 = vld [vmem:[%s4 + $0x270] sm:$0xff]
    %v3810 = vld [vmem:[%s4 + $0x278] sm:$0xff]
    %v3811 = vld [vmem:[%s5] sm:$0xff]
    %v3813 = vlaneseq
    %v3814 = vshrl.u32 %v3813, 7
    %v3815 = vsub.s32 0, %v3814
    %v3816 = vrot.slane %v3811, %v3815
    %v3817 = vlaneseq
    %v3818 = vshrl.u32 %v3817, 7
    %v3819 = vsub.s32 1, %v3818
    %v3820 = vrot.slane %v3811, %v3819
    %v3821 = vlaneseq
    %v3822 = vshrl.u32 %v3821, 7
    %v3823 = vsub.s32 2, %v3822
    %v3824 = vrot.slane %v3811, %v3823
    %v3825 = vlaneseq
    %v3826 = vshrl.u32 %v3825, 7
    %v3827 = vsub.s32 3, %v3826
    %v3828 = vrot.slane %v3811, %v3827
    %v3829 = vlaneseq
    %v3830 = vshrl.u32 %v3829, 7
    %v3831 = vsub.s32 4, %v3830
    %v3832 = vrot.slane %v3811, %v3831
    %v3833 = vlaneseq
    %v3834 = vshrl.u32 %v3833, 7
    %v3835 = vsub.s32 5, %v3834
    %v3836 = vrot.slane %v3811, %v3835
    %v3837 = vlaneseq
    %v3838 = vshrl.u32 %v3837, 7
    %v3839 = vsub.s32 6, %v3838
    %v3840 = vrot.slane %v3811, %v3839
    %v3841 = vlaneseq
    %v3842 = vshrl.u32 %v3841, 7
    %v3843 = vsub.s32 7, %v3842
    %v3844 = vrot.slane %v3811, %v3843
    %v3933 = vunpack.c.l.b16 %v3731
    %v3934 = vunpack.c.h.b16 %v3731
    %v3935 = vunpack.c.l.b16 %v3732
    %v3936 = vunpack.c.h.b16 %v3732
    %v3937 = vunpack.c.l.b16 %v3733
    %v3938 = vunpack.c.h.b16 %v3733
    %v3939 = vunpack.c.l.b16 %v3734
    %v3940 = vunpack.c.h.b16 %v3734
    %v3941 = vunpack.c.l.b16 %v3735
    %v3942 = vunpack.c.h.b16 %v3735
    %v3943 = vunpack.c.l.b16 %v3736
    %v3944 = vunpack.c.h.b16 %v3736
    %v3945 = vunpack.c.l.b16 %v3737
    %v3946 = vunpack.c.h.b16 %v3737
    %v3947 = vunpack.c.l.b16 %v3738
    %v3948 = vunpack.c.h.b16 %v3738
    %v3949 = vunpack.c.l.b16 %v3739
    %v3950 = vunpack.c.h.b16 %v3739
    %v3951 = vunpack.c.l.b16 %v3740
    %v3952 = vunpack.c.h.b16 %v3740
    %v3953 = vunpack.c.l.b16 %v3741
    %v3954 = vunpack.c.h.b16 %v3741
    %v3955 = vunpack.c.l.b16 %v3742
    %v3956 = vunpack.c.h.b16 %v3742
    %v3957 = vunpack.c.l.b16 %v3743
    %v3958 = vunpack.c.h.b16 %v3743
    %v3959 = vunpack.c.l.b16 %v3744
    %v3960 = vunpack.c.h.b16 %v3744
    %v3961 = vunpack.c.l.b16 %v3745
    %v3962 = vunpack.c.h.b16 %v3745
    %v3963 = vunpack.c.l.b16 %v3746
    %v3964 = vunpack.c.h.b16 %v3746
    %v3965 = vunpack.c.l.b16 %v3747
    %v3966 = vunpack.c.h.b16 %v3747
    %v3967 = vunpack.c.l.b16 %v3748
    %v3968 = vunpack.c.h.b16 %v3748
    %v3969 = vunpack.c.l.b16 %v3749
    %v3970 = vunpack.c.h.b16 %v3749
    %v3971 = vunpack.c.l.b16 %v3750
    %v3972 = vunpack.c.h.b16 %v3750
    %v3973 = vunpack.c.l.b16 %v3751
    %v3974 = vunpack.c.h.b16 %v3751
    %v3975 = vunpack.c.l.b16 %v3752
    %v3976 = vunpack.c.h.b16 %v3752
    %v3977 = vunpack.c.l.b16 %v3753
    %v3978 = vunpack.c.h.b16 %v3753
    %v3979 = vunpack.c.l.b16 %v3754
    %v3980 = vunpack.c.h.b16 %v3754
    %v3981 = vunpack.c.l.b16 %v3755
    %v3982 = vunpack.c.h.b16 %v3755
    %v3983 = vunpack.c.l.b16 %v3756
    %v3984 = vunpack.c.h.b16 %v3756
    %v3985 = vunpack.c.l.b16 %v3757
    %v3986 = vunpack.c.h.b16 %v3757
    %v3987 = vunpack.c.l.b16 %v3758
    %v3988 = vunpack.c.h.b16 %v3758
    %v3989 = vunpack.c.l.b16 %v3759
    %v3990 = vunpack.c.h.b16 %v3759
    %v3991 = vunpack.c.l.b16 %v3760
    %v3992 = vunpack.c.h.b16 %v3760
    %v3993 = vunpack.c.l.b16 %v3761
    %v3994 = vunpack.c.h.b16 %v3761
    %v3995 = vunpack.c.l.b16 %v3762
    %v3996 = vunpack.c.h.b16 %v3762
    %v3997 = vunpack.c.l.b16 %v3763
    %v3998 = vunpack.c.h.b16 %v3763
    %v3999 = vunpack.c.l.b16 %v3764
    %v4000 = vunpack.c.h.b16 %v3764
    %v4001 = vunpack.c.l.b16 %v3765
    %v4002 = vunpack.c.h.b16 %v3765
    %v4003 = vunpack.c.l.b16 %v3766
    %v4004 = vunpack.c.h.b16 %v3766
    %v4005 = vunpack.c.l.b16 %v3767
    %v4006 = vunpack.c.h.b16 %v3767
    %v4007 = vunpack.c.l.b16 %v3768
    %v4008 = vunpack.c.h.b16 %v3768
    %v4009 = vunpack.c.l.b16 %v3769
    %v4010 = vunpack.c.h.b16 %v3769
    %v4011 = vunpack.c.l.b16 %v3770
    %v4012 = vunpack.c.h.b16 %v3770
    %v4013 = vunpack.c.l.b16 %v3771
    %v4014 = vunpack.c.h.b16 %v3771
    %v4015 = vunpack.c.l.b16 %v3772
    %v4016 = vunpack.c.h.b16 %v3772
    %v4017 = vunpack.c.l.b16 %v3773
    %v4018 = vunpack.c.h.b16 %v3773
    %v4019 = vunpack.c.l.b16 %v3774
    %v4020 = vunpack.c.h.b16 %v3774
    %v4021 = vunpack.c.l.b16 %v3775
    %v4022 = vunpack.c.h.b16 %v3775
    %v4023 = vunpack.c.l.b16 %v3776
    %v4024 = vunpack.c.h.b16 %v3776
    %v4025 = vunpack.c.l.b16 %v3777
    %v4026 = vunpack.c.h.b16 %v3777
    %v4027 = vunpack.c.l.b16 %v3778
    %v4028 = vunpack.c.h.b16 %v3778
    %v4029 = vunpack.c.l.b16 %v3779
    %v4030 = vunpack.c.h.b16 %v3779
    %v4031 = vunpack.c.l.b16 %v3780
    %v4032 = vunpack.c.h.b16 %v3780
    %v4033 = vunpack.c.l.b16 %v3781
    %v4034 = vunpack.c.h.b16 %v3781
    %v4035 = vunpack.c.l.b16 %v3782
    %v4036 = vunpack.c.h.b16 %v3782
    %v4037 = vunpack.c.l.b16 %v3783
    %v4038 = vunpack.c.h.b16 %v3783
    %v4039 = vunpack.c.l.b16 %v3784
    %v4040 = vunpack.c.h.b16 %v3784
    %v4041 = vunpack.c.l.b16 %v3785
    %v4042 = vunpack.c.h.b16 %v3785
    %v4043 = vunpack.c.l.b16 %v3786
    %v4044 = vunpack.c.h.b16 %v3786
    %v4045 = vunpack.c.l.b16 %v3787
    %v4046 = vunpack.c.h.b16 %v3787
    %v4047 = vunpack.c.l.b16 %v3788
    %v4048 = vunpack.c.h.b16 %v3788
    %v4049 = vunpack.c.l.b16 %v3789
    %v4050 = vunpack.c.h.b16 %v3789
    %v4051 = vunpack.c.l.b16 %v3790
    %v4052 = vunpack.c.h.b16 %v3790
    %v4053 = vunpack.c.l.b16 %v3791
    %v4054 = vunpack.c.h.b16 %v3791
    %v4055 = vunpack.c.l.b16 %v3792
    %v4056 = vunpack.c.h.b16 %v3792
    %v4057 = vunpack.c.l.b16 %v3793
    %v4058 = vunpack.c.h.b16 %v3793
    %v4059 = vunpack.c.l.b16 %v3794
    %v4060 = vunpack.c.h.b16 %v3794
    %v4061 = vunpack.c.l.b16 %v3795
    %v4062 = vunpack.c.h.b16 %v3795
    %v4063 = vunpack.c.l.b16 %v3796
    %v4064 = vunpack.c.h.b16 %v3796
    %v4065 = vunpack.c.l.b16 %v3797
    %v4066 = vunpack.c.h.b16 %v3797
    %v4067 = vunpack.c.l.b16 %v3798
    %v4068 = vunpack.c.h.b16 %v3798
    %v4069 = vunpack.c.l.b16 %v3799
    %v4070 = vunpack.c.h.b16 %v3799
    %v4071 = vunpack.c.l.b16 %v3800
    %v4072 = vunpack.c.h.b16 %v3800
    %v4073 = vunpack.c.l.b16 %v3801
    %v4074 = vunpack.c.h.b16 %v3801
    %v4075 = vunpack.c.l.b16 %v3802
    %v4076 = vunpack.c.h.b16 %v3802
    %v4077 = vunpack.c.l.b16 %v3803
    %v4078 = vunpack.c.h.b16 %v3803
    %v4079 = vunpack.c.l.b16 %v3804
    %v4080 = vunpack.c.h.b16 %v3804
    %v4081 = vunpack.c.l.b16 %v3805
    %v4082 = vunpack.c.h.b16 %v3805
    %v4083 = vunpack.c.l.b16 %v3806
    %v4084 = vunpack.c.h.b16 %v3806
    %v4085 = vunpack.c.l.b16 %v3807
    %v4086 = vunpack.c.h.b16 %v3807
    %v4087 = vunpack.c.l.b16 %v3808
    %v4088 = vunpack.c.h.b16 %v3808
    %v4089 = vunpack.c.l.b16 %v3809
    %v4090 = vunpack.c.h.b16 %v3809
    %v4091 = vunpack.c.l.b16 %v3810
    %v4092 = vunpack.c.h.b16 %v3810
    %v4093 = vpack.c.b16 %v3941, %v3933
    %v4094 = vpack.c.b16 %v3942, %v3934
    %v4095 = vpack.c.b16 %v3943, %v3935
    %v4096 = vpack.c.b16 %v3944, %v3936
    %v4097 = vpack.c.b16 %v3945, %v3937
    %v4098 = vpack.c.b16 %v3946, %v3938
    %v4099 = vpack.c.b16 %v3947, %v3939
    %v4100 = vpack.c.b16 %v3948, %v3940
    %v4101 = vpack.c.b16 %v3957, %v3949
    %v4102 = vpack.c.b16 %v3958, %v3950
    %v4103 = vpack.c.b16 %v3959, %v3951
    %v4104 = vpack.c.b16 %v3960, %v3952
    %v4105 = vpack.c.b16 %v3961, %v3953
    %v4106 = vpack.c.b16 %v3962, %v3954
    %v4107 = vpack.c.b16 %v3963, %v3955
    %v4108 = vpack.c.b16 %v3964, %v3956
    %v4109 = vpack.c.b16 %v3973, %v3965
    %v4110 = vpack.c.b16 %v3974, %v3966
    %v4111 = vpack.c.b16 %v3975, %v3967
    %v4112 = vpack.c.b16 %v3976, %v3968
    %v4113 = vpack.c.b16 %v3977, %v3969
    %v4114 = vpack.c.b16 %v3978, %v3970
    %v4115 = vpack.c.b16 %v3979, %v3971
    %v4116 = vpack.c.b16 %v3980, %v3972
    %v4117 = vpack.c.b16 %v3989, %v3981
    %v4118 = vpack.c.b16 %v3990, %v3982
    %v4119 = vpack.c.b16 %v3991, %v3983
    %v4120 = vpack.c.b16 %v3992, %v3984
    %v4121 = vpack.c.b16 %v3993, %v3985
    %v4122 = vpack.c.b16 %v3994, %v3986
    %v4123 = vpack.c.b16 %v3995, %v3987
    %v4124 = vpack.c.b16 %v3996, %v3988
    %v4125 = vpack.c.b16 %v4005, %v3997
    %v4126 = vpack.c.b16 %v4006, %v3998
    %v4127 = vpack.c.b16 %v4007, %v3999
    %v4128 = vpack.c.b16 %v4008, %v4000
    %v4129 = vpack.c.b16 %v4009, %v4001
    %v4130 = vpack.c.b16 %v4010, %v4002
    %v4131 = vpack.c.b16 %v4011, %v4003
    %v4132 = vpack.c.b16 %v4012, %v4004
    %v4133 = vpack.c.b16 %v4021, %v4013
    %v4134 = vpack.c.b16 %v4022, %v4014
    %v4135 = vpack.c.b16 %v4023, %v4015
    %v4136 = vpack.c.b16 %v4024, %v4016
    %v4137 = vpack.c.b16 %v4025, %v4017
    %v4138 = vpack.c.b16 %v4026, %v4018
    %v4139 = vpack.c.b16 %v4027, %v4019
    %v4140 = vpack.c.b16 %v4028, %v4020
    %v4141 = vpack.c.b16 %v4037, %v4029
    %v4142 = vpack.c.b16 %v4038, %v4030
    %v4143 = vpack.c.b16 %v4039, %v4031
    %v4144 = vpack.c.b16 %v4040, %v4032
    %v4145 = vpack.c.b16 %v4041, %v4033
    %v4146 = vpack.c.b16 %v4042, %v4034
    %v4147 = vpack.c.b16 %v4043, %v4035
    %v4148 = vpack.c.b16 %v4044, %v4036
    %v4149 = vpack.c.b16 %v4053, %v4045
    %v4150 = vpack.c.b16 %v4054, %v4046
    %v4151 = vpack.c.b16 %v4055, %v4047
    %v4152 = vpack.c.b16 %v4056, %v4048
    %v4153 = vpack.c.b16 %v4057, %v4049
    %v4154 = vpack.c.b16 %v4058, %v4050
    %v4155 = vpack.c.b16 %v4059, %v4051
    %v4156 = vpack.c.b16 %v4060, %v4052
    %v4157 = vpack.c.b16 %v4069, %v4061
    %v4158 = vpack.c.b16 %v4070, %v4062
    %v4159 = vpack.c.b16 %v4071, %v4063
    %v4160 = vpack.c.b16 %v4072, %v4064
    %v4161 = vpack.c.b16 %v4073, %v4065
    %v4162 = vpack.c.b16 %v4074, %v4066
    %v4163 = vpack.c.b16 %v4075, %v4067
    %v4164 = vpack.c.b16 %v4076, %v4068
    %v4165 = vpack.c.b16 %v4085, %v4077
    %v4166 = vpack.c.b16 %v4086, %v4078
    %v4167 = vpack.c.b16 %v4087, %v4079
    %v4168 = vpack.c.b16 %v4088, %v4080
    %v4169 = vpack.c.b16 %v4089, %v4081
    %v4170 = vpack.c.b16 %v4090, %v4082
    %v4171 = vpack.c.b16 %v4091, %v4083
    %v4172 = vpack.c.b16 %v4092, %v4084
    %vm4253 = vcmask 261120
    %v4255 = vsel %vm4253, %v3727, 0
    %v4258 = vsel %vm4253, %v3728, 0
    %v4261 = vsel %vm4253, %v3729, 0
    %v4264 = vsel %vm4253, %v3730, 0
    %4266 = vmatprep.subr.bf16.mxu0 %v4094
    %4267 = vmatpush1.bf16.msra.mxu0 %v4093
    %4268 = vmatprep.subr.bf16.mxu0 %v4102
    %4269 = vmatpush1.bf16.msra.mxu0 %v4101
    %4270 = vmatprep.subr.bf16.mxu0 %v4110
    %4271 = vmatpush1.bf16.msra.mxu0 %v4109
    %4272 = vmatprep.subr.bf16.mxu0 %v4118
    %4273 = vmatpush1.bf16.msra.mxu0 %v4117
    %4274 = vmatprep.subr.bf16.mxu0 %v4126
    %4275 = vmatpush1.bf16.msra.mxu0 %v4125
    %4276 = vmatprep.subr.bf16.mxu0 %v4134
    %4277 = vmatpush1.bf16.msra.mxu0 %v4133
    %4278 = vmatprep.subr.bf16.mxu0 %v4142
    %4279 = vmatpush1.bf16.msra.mxu0 %v4141
    %4280 = vmatprep.subr.bf16.mxu0 %v4150
    %4281 = vmatpush1.bf16.msra.mxu0 %v4149
    %4282 = vmatprep.subr.bf16.mxu0 %v4158
    %4283 = vmatpush1.bf16.msra.mxu0 %v4157
    %4284 = vmatprep.subr.bf16.mxu0 %v4166
    %4285 = vmatpush1.bf16.msra.mxu0 %v4165
    %4286 = vmatprep.subr.bf16.mxu0 0
    %4287 = vmatpush1.bf16.msra.mxu0 0
    %4288 = vmatprep.subr.bf16.mxu0 0
    %4289 = vmatpush1.bf16.msra.mxu0 0
    %4290 = vmatprep.subr.bf16.mxu0 0
    %4291 = vmatpush1.bf16.msra.mxu0 0
    %4292 = vmatprep.subr.bf16.mxu0 0
    %4293 = vmatpush1.bf16.msra.mxu0 0
    %4294 = vmatprep.subr.bf16.mxu0 0
    %4295 = vmatpush1.bf16.msra.mxu0 0
    %4296 = vmatprep.subr.bf16.mxu0 0
    %4297 = vmatpush1.bf16.msra.mxu0 0
    %4298 = vmatprep.mubr.bf16.mxu0 %v4255
    %4299 = vmatmul.mubr.bf16.gmra.mrb[0].mxu0 %v3703
    %v4300 = vpop.f32.mrb[0].mxu0
    %v4301 = vadd.f32 %v3816, %v4300
    %v4302 = vpop.f32.mrb[0].mxu0
    %v4303 = vadd.f32 %v3820, %v4302
    %v4304 = vpop.f32.mrb[0].mxu0
    %v4305 = vadd.f32 %v3816, %v4304
    %v4306 = vpop.f32.mrb[0].mxu0
    %v4307 = vadd.f32 %v3820, %v4306
    %4308 = vmatprep.mubr.bf16.mxu0 %v4258
    %4309 = vmatmul.mubr.bf16.gmra.mrb[0].mxu0 %v3704
    %v4310 = vpop.f32.mrb[0].mxu0
    %v4311 = vadd.f32 %v3816, %v4310
    %v4312 = vpop.f32.mrb[0].mxu0
    %v4313 = vadd.f32 %v3820, %v4312
    %v4314 = vpop.f32.mrb[0].mxu0
    %v4315 = vadd.f32 %v3816, %v4314
    %v4316 = vpop.f32.mrb[0].mxu0
    %v4317 = vadd.f32 %v3820, %v4316
    %4318 = vmatprep.mubr.bf16.mxu0 %v4261
    %4319 = vmatmul.mubr.bf16.gmra.mrb[0].mxu0 %v3705
    %v4320 = vpop.f32.mrb[0].mxu0
    %v4321 = vadd.f32 %v3816, %v4320
    %v4322 = vpop.f32.mrb[0].mxu0
    %v4323 = vadd.f32 %v3820, %v4322
    %v4324 = vpop.f32.mrb[0].mxu0
    %v4325 = vadd.f32 %v3816, %v4324
    %v4326 = vpop.f32.mrb[0].mxu0
    %v4327 = vadd.f32 %v3820, %v4326
    %4328 = vmatprep.mubr.bf16.mxu0 %v4264
    %4329 = vmatmul.mubr.bf16.gmra.mrb[0].mxu0 %v3706
    %v4330 = vpop.f32.mrb[0].mxu0
    %v4331 = vadd.f32 %v3816, %v4330
    %v4332 = vpop.f32.mrb[0].mxu0
    %v4333 = vadd.f32 %v3820, %v4332
    %v4334 = vpop.f32.mrb[0].mxu0
    %v4335 = vadd.f32 %v3816, %v4334
    %v4336 = vpop.f32.mrb[0].mxu0
    %v4337 = vadd.f32 %v3820, %v4336
    %4338 = vdwg.mxu0
    %4339 = vmatprep.subr.bf16.mxu0 %v4096
    %4340 = vmatpush1.bf16.msra.mxu0 %v4095
    %4341 = vmatprep.subr.bf16.mxu0 %v4104
    %4342 = vmatpush1.bf16.msra.mxu0 %v4103
    %4343 = vmatprep.subr.bf16.mxu0 %v4112
    %4344 = vmatpush1.bf16.msra.mxu0 %v4111
    %4345 = vmatprep.subr.bf16.mxu0 %v4120
    %4346 = vmatpush1.bf16.msra.mxu0 %v4119
    %4347 = vmatprep.subr.bf16.mxu0 %v4128
    %4348 = vmatpush1.bf16.msra.mxu0 %v4127
    %4349 = vmatprep.subr.bf16.mxu0 %v4136
    %4350 = vmatpush1.bf16.msra.mxu0 %v4135
    %4351 = vmatprep.subr.bf16.mxu0 %v4144
    %4352 = vmatpush1.bf16.msra.mxu0 %v4143
    %4353 = vmatprep.subr.bf16.mxu0 %v4152
    %4354 = vmatpush1.bf16.msra.mxu0 %v4151
    %4355 = vmatprep.subr.bf16.mxu0 %v4160
    %4356 = vmatpush1.bf16.msra.mxu0 %v4159
    %4357 = vmatprep.subr.bf16.mxu0 %v4168
    %4358 = vmatpush1.bf16.msra.mxu0 %v4167
    %4359 = vmatprep.subr.bf16.mxu0 0
    %4360 = vmatpush1.bf16.msra.mxu0 0
    %4361 = vmatprep.subr.bf16.mxu0 0
    %4362 = vmatpush1.bf16.msra.mxu0 0
    %4363 = vmatprep.subr.bf16.mxu0 0
    %4364 = vmatpush1.bf16.msra.mxu0 0
    %4365 = vmatprep.subr.bf16.mxu0 0
    %4366 = vmatpush1.bf16.msra.mxu0 0
    %4367 = vmatprep.subr.bf16.mxu0 0
    %4368 = vmatpush1.bf16.msra.mxu0 0
    %4369 = vmatprep.subr.bf16.mxu0 0
    %4370 = vmatpush1.bf16.msra.mxu0 0
    %4371 = vmatprep.mubr.bf16.mxu0 %v4255
    %4372 = vmatmul.mubr.bf16.gmra.mrb[0].mxu0 %v3703
    %v4373 = vpop.f32.mrb[0].mxu0
    %v4374 = vadd.f32 %v3824, %v4373
    %v4375 = vpop.f32.mrb[0].mxu0
    %v4376 = vadd.f32 %v3828, %v4375
    %v4377 = vpop.f32.mrb[0].mxu0
    %v4378 = vadd.f32 %v3824, %v4377
    %v4379 = vpop.f32.mrb[0].mxu0
    %v4380 = vadd.f32 %v3828, %v4379
    %4381 = vmatprep.mubr.bf16.mxu0 %v4258
    %4382 = vmatmul.mubr.bf16.gmra.mrb[0].mxu0 %v3704
    %v4383 = vpop.f32.mrb[0].mxu0
    %v4384 = vadd.f32 %v3824, %v4383
    %v4385 = vpop.f32.mrb[0].mxu0
    %v4386 = vadd.f32 %v3828, %v4385
    %v4387 = vpop.f32.mrb[0].mxu0
    %v4388 = vadd.f32 %v3824, %v4387
    %v4389 = vpop.f32.mrb[0].mxu0
    %v4390 = vadd.f32 %v3828, %v4389
    %4391 = vmatprep.mubr.bf16.mxu0 %v4261
    %4392 = vmatmul.mubr.bf16.gmra.mrb[0].mxu0 %v3705
    %v4393 = vpop.f32.mrb[0].mxu0
    %v4394 = vadd.f32 %v3824, %v4393
    %v4395 = vpop.f32.mrb[0].mxu0
    %v4396 = vadd.f32 %v3828, %v4395
    %v4397 = vpop.f32.mrb[0].mxu0
    %v4398 = vadd.f32 %v3824, %v4397
    %v4399 = vpop.f32.mrb[0].mxu0
    %v4400 = vadd.f32 %v3828, %v4399
    %4401 = vmatprep.mubr.bf16.mxu0 %v4264
    %4402 = vmatmul.mubr.bf16.gmra.mrb[0].mxu0 %v3706
    %v4403 = vpop.f32.mrb[0].mxu0
    %v4404 = vadd.f32 %v3824, %v4403
    %v4405 = vpop.f32.mrb[0].mxu0
    %v4406 = vadd.f32 %v3828, %v4405
    %v4407 = vpop.f32.mrb[0].mxu0
    %v4408 = vadd.f32 %v3824, %v4407
    %v4409 = vpop.f32.mrb[0].mxu0
    %v4410 = vadd.f32 %v3828, %v4409
    %4411 = vdwg.mxu0
    %4412 = vmatprep.subr.bf16.mxu0 %v4098
    %4413 = vmatpush1.bf16.msra.mxu0 %v4097
    %4414 = vmatprep.subr.bf16.mxu0 %v4106
    %4415 = vmatpush1.bf16.msra.mxu0 %v4105
    %4416 = vmatprep.subr.bf16.mxu0 %v4114
    %4417 = vmatpush1.bf16.msra.mxu0 %v4113
    %4418 = vmatprep.subr.bf16.mxu0 %v4122
    %4419 = vmatpush1.bf16.msra.mxu0 %v4121
    %4420 = vmatprep.subr.bf16.mxu0 %v4130
    %4421 = vmatpush1.bf16.msra.mxu0 %v4129
    %4422 = vmatprep.subr.bf16.mxu0 %v4138
    %4423 = vmatpush1.bf16.msra.mxu0 %v4137
    %4424 = vmatprep.subr.bf16.mxu0 %v4146
    %4425 = vmatpush1.bf16.msra.mxu0 %v4145
    %4426 = vmatprep.subr.bf16.mxu0 %v4154
    %4427 = vmatpush1.bf16.msra.mxu0 %v4153
    %4428 = vmatprep.subr.bf16.mxu0 %v4162
    %4429 = vmatpush1.bf16.msra.mxu0 %v4161
    %4430 = vmatprep.subr.bf16.mxu0 %v4170
    %4431 = vmatpush1.bf16.msra.mxu0 %v4169
    %4432 = vmatprep.subr.bf16.mxu0 0
    %4433 = vmatpush1.bf16.msra.mxu0 0
    %4434 = vmatprep.subr.bf16.mxu0 0
    %4435 = vmatpush1.bf16.msra.mxu0 0
    %4436 = vmatprep.subr.bf16.mxu0 0
    %4437 = vmatpush1.bf16.msra.mxu0 0
    %4438 = vmatprep.subr.bf16.mxu0 0
    %4439 = vmatpush1.bf16.msra.mxu0 0
    %4440 = vmatprep.subr.bf16.mxu0 0
    %4441 = vmatpush1.bf16.msra.mxu0 0
    %4442 = vmatprep.subr.bf16.mxu0 0
    %4443 = vmatpush1.bf16.msra.mxu0 0
    %4444 = vmatprep.mubr.bf16.mxu0 %v4255
    %4445 = vmatmul.mubr.bf16.gmra.mrb[0].mxu0 %v3703
    %v4446 = vpop.f32.mrb[0].mxu0
    %v4447 = vadd.f32 %v3832, %v4446
    %v4448 = vpop.f32.mrb[0].mxu0
    %v4449 = vadd.f32 %v3836, %v4448
    %v4450 = vpop.f32.mrb[0].mxu0
    %v4451 = vadd.f32 %v3832, %v4450
    %v4452 = vpop.f32.mrb[0].mxu0
    %v4453 = vadd.f32 %v3836, %v4452
    %4454 = vmatprep.mubr.bf16.mxu0 %v4258
    %4455 = vmatmul.mubr.bf16.gmra.mrb[0].mxu0 %v3704
    %v4456 = vpop.f32.mrb[0].mxu0
    %v4457 = vadd.f32 %v3832, %v4456
    %v4458 = vpop.f32.mrb[0].mxu0
    %v4459 = vadd.f32 %v3836, %v4458
    %v4460 = vpop.f32.mrb[0].mxu0
    %v4461 = vadd.f32 %v3832, %v4460
    %v4462 = vpop.f32.mrb[0].mxu0
    %v4463 = vadd.f32 %v3836, %v4462
    %4464 = vmatprep.mubr.bf16.mxu0 %v4261
    %4465 = vmatmul.mubr.bf16.gmra.mrb[0].mxu0 %v3705
    %v4466 = vpop.f32.mrb[0].mxu0
    %v4467 = vadd.f32 %v3832, %v4466
    %v4468 = vpop.f32.mrb[0].mxu0
    %v4469 = vadd.f32 %v3836, %v4468
    %v4470 = vpop.f32.mrb[0].mxu0
    %v4471 = vadd.f32 %v3832, %v4470
    %v4472 = vpop.f32.mrb[0].mxu0
    %v4473 = vadd.f32 %v3836, %v4472
    %4474 = vmatprep.mubr.bf16.mxu0 %v4264
    %4475 = vmatmul.mubr.bf16.gmra.mrb[0].mxu0 %v3706
    %v4476 = vpop.f32.mrb[0].mxu0
    %v4477 = vadd.f32 %v3832, %v4476
    %v4478 = vpop.f32.mrb[0].mxu0
    %v4479 = vadd.f32 %v3836, %v4478
    %v4480 = vpop.f32.mrb[0].mxu0
    %v4481 = vadd.f32 %v3832, %v4480
    %v4482 = vpop.f32.mrb[0].mxu0
    %v4483 = vadd.f32 %v3836, %v4482
    %4484 = vdwg.mxu0
    %4485 = vmatprep.subr.bf16.mxu0 %v4100
    %4486 = vmatpush1.bf16.msra.mxu0 %v4099
    %4487 = vmatprep.subr.bf16.mxu0 %v4108
    %4488 = vmatpush1.bf16.msra.mxu0 %v4107
    %4489 = vmatprep.subr.bf16.mxu0 %v4116
    %4490 = vmatpush1.bf16.msra.mxu0 %v4115
    %4491 = vmatprep.subr.bf16.mxu0 %v4124
    %4492 = vmatpush1.bf16.msra.mxu0 %v4123
    %4493 = vmatprep.subr.bf16.mxu0 %v4132
    %4494 = vmatpush1.bf16.msra.mxu0 %v4131
    %4495 = vmatprep.subr.bf16.mxu0 %v4140
    %4496 = vmatpush1.bf16.msra.mxu0 %v4139
    %4497 = vmatprep.subr.bf16.mxu0 %v4148
    %4498 = vmatpush1.bf16.msra.mxu0 %v4147
    %4499 = vmatprep.subr.bf16.mxu0 %v4156
    %4500 = vmatpush1.bf16.msra.mxu0 %v4155
    %4501 = vmatprep.subr.bf16.mxu0 %v4164
    %4502 = vmatpush1.bf16.msra.mxu0 %v4163
    %4503 = vmatprep.subr.bf16.mxu0 %v4172
    %4504 = vmatpush1.bf16.msra.mxu0 %v4171
    %4505 = vmatprep.subr.bf16.mxu0 0
    %4506 = vmatpush1.bf16.msra.mxu0 0
    %4507 = vmatprep.subr.bf16.mxu0 0
    %4508 = vmatpush1.bf16.msra.mxu0 0
    %4509 = vmatprep.subr.bf16.mxu0 0
    %4510 = vmatpush1.bf16.msra.mxu0 0
    %4511 = vmatprep.subr.bf16.mxu0 0
    %4512 = vmatpush1.bf16.msra.mxu0 0
    %4513 = vmatprep.subr.bf16.mxu0 0
    %4514 = vmatpush1.bf16.msra.mxu0 0
    %4515 = vmatprep.subr.bf16.mxu0 0
    %4516 = vmatpush1.bf16.msra.mxu0 0
    %4517 = vmatprep.mubr.bf16.mxu0 %v4255
    %4518 = vmatmul.mubr.bf16.gmra.mrb[0].mxu0 %v3703
    %v4519 = vpop.f32.mrb[0].mxu0
    %v4520 = vadd.f32 %v3840, %v4519
    %v4521 = vpop.f32.mrb[0].mxu0
    %v4522 = vadd.f32 %v3844, %v4521
    %v4523 = vpop.f32.mrb[0].mxu0
    %v4524 = vadd.f32 %v3840, %v4523
    %v4525 = vpop.f32.mrb[0].mxu0
    %v4526 = vadd.f32 %v3844, %v4525
    %4527 = vmatprep.mubr.bf16.mxu0 %v4258
    %4528 = vmatmul.mubr.bf16.gmra.mrb[0].mxu0 %v3704
    %v4529 = vpop.f32.mrb[0].mxu0
    %v4530 = vadd.f32 %v3840, %v4529
    %v4531 = vpop.f32.mrb[0].mxu0
    %v4532 = vadd.f32 %v3844, %v4531
    %v4533 = vpop.f32.mrb[0].mxu0
    %v4534 = vadd.f32 %v3840, %v4533
    %v4535 = vpop.f32.mrb[0].mxu0
    %v4536 = vadd.f32 %v3844, %v4535
    %4537 = vmatprep.mubr.bf16.mxu0 %v4261
    %4538 = vmatmul.mubr.bf16.gmra.mrb[0].mxu0 %v3705
    %v4539 = vpop.f32.mrb[0].mxu0
    %v4540 = vadd.f32 %v3840, %v4539
    %v4541 = vpop.f32.mrb[0].mxu0
    %v4542 = vadd.f32 %v3844, %v4541
    %v4543 = vpop.f32.mrb[0].mxu0
    %v4544 = vadd.f32 %v3840, %v4543
    %v4545 = vpop.f32.mrb[0].mxu0
    %v4546 = vadd.f32 %v3844, %v4545
    %4547 = vmatprep.mubr.bf16.mxu0 %v4264
    %4548 = vmatmul.mubr.bf16.gmra.mrb[0].mxu0 %v3706
    %v4549 = vpop.f32.mrb[0].mxu0
    %v4550 = vadd.f32 %v3840, %v4549
    %v4551 = vpop.f32.mrb[0].mxu0
    %v4552 = vadd.f32 %v3844, %v4551
    %v4553 = vpop.f32.mrb[0].mxu0
    %v4554 = vadd.f32 %v3840, %v4553
    %v4555 = vpop.f32.mrb[0].mxu0
    %v4556 = vadd.f32 %v3844, %v4555
    %4557 = vdwg.mxu0
    %v4558 = vpack.c.bf16 %v4305, %v4301
    %v4559 = vpack.c.bf16 %v4307, %v4303
    %v4560 = vpack.c.bf16 %v4378, %v4374
    %v4561 = vpack.c.bf16 %v4380, %v4376
    %v4562 = vpack.c.bf16 %v4451, %v4447
    %v4563 = vpack.c.bf16 %v4453, %v4449
    %v4564 = vpack.c.bf16 %v4524, %v4520
    %v4565 = vpack.c.bf16 %v4526, %v4522
    %v4566 = vpack.c.bf16 %v4315, %v4311
    %v4567 = vpack.c.bf16 %v4317, %v4313
    %v4568 = vpack.c.bf16 %v4388, %v4384
    %v4569 = vpack.c.bf16 %v4390, %v4386
    %v4570 = vpack.c.bf16 %v4461, %v4457
    %v4571 = vpack.c.bf16 %v4463, %v4459
    %v4572 = vpack.c.bf16 %v4534, %v4530
    %v4573 = vpack.c.bf16 %v4536, %v4532
    %v4574 = vpack.c.bf16 %v4325, %v4321
    %v4575 = vpack.c.bf16 %v4327, %v4323
    %v4576 = vpack.c.bf16 %v4398, %v4394
    %v4577 = vpack.c.bf16 %v4400, %v4396
    %v4578 = vpack.c.bf16 %v4471, %v4467
    %v4579 = vpack.c.bf16 %v4473, %v4469
    %v4580 = vpack.c.bf16 %v4544, %v4540
    %v4581 = vpack.c.bf16 %v4546, %v4542
    %v4582 = vpack.c.bf16 %v4335, %v4331
    %v4583 = vpack.c.bf16 %v4337, %v4333
    %v4584 = vpack.c.bf16 %v4408, %v4404
    %v4585 = vpack.c.bf16 %v4410, %v4406
    %v4586 = vpack.c.bf16 %v4481, %v4477
    %v4587 = vpack.c.bf16 %v4483, %v4479
    %v4588 = vpack.c.bf16 %v4554, %v4550
    %v4589 = vpack.c.bf16 %v4556, %v4552
    %v4622 = vunpack.c.l.b16 %v4558
    %v4623 = vunpack.c.l.b16 %v4559
    %v4624 = vunpack.c.l.b16 %v4560
    %v4625 = vunpack.c.l.b16 %v4561
    %v4626 = vunpack.c.l.b16 %v4562
    %v4627 = vunpack.c.l.b16 %v4563
    %v4628 = vunpack.c.l.b16 %v4564
    %v4629 = vunpack.c.l.b16 %v4565
    %v4630 = vunpack.c.h.b16 %v4558
    %v4631 = vunpack.c.h.b16 %v4559
    %v4632 = vunpack.c.h.b16 %v4560
    %v4633 = vunpack.c.h.b16 %v4561
    %v4634 = vunpack.c.h.b16 %v4562
    %v4635 = vunpack.c.h.b16 %v4563
    %v4636 = vunpack.c.h.b16 %v4564
    %v4637 = vunpack.c.h.b16 %v4565
    %v4638 = vunpack.c.l.b16 %v4566
    %v4639 = vunpack.c.l.b16 %v4567
    %v4640 = vunpack.c.l.b16 %v4568
    %v4641 = vunpack.c.l.b16 %v4569
    %v4642 = vunpack.c.l.b16 %v4570
    %v4643 = vunpack.c.l.b16 %v4571
    %v4644 = vunpack.c.l.b16 %v4572
    %v4645 = vunpack.c.l.b16 %v4573
    %v4646 = vunpack.c.h.b16 %v4566
    %v4647 = vunpack.c.h.b16 %v4567
    %v4648 = vunpack.c.h.b16 %v4568
    %v4649 = vunpack.c.h.b16 %v4569
    %v4650 = vunpack.c.h.b16 %v4570
    %v4651 = vunpack.c.h.b16 %v4571
    %v4652 = vunpack.c.h.b16 %v4572
    %v4653 = vunpack.c.h.b16 %v4573
    %v4654 = vunpack.c.l.b16 %v4574
    %v4655 = vunpack.c.l.b16 %v4575
    %v4656 = vunpack.c.l.b16 %v4576
    %v4657 = vunpack.c.l.b16 %v4577
    %v4658 = vunpack.c.l.b16 %v4578
    %v4659 = vunpack.c.l.b16 %v4579
    %v4660 = vunpack.c.l.b16 %v4580
    %v4661 = vunpack.c.l.b16 %v4581
    %v4662 = vunpack.c.h.b16 %v4574
    %v4663 = vunpack.c.h.b16 %v4575
    %v4664 = vunpack.c.h.b16 %v4576
    %v4665 = vunpack.c.h.b16 %v4577
    %v4666 = vunpack.c.h.b16 %v4578
    %v4667 = vunpack.c.h.b16 %v4579
    %v4668 = vunpack.c.h.b16 %v4580
    %v4669 = vunpack.c.h.b16 %v4581
    %v4670 = vunpack.c.l.b16 %v4582
    %v4671 = vunpack.c.l.b16 %v4583
    %v4672 = vunpack.c.l.b16 %v4584
    %v4673 = vunpack.c.l.b16 %v4585
    %v4674 = vunpack.c.l.b16 %v4586
    %v4675 = vunpack.c.l.b16 %v4587
    %v4676 = vunpack.c.l.b16 %v4588
    %v4677 = vunpack.c.l.b16 %v4589
    %v4678 = vunpack.c.h.b16 %v4582
    %v4679 = vunpack.c.h.b16 %v4583
    %v4680 = vunpack.c.h.b16 %v4584
    %v4681 = vunpack.c.h.b16 %v4585
    %v4682 = vunpack.c.h.b16 %v4586
    %v4683 = vunpack.c.h.b16 %v4587
    %v4684 = vunpack.c.h.b16 %v4588
    %v4685 = vunpack.c.h.b16 %v4589
    %v4686 = vpack.c.b16 %v4623, %v4622
    %v4687 = vpack.c.b16 %v4625, %v4624
    %v4688 = vpack.c.b16 %v4627, %v4626
    %v4689 = vpack.c.b16 %v4629, %v4628
    %v4690 = vpack.c.b16 %v4631, %v4630
    %v4691 = vpack.c.b16 %v4633, %v4632
    %v4692 = vpack.c.b16 %v4635, %v4634
    %v4693 = vpack.c.b16 %v4637, %v4636
    %v4694 = vpack.c.b16 %v4639, %v4638
    %v4695 = vpack.c.b16 %v4641, %v4640
    %v4696 = vpack.c.b16 %v4643, %v4642
    %v4697 = vpack.c.b16 %v4645, %v4644
    %v4698 = vpack.c.b16 %v4647, %v4646
    %v4699 = vpack.c.b16 %v4649, %v4648
    %v4700 = vpack.c.b16 %v4651, %v4650
    %v4701 = vpack.c.b16 %v4653, %v4652
    %v4702 = vpack.c.b16 %v4655, %v4654
    %v4703 = vpack.c.b16 %v4657, %v4656
    %v4704 = vpack.c.b16 %v4659, %v4658
    %v4705 = vpack.c.b16 %v4661, %v4660
    %v4706 = vpack.c.b16 %v4663, %v4662
    %v4707 = vpack.c.b16 %v4665, %v4664
    %v4708 = vpack.c.b16 %v4667, %v4666
    %v4709 = vpack.c.b16 %v4669, %v4668
    %v4710 = vpack.c.b16 %v4671, %v4670
    %v4711 = vpack.c.b16 %v4673, %v4672
    %v4712 = vpack.c.b16 %v4675, %v4674
    %v4713 = vpack.c.b16 %v4677, %v4676
    %v4714 = vpack.c.b16 %v4679, %v4678
    %v4715 = vpack.c.b16 %v4681, %v4680
    %v4716 = vpack.c.b16 %v4683, %v4682
    %v4717 = vpack.c.b16 %v4685, %v4684
    %4750 = vst [vmem:[#allocation5] sm:$0xff] %v4686
    %4751 = vst [vmem:[#allocation5 + $0x8] sm:$0xff] %v4687
    %4752 = vst [vmem:[#allocation5 + $0x10] sm:$0xff] %v4688
    %4753 = vst [vmem:[#allocation5 + $0x18] sm:$0xff] %v4689
    %4754 = vst [vmem:[#allocation5 + $0x20] sm:$0xff] %v4690
    %4755 = vst [vmem:[#allocation5 + $0x28] sm:$0xff] %v4691
    %4756 = vst [vmem:[#allocation5 + $0x30] sm:$0xff] %v4692
    %4757 = vst [vmem:[#allocation5 + $0x38] sm:$0xff] %v4693
    %4758 = vst [vmem:[#allocation5 + $0x40] sm:$0xff] %v4694
    %4759 = vst [vmem:[#allocation5 + $0x48] sm:$0xff] %v4695
    %4760 = vst [vmem:[#allocation5 + $0x50] sm:$0xff] %v4696
    %4761 = vst [vmem:[#allocation5 + $0x58] sm:$0xff] %v4697
    %4762 = vst [vmem:[#allocation5 + $0x60] sm:$0xff] %v4698
    %4763 = vst [vmem:[#allocation5 + $0x68] sm:$0xff] %v4699
    %4764 = vst [vmem:[#allocation5 + $0x70] sm:$0xff] %v4700
    %4765 = vst [vmem:[#allocation5 + $0x78] sm:$0xff] %v4701
    %4766 = vst [vmem:[#allocation5 + $0x80] sm:$0xff] %v4702
    %4767 = vst [vmem:[#allocation5 + $0x88] sm:$0xff] %v4703
    %4768 = vst [vmem:[#allocation5 + $0x90] sm:$0xff] %v4704
    %4769 = vst [vmem:[#allocation5 + $0x98] sm:$0xff] %v4705
    %4770 = vst [vmem:[#allocation5 + $0xa0] sm:$0xff] %v4706
    %4771 = vst [vmem:[#allocation5 + $0xa8] sm:$0xff] %v4707
    %4772 = vst [vmem:[#allocation5 + $0xb0] sm:$0xff] %v4708
    %4773 = vst [vmem:[#allocation5 + $0xb8] sm:$0xff] %v4709
    %4774 = vst [vmem:[#allocation5 + $0xc0] sm:$0xff] %v4710
    %4775 = vst [vmem:[#allocation5 + $0xc8] sm:$0xff] %v4711
    %4776 = vst [vmem:[#allocation5 + $0xd0] sm:$0xff] %v4712
    %4777 = vst [vmem:[#allocation5 + $0xd8] sm:$0xff] %v4713
    %4778 = vst [vmem:[#allocation5 + $0xe0] sm:$0xff] %v4714
    %4779 = vst [vmem:[#allocation5 + $0xe8] sm:$0xff] %v4715
    %4780 = vst [vmem:[#allocation5 + $0xf0] sm:$0xff] %v4716
    %4781 = vst [vmem:[#allocation5 + $0xf8] sm:$0xff] %v4717
    // Predicated region
    $region30: #{tpu_custom_call.1} parent=1 // pred_check
      _
    $region31: #{tpu_custom_call.1} parent=1 // pred_check_branch
      %4783 = sbr.rel (0) target = $region33
    $region32: #{tpu_custom_call.1} parent=1 // pred_region
      %s4785 = ssub.s32 4096, 4096
      %4786 = vsyncadd [#allocation4], %s4785
      %s4787 = sshll.u32 [#allocation5], 4
      %s4788 = int_to_ptr.vmem [resolvable:$true] %s4787
      %4793 = dma.vmem_to_hbm [thread:$0]  %s4788, 4096, %s6, [#allocation4], 512, 512, 32
    $region33: #{tpu_custom_call.1} parent=1 // pred_fallthru
      _
    // Predicated region
    $region34: #{tpu_custom_call.1} parent=1 // pred_check
      _
    $region35: #{tpu_custom_call.1} parent=1 // pred_check_branch
      %4795 = sbr.rel (0) target = $region37
    $region36: #{tpu_custom_call.1} parent=1 // pred_region
      %4796 = dma.done [#allocation4], 4096
    $region37: #{tpu_custom_call.1} parent=1 // pred_fallthru
      _
    %4797 = vsyncpa [#allocation3], 1
    %4798 = vsyncpa [#allocation4], 1

</llo_original>
